<compile_context>
chip_gen: v7x
topology: tpu7x:2x2x1
jax: 0.10.0
libtpu: 0.0.40
codegen_flags: <defaults>
</compile_context>

<pallas_src>
import jax
import jax.numpy as jnp
from jax import lax
from jax.experimental import pallas as pl
from jax.experimental.pallas import tpu as pltpu


# ---------------------------------------------------------------------------
# In-kernel helpers
# ---------------------------------------------------------------------------
def _pad_and_im2col(pad_ref, x_bf16):
    """Zero-'same'-pad into a VMEM scratch and build 3x3 im2col patches.

    pad_ref : (B, H+2, W+2, C) bf16 VMEM scratch (persists across grid steps)
    x_bf16  : (B, H, W, C)     bf16 value (already cast -> concat moves bf16)
    returns : (B*H*W, 9*C)     bf16 patches, columns in (dy, dx, c) order
              (matches HWIO weights flattened to (9*C, Cout)).
    """
    B, H, W, C = x_bf16.shape

    # (Re)zero only the halo every step: a few KB of masked stores, and safe no
    # matter how grid steps are split across TensorCores (scratch is per-core).
    zrow = jnp.zeros((B, 1, W + 2, C), jnp.bfloat16)
    zcol = jnp.zeros((B, H, 1, C), jnp.bfloat16)
    pad_ref[:, 0:1, :, :] = zrow
    pad_ref[:, H + 1:H + 2, :, :] = zrow
    pad_ref[:, 1:H + 1, 0:1, :] = zcol
    pad_ref[:, 1:H + 1, W + 1:W + 2, :] = zcol

    # One interior write (vs. two full-activation concat copies before).
    pad_ref[:, 1:H + 1, 1:W + 1, :] = x_bf16

    # 9 shifted views stacked on the lane axis -> one fat-K MXU matmul.
    pieces = [pad_ref[:, dy:dy + H, dx:dx + W, :]
              for dy in range(3) for dx in range(3)]
    return jnp.concatenate(pieces, axis=-1).reshape(B * H * W, 9 * C)


def _encoder1_kernel(x_ref, w1_ref, b1_ref, w2_ref, b2_ref, o_ref, xpad, hpad):
    # x_ref : (B, H, W, 3)   f32   input block (B_TILE images)
    # w1_ref: (27, 32) bf16, b1_ref: (1, 32) f32
    # w2_ref: (288, 64) bf16, b2_ref: (1, 64) f32
    # o_ref : (B, 64, H*W)   f32   channels-first, lane-dense output block
    # xpad  : (B, H+2, W+2, 3)  bf16 VMEM scratch (padded input)
    # hpad  : (B, H+2, W+2, 32) bf16 VMEM scratch (padded conv1 activation)
    B, H, W, _ = x_ref.shape
    c_mid = w1_ref.shape[1]
    c_out = w2_ref.shape[1]

    # ---- conv1: (B*HW, 27) @ (27, 32), f32 accumulate, bias + ReLU ----------
    p1 = _pad_and_im2col(xpad, x_ref[...].astype(jnp.bfloat16))
    h1 = jnp.dot(p1, w1_ref[...], preferred_element_type=jnp.float32)
    h1 = jnp.maximum(h1 + b1_ref[...], 0.0)                       # (B*HW, 32)

    # ---- conv2: (B*HW, 288) @ (288, 64) — 32-ch intermediate never hits HBM -
    # (bf16 cast happens before the 9-way concat; reshape is free: lanes kept.)
    p2 = _pad_and_im2col(hpad, h1.astype(jnp.bfloat16).reshape(B, H, W, c_mid))
    h2 = jnp.dot(p2, w2_ref[...], preferred_element_type=jnp.float32)
    h2 = jnp.maximum(h2 + b2_ref[...], 0.0)                       # (B*HW, 64)

    # ---- channels-first lane-dense store --------------------------------
    # Per-image XLU transpose (HW,64)->(64,HW); store is unmasked when H*W is a
    # multiple of 128 (true here).  Static unroll: B_TILE is small.
    h2 = h2.reshape(B, H * W, c_out)
    for b in range(B):
        o_ref[b] = h2[b].T.astype(o_ref.dtype)


# ---------------------------------------------------------------------------
# Tile sizing (lane-padding aware VMEM budget) + wrapper
# ---------------------------------------------------------------------------
def _per_image_vmem_bytes(H, W, c_in, c_mid, c_out):
    """Rough per-image VMEM use including 128-lane padding of channel-last bufs."""
    lane = lambda c: -(-c // 128) * 128
    hw, pad_hw = H * W, (H + 2) * (W + 2)
    return (2 * hw * lane(c_in) * 4            # double-buffered f32 input block
            + pad_hw * lane(c_in) * 2          # padded bf16 input scratch
            + pad_hw * lane(c_mid) * 2         # padded bf16 h1 scratch
            + hw * lane(9 * c_in) * 2          # conv1 im2col (bf16)
            + hw * lane(c_mid) * 4             # h1 (f32)
            + hw * lane(9 * c_mid) * 2         # conv2 im2col (bf16)
            + hw * lane(c_out) * 4             # h2 (f32)
            + 2 * c_out * hw * 4)              # double-buffered f32 output block


def _pick_b_tile(N, H, W, c_in, c_mid, c_out, budget_bytes=20 << 20):
    """Largest divisor of N that keeps grid length >= 2 and fits the VMEM budget."""
    cap = max(1, budget_bytes // _per_image_vmem_bytes(H, W, c_in, c_mid, c_out))
    if N < 2:
        return 1
    best = 1
    for d in range(1, N // 2 + 1):             # N // d >= 2  (both v7x TCs busy)
        if N % d == 0 and d <= cap:
            best = d
    return best


def encoder1_forward_impl(x_nchw, params):
    N, c_in, H, W = x_nchw.shape
    w1, b1, w2, b2 = params["w1"], params["b1"], params["w2"], params["b2"]
    c_mid = w1.shape[-1]
    c_out = w2.shape[-1]

    # Tiny layout prep only (KBs); the big activations never leave the kernel.
    x_nhwc = jnp.transpose(x_nchw, (0, 2, 3, 1))                   # (N, H, W, 3)
    w1f = w1.reshape(9 * c_in, c_mid).astype(jnp.bfloat16)         # (27, 32)
    w2f = w2.reshape(9 * c_mid, c_out).astype(jnp.bfloat16)        # (288, 64)
    b1f = b1.reshape(1, c_mid).astype(jnp.float32)
    b2f = b2.reshape(1, c_out).astype(jnp.float32)

    b_tile = _pick_b_tile(N, H, W, c_in, c_mid, c_out)
    grid = (N // b_tile,)

    out_flat = pl.pallas_call(
        _encoder1_kernel,
        out_shape=jax.ShapeDtypeStruct((N, c_out, H * W), jnp.float32),
        grid_spec=pltpu.PrefetchScalarGridSpec(
            num_scalar_prefetch=0,
            grid=grid,
            in_specs=[
                pl.BlockSpec((b_tile, H, W, c_in), lambda n: (n, 0, 0, 0)),
                pl.BlockSpec((9 * c_in, c_mid), lambda n: (0, 0)),
                pl.BlockSpec((1, c_mid), lambda n: (0, 0)),
                pl.BlockSpec((9 * c_mid, c_out), lambda n: (0, 0)),
                pl.BlockSpec((1, c_out), lambda n: (0, 0)),
            ],
            out_specs=pl.BlockSpec((b_tile, c_out, H * W), lambda n: (n, 0, 0)),
            scratch_shapes=[
                pltpu.VMEM((b_tile, H + 2, W + 2, c_in), jnp.bfloat16),
                pltpu.VMEM((b_tile, H + 2, W + 2, c_mid), jnp.bfloat16),
            ],
        ),
        compiler_params=pltpu.CompilerParams(
            dimension_semantics=("parallel",),
            vmem_limit_bytes=32 * 1024 * 1024,   # explicit scoped-VMEM limit
        ),
    )(x_nhwc, w1f, b1f, w2f, b2f)

    return out_flat.reshape(N, c_out, H, W)      # free reshape to NCHW


encoder1_forward = jax.jit(encoder1_forward_impl)


# ---------------------------------------------------------------------------
# Params + pure-JAX reference + self-test
# ---------------------------------------------------------------------------
def init_encoder1_params(key):
    """HWIO weights/biases with PyTorch-like kaiming-uniform fan_in bounds."""
    k1, k2, k3, k4 = jax.random.split(key, 4)
    bound1 = 1.0 / (3 * 3 * 3) ** 0.5
    bound2 = 1.0 / (3 * 3 * 32) ** 0.5
    w1 = jax.random.uniform(k1, (3, 3, 3, 32), jnp.float32, -bound1, bound1)
    b1 = jax.random.uniform(k2, (32,), jnp.float32, -bound1, bound1)
    w2 = jax.random.uniform(k3, (3, 3, 32, 64), jnp.float32, -bound2, bound2)
    b2 = jax.random.uniform(k4, (64,), jnp.float32, -bound2, bound2)
    return {"w1": w1, "b1": b1, "w2": w2, "b2": b2}


def _reference_forward(x_nchw, params):
    """Pure-JAX reference with matching bf16-operand / f32-accumulate precision."""
    dn = ("NHWC", "HWIO", "NHWC")
    x = jnp.transpose(x_nchw, (0, 2, 3, 1)).astype(jnp.bfloat16)
    h = lax.conv_general_dilated(x, params["w1"].astype(jnp.bfloat16),
                                 window_strides=(1, 1), padding="SAME",
                                 dimension_numbers=dn,
                                 preferred_element_type=jnp.float32)
    h = jnp.maximum(h + params["b1"], 0.0).astype(jnp.bfloat16)
    o = lax.conv_general_dilated(h, params["w2"].astype(jnp.bfloat16),
                                 window_strides=(1, 1), padding="SAME",
                                 dimension_numbers=dn,
                                 preferred_element_type=jnp.float32)
    o = jnp.maximum(o + params["b2"], 0.0)
    return jnp.transpose(o, (0, 3, 1, 2))


if __name__ == "__main__":
    key = jax.random.PRNGKey(0)
    kx, kp = jax.random.split(key)
    x = jax.random.normal(kx, (2, 3, 16, 16), jnp.float32)   # NCHW, like PyTorch
    params = init_encoder1_params(kp)

    out = encoder1_forward(x, params)
    jax.block_until_ready(out)

    assert out.shape == (2, 64, 16, 16), out.shape
    assert bool(jnp.all(out >= 0.0))                          # ReLU output
    ref = _reference_forward(x, params)
    max_err = float(jnp.max(jnp.abs(out - ref)))
    assert max_err < 2e-2, f"max abs err vs reference: {max_err}"
    print("KERNEL_OK")
</pallas_src>

<mosaic_0001>
module attributes {stable_mosaic.version = 11 : i64} {
  func.func @_encoder1_kernel(%arg0: i32, %arg1: memref<1x16x16x3xf32, #tpu.memory_space<vmem>>, %arg2: memref<27x32xbf16, #tpu.memory_space<vmem>>, %arg3: memref<1x32xf32, #tpu.memory_space<vmem>>, %arg4: memref<288x64xbf16, #tpu.memory_space<vmem>>, %arg5: memref<1x64xf32, #tpu.memory_space<vmem>>, %arg6: memref<1x64x256xf32, #tpu.memory_space<vmem>>, %arg7: memref<1x18x18x3xbf16, #tpu.memory_space<vmem>>, %arg8: memref<1x18x18x32xbf16, #tpu.memory_space<vmem>>) attributes {dimension_semantics = [#tpu.dimension_semantics<parallel>], iteration_bounds = array<i64: 2>, scalar_prefetch = 0 : i64, scratch_operands = 2 : i64, tpu.core_type = #tpu.core_type<tc>, window_params = [{transform_indices = @transform_0, window_bounds = array<i64: 1, 16, 16, 3>}, {pipeline_mode = #tpu.pipeline_mode<synchronous>, transform_indices = @transform_1, window_bounds = array<i64: 27, 32>}, {pipeline_mode = #tpu.pipeline_mode<synchronous>, transform_indices = @transform_2, window_bounds = array<i64: 1, 32>}, {pipeline_mode = #tpu.pipeline_mode<synchronous>, transform_indices = @transform_3, window_bounds = array<i64: 288, 64>}, {pipeline_mode = #tpu.pipeline_mode<synchronous>, transform_indices = @transform_4, window_bounds = array<i64: 1, 64>}, {transform_indices = @transform_5, window_bounds = array<i64: 1, 64, 256>}]} {
    %c0 = arith.constant 0 : index
    %c0_0 = arith.constant 0 : index
    %c0_1 = arith.constant 0 : index
    %c0_2 = arith.constant 0 : index
    %0 = vector.load %arg1[%c0, %c0_0, %c0_1, %c0_2] : memref<1x16x16x3xf32, #tpu.memory_space<vmem>>, vector<1x16x16x3xf32>
    %1 = arith.truncf %0 : vector<1x16x16x3xf32> to vector<1x16x16x3xbf16>
    %cst = arith.constant 0.000000e+00 : bf16
    %2 = vector.broadcast %cst : bf16 to vector<1x1x18x3xbf16>
    %cst_3 = arith.constant 0.000000e+00 : bf16
    %3 = vector.broadcast %cst_3 : bf16 to vector<1x16x1x3xbf16>
    %c0_4 = arith.constant 0 : index
    %c0_5 = arith.constant 0 : index
    %c0_6 = arith.constant 0 : index
    %c0_7 = arith.constant 0 : index
    %4 = vector.load %arg7[%c0_4, %c0_5, %c0_6, %c0_7] : memref<1x18x18x3xbf16, #tpu.memory_space<vmem>>, vector<1x1x18x3xbf16>
    tpu.vector_store %arg7[%c0_4, %c0_5, %c0_6, %c0_7], %2 {strides = array<i32>} : memref<1x18x18x3xbf16, #tpu.memory_space<vmem>>, vector<1x1x18x3xbf16>,
    %c0_8 = arith.constant 0 : index
    %c17 = arith.constant 17 : index
    %c0_9 = arith.constant 0 : index
    %c0_10 = arith.constant 0 : index
    %5 = vector.load %arg7[%c0_8, %c17, %c0_9, %c0_10] : memref<1x18x18x3xbf16, #tpu.memory_space<vmem>>, vector<1x1x18x3xbf16>
    tpu.vector_store %arg7[%c0_8, %c17, %c0_9, %c0_10], %2 {strides = array<i32>} : memref<1x18x18x3xbf16, #tpu.memory_space<vmem>>, vector<1x1x18x3xbf16>,
    %c0_11 = arith.constant 0 : index
    %c1 = arith.constant 1 : index
    %c0_12 = arith.constant 0 : index
    %c0_13 = arith.constant 0 : index
    %6 = vector.load %arg7[%c0_11, %c1, %c0_12, %c0_13] : memref<1x18x18x3xbf16, #tpu.memory_space<vmem>>, vector<1x16x1x3xbf16>
    tpu.vector_store %arg7[%c0_11, %c1, %c0_12, %c0_13], %3 {strides = array<i32>} : memref<1x18x18x3xbf16, #tpu.memory_space<vmem>>, vector<1x16x1x3xbf16>,
    %c0_14 = arith.constant 0 : index
    %c1_15 = arith.constant 1 : index
    %c17_16 = arith.constant 17 : index
    %c0_17 = arith.constant 0 : index
    %7 = vector.load %arg7[%c0_14, %c1_15, %c17_16, %c0_17] : memref<1x18x18x3xbf16, #tpu.memory_space<vmem>>, vector<1x16x1x3xbf16>
    tpu.vector_store %arg7[%c0_14, %c1_15, %c17_16, %c0_17], %3 {strides = array<i32>} : memref<1x18x18x3xbf16, #tpu.memory_space<vmem>>, vector<1x16x1x3xbf16>,
    %c0_18 = arith.constant 0 : index
    %c1_19 = arith.constant 1 : index
    %c1_20 = arith.constant 1 : index
    %c0_21 = arith.constant 0 : index
    %8 = vector.load %arg7[%c0_18, %c1_19, %c1_20, %c0_21] : memref<1x18x18x3xbf16, #tpu.memory_space<vmem>>, vector<1x16x16x3xbf16>
    tpu.vector_store %arg7[%c0_18, %c1_19, %c1_20, %c0_21], %1 {strides = array<i32>} : memref<1x18x18x3xbf16, #tpu.memory_space<vmem>>, vector<1x16x16x3xbf16>,
    %c0_22 = arith.constant 0 : index
    %c0_23 = arith.constant 0 : index
    %c0_24 = arith.constant 0 : index
    %c0_25 = arith.constant 0 : index
    %9 = vector.load %arg7[%c0_22, %c0_23, %c0_24, %c0_25] : memref<1x18x18x3xbf16, #tpu.memory_space<vmem>>, vector<1x16x16x3xbf16>
    %c0_26 = arith.constant 0 : index
    %c0_27 = arith.constant 0 : index
    %c1_28 = arith.constant 1 : index
    %c0_29 = arith.constant 0 : index
    %10 = vector.load %arg7[%c0_26, %c0_27, %c1_28, %c0_29] : memref<1x18x18x3xbf16, #tpu.memory_space<vmem>>, vector<1x16x16x3xbf16>
    %c0_30 = arith.constant 0 : index
    %c0_31 = arith.constant 0 : index
    %c2 = arith.constant 2 : index
    %c0_32 = arith.constant 0 : index
    %11 = vector.load %arg7[%c0_30, %c0_31, %c2, %c0_32] : memref<1x18x18x3xbf16, #tpu.memory_space<vmem>>, vector<1x16x16x3xbf16>
    %c0_33 = arith.constant 0 : index
    %c1_34 = arith.constant 1 : index
    %c0_35 = arith.constant 0 : index
    %c0_36 = arith.constant 0 : index
    %12 = vector.load %arg7[%c0_33, %c1_34, %c0_35, %c0_36] : memref<1x18x18x3xbf16, #tpu.memory_space<vmem>>, vector<1x16x16x3xbf16>
    %c0_37 = arith.constant 0 : index
    %c1_38 = arith.constant 1 : index
    %c1_39 = arith.constant 1 : index
    %c0_40 = arith.constant 0 : index
    %13 = vector.load %arg7[%c0_37, %c1_38, %c1_39, %c0_40] : memref<1x18x18x3xbf16, #tpu.memory_space<vmem>>, vector<1x16x16x3xbf16>
    %c0_41 = arith.constant 0 : index
    %c1_42 = arith.constant 1 : index
    %c2_43 = arith.constant 2 : index
    %c0_44 = arith.constant 0 : index
    %14 = vector.load %arg7[%c0_41, %c1_42, %c2_43, %c0_44] : memref<1x18x18x3xbf16, #tpu.memory_space<vmem>>, vector<1x16x16x3xbf16>
    %c0_45 = arith.constant 0 : index
    %c2_46 = arith.constant 2 : index
    %c0_47 = arith.constant 0 : index
    %c0_48 = arith.constant 0 : index
    %15 = vector.load %arg7[%c0_45, %c2_46, %c0_47, %c0_48] : memref<1x18x18x3xbf16, #tpu.memory_space<vmem>>, vector<1x16x16x3xbf16>
    %c0_49 = arith.constant 0 : index
    %c2_50 = arith.constant 2 : index
    %c1_51 = arith.constant 1 : index
    %c0_52 = arith.constant 0 : index
    %16 = vector.load %arg7[%c0_49, %c2_50, %c1_51, %c0_52] : memref<1x18x18x3xbf16, #tpu.memory_space<vmem>>, vector<1x16x16x3xbf16>
    %c0_53 = arith.constant 0 : index
    %c2_54 = arith.constant 2 : index
    %c2_55 = arith.constant 2 : index
    %c0_56 = arith.constant 0 : index
    %17 = vector.load %arg7[%c0_53, %c2_54, %c2_55, %c0_56] : memref<1x18x18x3xbf16, #tpu.memory_space<vmem>>, vector<1x16x16x3xbf16>
    %18 = tpu.concatenate %9, %10, %11, %12, %13, %14, %15, %16, %17 in 3 : vector<1x16x16x3xbf16>, vector<1x16x16x3xbf16>, vector<1x16x16x3xbf16>, vector<1x16x16x3xbf16>, vector<1x16x16x3xbf16>, vector<1x16x16x3xbf16>, vector<1x16x16x3xbf16>, vector<1x16x16x3xbf16>, vector<1x16x16x3xbf16> -> vector<1x16x16x27xbf16>
    %19 = vector.shape_cast %18 : vector<1x16x16x27xbf16> to vector<256x27xbf16>
    %c0_57 = arith.constant 0 : index
    %c0_58 = arith.constant 0 : index
    %20 = vector.load %arg2[%c0_57, %c0_58] : memref<27x32xbf16, #tpu.memory_space<vmem>>, vector<27x32xbf16>
    %cst_59 = arith.constant dense<0.000000e+00> : vector<256x32xf32>
    %21 = tpu.matmul %19, %20, %cst_59 {dimension_numbers = #tpu.dot_dimension_numbers<[1], [0], [0], [1], [0, 0, 1, 1], [], []>} : vector<256x27xbf16>, vector<27x32xbf16>, vector<256x32xf32> -> vector<256x32xf32>
    %c0_60 = arith.constant 0 : index
    %c0_61 = arith.constant 0 : index
    %22 = vector.load %arg3[%c0_60, %c0_61] : memref<1x32xf32, #tpu.memory_space<vmem>>, vector<1x32xf32>
    %23 = vector.broadcast %22 : vector<1x32xf32> to vector<256x32xf32>
    %24 = arith.addf %21, %23 : vector<256x32xf32>
    %cst_62 = arith.constant 0.000000e+00 : f32
    %25 = vector.broadcast %cst_62 : f32 to vector<256x32xf32>
    %26 = arith.maximumf %24, %25 : vector<256x32xf32>
    %27 = arith.truncf %26 : vector<256x32xf32> to vector<256x32xbf16>
    %28 = vector.shape_cast %27 : vector<256x32xbf16> to vector<1x16x16x32xbf16>
    %cst_63 = arith.constant 0.000000e+00 : bf16
    %29 = vector.broadcast %cst_63 : bf16 to vector<1x1x18x32xbf16>
    %cst_64 = arith.constant 0.000000e+00 : bf16
    %30 = vector.broadcast %cst_64 : bf16 to vector<1x16x1x32xbf16>
    %c0_65 = arith.constant 0 : index
    %c0_66 = arith.constant 0 : index
    %c0_67 = arith.constant 0 : index
    %c0_68 = arith.constant 0 : index
    %31 = vector.load %arg8[%c0_65, %c0_66, %c0_67, %c0_68] : memref<1x18x18x32xbf16, #tpu.memory_space<vmem>>, vector<1x1x18x32xbf16>
    tpu.vector_store %arg8[%c0_65, %c0_66, %c0_67, %c0_68], %29 {strides = array<i32>} : memref<1x18x18x32xbf16, #tpu.memory_space<vmem>>, vector<1x1x18x32xbf16>,
    %c0_69 = arith.constant 0 : index
    %c17_70 = arith.constant 17 : index
    %c0_71 = arith.constant 0 : index
    %c0_72 = arith.constant 0 : index
    %32 = vector.load %arg8[%c0_69, %c17_70, %c0_71, %c0_72] : memref<1x18x18x32xbf16, #tpu.memory_space<vmem>>, vector<1x1x18x32xbf16>
    tpu.vector_store %arg8[%c0_69, %c17_70, %c0_71, %c0_72], %29 {strides = array<i32>} : memref<1x18x18x32xbf16, #tpu.memory_space<vmem>>, vector<1x1x18x32xbf16>,
    %c0_73 = arith.constant 0 : index
    %c1_74 = arith.constant 1 : index
    %c0_75 = arith.constant 0 : index
    %c0_76 = arith.constant 0 : index
    %33 = vector.load %arg8[%c0_73, %c1_74, %c0_75, %c0_76] : memref<1x18x18x32xbf16, #tpu.memory_space<vmem>>, vector<1x16x1x32xbf16>
    tpu.vector_store %arg8[%c0_73, %c1_74, %c0_75, %c0_76], %30 {strides = array<i32>} : memref<1x18x18x32xbf16, #tpu.memory_space<vmem>>, vector<1x16x1x32xbf16>,
    %c0_77 = arith.constant 0 : index
    %c1_78 = arith.constant 1 : index
    %c17_79 = arith.constant 17 : index
    %c0_80 = arith.constant 0 : index
    %34 = vector.load %arg8[%c0_77, %c1_78, %c17_79, %c0_80] : memref<1x18x18x32xbf16, #tpu.memory_space<vmem>>, vector<1x16x1x32xbf16>
    tpu.vector_store %arg8[%c0_77, %c1_78, %c17_79, %c0_80], %30 {strides = array<i32>} : memref<1x18x18x32xbf16, #tpu.memory_space<vmem>>, vector<1x16x1x32xbf16>,
    %c0_81 = arith.constant 0 : index
    %c1_82 = arith.constant 1 : index
    %c1_83 = arith.constant 1 : index
    %c0_84 = arith.constant 0 : index
    %35 = vector.load %arg8[%c0_81, %c1_82, %c1_83, %c0_84] : memref<1x18x18x32xbf16, #tpu.memory_space<vmem>>, vector<1x16x16x32xbf16>
    tpu.vector_store %arg8[%c0_81, %c1_82, %c1_83, %c0_84], %28 {strides = array<i32>} : memref<1x18x18x32xbf16, #tpu.memory_space<vmem>>, vector<1x16x16x32xbf16>,
    %c0_85 = arith.constant 0 : index
    %c0_86 = arith.constant 0 : index
    %c0_87 = arith.constant 0 : index
    %c0_88 = arith.constant 0 : index
    %36 = vector.load %arg8[%c0_85, %c0_86, %c0_87, %c0_88] : memref<1x18x18x32xbf16, #tpu.memory_space<vmem>>, vector<1x16x16x32xbf16>
    %c0_89 = arith.constant 0 : index
    %c0_90 = arith.constant 0 : index
    %c1_91 = arith.constant 1 : index
    %c0_92 = arith.constant 0 : index
    %37 = vector.load %arg8[%c0_89, %c0_90, %c1_91, %c0_92] : memref<1x18x18x32xbf16, #tpu.memory_space<vmem>>, vector<1x16x16x32xbf16>
    %c0_93 = arith.constant 0 : index
    %c0_94 = arith.constant 0 : index
    %c2_95 = arith.constant 2 : index
    %c0_96 = arith.constant 0 : index
    %38 = vector.load %arg8[%c0_93, %c0_94, %c2_95, %c0_96] : memref<1x18x18x32xbf16, #tpu.memory_space<vmem>>, vector<1x16x16x32xbf16>
    %c0_97 = arith.constant 0 : index
    %c1_98 = arith.constant 1 : index
    %c0_99 = arith.constant 0 : index
    %c0_100 = arith.constant 0 : index
    %39 = vector.load %arg8[%c0_97, %c1_98, %c0_99, %c0_100] : memref<1x18x18x32xbf16, #tpu.memory_space<vmem>>, vector<1x16x16x32xbf16>
    %c0_101 = arith.constant 0 : index
    %c1_102 = arith.constant 1 : index
    %c1_103 = arith.constant 1 : index
    %c0_104 = arith.constant 0 : index
    %40 = vector.load %arg8[%c0_101, %c1_102, %c1_103, %c0_104] : memref<1x18x18x32xbf16, #tpu.memory_space<vmem>>, vector<1x16x16x32xbf16>
    %c0_105 = arith.constant 0 : index
    %c1_106 = arith.constant 1 : index
    %c2_107 = arith.constant 2 : index
    %c0_108 = arith.constant 0 : index
    %41 = vector.load %arg8[%c0_105, %c1_106, %c2_107, %c0_108] : memref<1x18x18x32xbf16, #tpu.memory_space<vmem>>, vector<1x16x16x32xbf16>
    %c0_109 = arith.constant 0 : index
    %c2_110 = arith.constant 2 : index
    %c0_111 = arith.constant 0 : index
    %c0_112 = arith.constant 0 : index
    %42 = vector.load %arg8[%c0_109, %c2_110, %c0_111, %c0_112] : memref<1x18x18x32xbf16, #tpu.memory_space<vmem>>, vector<1x16x16x32xbf16>
    %c0_113 = arith.constant 0 : index
    %c2_114 = arith.constant 2 : index
    %c1_115 = arith.constant 1 : index
    %c0_116 = arith.constant 0 : index
    %43 = vector.load %arg8[%c0_113, %c2_114, %c1_115, %c0_116] : memref<1x18x18x32xbf16, #tpu.memory_space<vmem>>, vector<1x16x16x32xbf16>
    %c0_117 = arith.constant 0 : index
    %c2_118 = arith.constant 2 : index
    %c2_119 = arith.constant 2 : index
    %c0_120 = arith.constant 0 : index
    %44 = vector.load %arg8[%c0_117, %c2_118, %c2_119, %c0_120] : memref<1x18x18x32xbf16, #tpu.memory_space<vmem>>, vector<1x16x16x32xbf16>
    %45 = tpu.concatenate %36, %37, %38, %39, %40, %41, %42, %43, %44 in 3 : vector<1x16x16x32xbf16>, vector<1x16x16x32xbf16>, vector<1x16x16x32xbf16>, vector<1x16x16x32xbf16>, vector<1x16x16x32xbf16>, vector<1x16x16x32xbf16>, vector<1x16x16x32xbf16>, vector<1x16x16x32xbf16>, vector<1x16x16x32xbf16> -> vector<1x16x16x288xbf16>
    %46 = vector.shape_cast %45 : vector<1x16x16x288xbf16> to vector<256x288xbf16>
    %c0_121 = arith.constant 0 : index
    %c0_122 = arith.constant 0 : index
    %47 = vector.load %arg4[%c0_121, %c0_122] : memref<288x64xbf16, #tpu.memory_space<vmem>>, vector<288x64xbf16>
    %cst_123 = arith.constant dense<0.000000e+00> : vector<256x64xf32>
    %48 = tpu.matmul %46, %47, %cst_123 {dimension_numbers = #tpu.dot_dimension_numbers<[1], [0], [0], [1], [0, 0, 1, 1], [], []>} : vector<256x288xbf16>, vector<288x64xbf16>, vector<256x64xf32> -> vector<256x64xf32>
    %c0_124 = arith.constant 0 : index
    %c0_125 = arith.constant 0 : index
    %49 = vector.load %arg5[%c0_124, %c0_125] : memref<1x64xf32, #tpu.memory_space<vmem>>, vector<1x64xf32>
    %50 = vector.broadcast %49 : vector<1x64xf32> to vector<256x64xf32>
    %51 = arith.addf %48, %50 : vector<256x64xf32>
    %cst_126 = arith.constant 0.000000e+00 : f32
    %52 = vector.broadcast %cst_126 : f32 to vector<256x64xf32>
    %53 = arith.maximumf %51, %52 : vector<256x64xf32>
    %54 = vector.shape_cast %53 : vector<256x64xf32> to vector<1x256x64xf32>
    %55 = vector.shape_cast %54 : vector<1x256x64xf32> to vector<256x64xf32>
    %56 = tpu.transpose %55, [1, 0] : vector<256x64xf32> -> vector<64x256xf32>
    %c0_127 = arith.constant 0 : index
    %c0_128 = arith.constant 0 : index
    %c0_129 = arith.constant 0 : index
    %57 = vector.load %arg6[%c0_127, %c0_128, %c0_129] : memref<1x64x256xf32, #tpu.memory_space<vmem>>, vector<1x64x256xf32>
    %58 = vector.shape_cast %57 : vector<1x64x256xf32> to vector<64x256xf32>
    %59 = vector.shape_cast %56 : vector<64x256xf32> to vector<1x64x256xf32>
    tpu.vector_store %arg6[%c0_127, %c0_128, %c0_129], %59 {strides = array<i32>} : memref<1x64x256xf32, #tpu.memory_space<vmem>>, vector<1x64x256xf32>,
    return
  }
  func.func @transform_0(%arg0: i32) -> (i32, i32, i32, i32) {
    %c0_i32 = arith.constant 0 : i32
    %c0_i32_0 = arith.constant 0 : i32
    %c0_i32_1 = arith.constant 0 : i32
    %c0_i32_2 = arith.constant 0 : i32
    return %arg0, %c0_i32, %c0_i32_0, %c0_i32_1 : i32, i32, i32, i32
  }
  func.func @transform_1(%arg0: i32) -> (i32, i32) {
    %c0_i32 = arith.constant 0 : i32
    %c0_i32_0 = arith.constant 0 : i32
    %c0_i32_1 = arith.constant 0 : i32
    return %c0_i32, %c0_i32_0 : i32, i32
  }
  func.func @transform_2(%arg0: i32) -> (i32, i32) {
    %c0_i32 = arith.constant 0 : i32
    %c0_i32_0 = arith.constant 0 : i32
    %c0_i32_1 = arith.constant 0 : i32
    return %c0_i32, %c0_i32_0 : i32, i32
  }
  func.func @transform_3(%arg0: i32) -> (i32, i32) {
    %c0_i32 = arith.constant 0 : i32
    %c0_i32_0 = arith.constant 0 : i32
    %c0_i32_1 = arith.constant 0 : i32
    return %c0_i32, %c0_i32_0 : i32, i32
  }
  func.func @transform_4(%arg0: i32) -> (i32, i32) {
    %c0_i32 = arith.constant 0 : i32
    %c0_i32_0 = arith.constant 0 : i32
    %c0_i32_1 = arith.constant 0 : i32
    return %c0_i32, %c0_i32_0 : i32, i32
  }
  func.func @transform_5(%arg0: i32) -> (i32, i32, i32) {
    %c0_i32 = arith.constant 0 : i32
    %c0_i32_0 = arith.constant 0 : i32
    %c0_i32_1 = arith.constant 0 : i32
    return %arg0, %c0_i32, %c0_i32_0 : i32, i32, i32
  }
}

</mosaic_0001>

<llo_original>
// kernel: encoder1_forward_impl.1
$region0: #{encoder1_forward_impl.1}
  #allocation0 [shape = 'u32[]', space=smem, size = 0x4, offset = 0x4, fixed_abs, tag = 'smem constant byte address 0x4 - core index']
  #allocation1 [shape = 'u32[144,128]{1,0:T(1,128)}', space=vmem, size = 0x12000, scoped, tag = 'internal scratch']
  #allocation2 [shape = 'bf16[1,18,18,3]{3,2,1,0:T(8,128)(2,1)}', space=vmem, size = 0x1b000, scoped, tag = 'scratch operand']
  #allocation3 [shape = 'bf16[1,18,18,32]{3,2,1,0:T(8,128)(2,1)}', space=vmem, size = 0x1b000, scoped, tag = 'scratch operand']
  %s0 = inlined_call_operand.vmem [shape: f32[2,16,16,3], index: 0, kind: input, shape index: {}]
  %s1 = inlined_call_operand.vmem [shape: bf16[27,32], index: 1, kind: input, shape index: {}]
  %s2 = inlined_call_operand.vmem [shape: f32[1,32], index: 2, kind: input, shape index: {}]
  %s3 = inlined_call_operand.vmem [shape: bf16[288,64], index: 3, kind: input, shape index: {}]
  %s4 = inlined_call_operand.vmem [shape: f32[1,64], index: 4, kind: input, shape index: {}]
  %s5 = inlined_call_operand.vmem [shape: f32[2,64,256], index: 5, kind: output, shape index: {}]
  %s6 = sld [smem:[#allocation0]]
  $region53: #{encoder1_forward_impl.1} parent=0
    _
  %s8 = ssub.s32 1, %s6
  %s9 = scalar_select 0, %s8, %s6
  loop: start=0, step=1, limit=4
  $region2: #{encoder1_forward_impl.1} parent=0 // loop_pre_header
    _
  $region3: #{encoder1_forward_impl.1} parent=0 // loop_header
    %s11 = sphi 0, %s15
    %p12 = scmp.ge.s32.totalorder %s11, 4
    %s21 = sphi 0, %s23
    %s24 = sphi 0, %s21
    %s25 = sphi 0, %s24
    %s41 = sphi 0, %s25
    %s45 = sphi 0, %s45
    %s47 = sphi 0, %s45
    %s48 = sphi 0, %s47
    %s62 = sphi 0, %s48
    %s66 = sphi 0, %s66
    %s68 = sphi 0, %s66
    %s69 = sphi 0, %s68
    %s83 = sphi 0, %s69
    %s87 = sphi 0, %s87
    %s89 = sphi 0, %s87
    %s90 = sphi 0, %s89
    %s104 = sphi 0, %s90
    %s108 = sphi 0, %s108
    %s110 = sphi 0, %s108
    %s111 = sphi 0, %s110
    %s125 = sphi 0, %s111
    %s131 = sphi 0, %s133
    %s134 = sphi 0, %s131
    %s135 = sphi 0, %s134
    %s151 = sphi 0, %s135
  $region4: #{encoder1_forward_impl.1} parent=0 // loop_header_branch
    %14 = sbr.rel (%p12) target = $region8
  $region5: #{encoder1_forward_impl.1} parent=0 // loop_body
    %s16 = ssub.s32 %s11, 1
    %s17 = ssub.s32 %s11, 2
    %s18 = sadd.s32 %s11, 1
    %s19 = ssub.s32 %s11, %s18
    %p20 = scmp.eq.s32.totalorder %s19, 0
    %s22 = sadd.s32 %s21, 1
    %s23 = scalar_select %p20, %s21, %s22
    %p26 = pneg %p20
    %p27 = scmp.eq.s32.totalorder %s11, 1
    %p28 = por %p26, %p27
    %p29 = scmp.ne.s32.totalorder %s21, %s24
    %p30 = scmp.eq.s32.totalorder %s11, 0
    %p31 = por %p29, %p30
    %p32 = scmp.ne.s32.totalorder %s21, %s24
    %p33 = scmp.eq.s32.totalorder %s16, 1
    %p34 = por %p32, %p33
    %p35 = scmp.ne.s32.totalorder %s24, %s25
    %p36 = scmp.eq.s32.totalorder %s16, 0
    %p37 = por %p35, %p36
    %p38 = scmp.ne.s32.totalorder %s24, %s25
    %p39 = scmp.eq.s32.totalorder %s17, 1
    %p40 = por %p38, %p39
    %p42 = scmp.ne.s32.totalorder %s25, %s41
    %p43 = scmp.eq.s32.totalorder %s17, 0
    %p44 = por %p42, %p43
    %s46 = sadd.s32 %s45, 1
    %p49 = scmp.eq.s32.totalorder %s11, 1
    %p50 = scmp.ne.s32.totalorder %s45, %s47
    %p51 = scmp.eq.s32.totalorder %s11, 0
    %p52 = por %p50, %p51
    %p53 = scmp.ne.s32.totalorder %s45, %s47
    %p54 = scmp.eq.s32.totalorder %s16, 1
    %p55 = por %p53, %p54
    %p56 = scmp.ne.s32.totalorder %s47, %s48
    %p57 = scmp.eq.s32.totalorder %s16, 0
    %p58 = por %p56, %p57
    %p59 = scmp.ne.s32.totalorder %s47, %s48
    %p60 = scmp.eq.s32.totalorder %s17, 1
    %p61 = por %p59, %p60
    %p63 = scmp.ne.s32.totalorder %s48, %s62
    %p64 = scmp.eq.s32.totalorder %s17, 0
    %p65 = por %p63, %p64
    %s67 = sadd.s32 %s66, 1
    %p70 = scmp.eq.s32.totalorder %s11, 1
    %p71 = scmp.ne.s32.totalorder %s66, %s68
    %p72 = scmp.eq.s32.totalorder %s11, 0
    %p73 = por %p71, %p72
    %p74 = scmp.ne.s32.totalorder %s66, %s68
    %p75 = scmp.eq.s32.totalorder %s16, 1
    %p76 = por %p74, %p75
    %p77 = scmp.ne.s32.totalorder %s68, %s69
    %p78 = scmp.eq.s32.totalorder %s16, 0
    %p79 = por %p77, %p78
    %p80 = scmp.ne.s32.totalorder %s68, %s69
    %p81 = scmp.eq.s32.totalorder %s17, 1
    %p82 = por %p80, %p81
    %p84 = scmp.ne.s32.totalorder %s69, %s83
    %p85 = scmp.eq.s32.totalorder %s17, 0
    %p86 = por %p84, %p85
    %s88 = sadd.s32 %s87, 1
    %p91 = scmp.eq.s32.totalorder %s11, 1
    %p92 = scmp.ne.s32.totalorder %s87, %s89
    %p93 = scmp.eq.s32.totalorder %s11, 0
    %p94 = por %p92, %p93
    %p95 = scmp.ne.s32.totalorder %s87, %s89
    %p96 = scmp.eq.s32.totalorder %s16, 1
    %p97 = por %p95, %p96
    %p98 = scmp.ne.s32.totalorder %s89, %s90
    %p99 = scmp.eq.s32.totalorder %s16, 0
    %p100 = por %p98, %p99
    %p101 = scmp.ne.s32.totalorder %s89, %s90
    %p102 = scmp.eq.s32.totalorder %s17, 1
    %p103 = por %p101, %p102
    %p105 = scmp.ne.s32.totalorder %s90, %s104
    %p106 = scmp.eq.s32.totalorder %s17, 0
    %p107 = por %p105, %p106
    %s109 = sadd.s32 %s108, 1
    %p112 = scmp.eq.s32.totalorder %s11, 1
    %p113 = scmp.ne.s32.totalorder %s108, %s110
    %p114 = scmp.eq.s32.totalorder %s11, 0
    %p115 = por %p113, %p114
    %p116 = scmp.ne.s32.totalorder %s108, %s110
    %p117 = scmp.eq.s32.totalorder %s16, 1
    %p118 = por %p116, %p117
    %p119 = scmp.ne.s32.totalorder %s110, %s111
    %p120 = scmp.eq.s32.totalorder %s16, 0
    %p121 = por %p119, %p120
    %p122 = scmp.ne.s32.totalorder %s110, %s111
    %p123 = scmp.eq.s32.totalorder %s17, 1
    %p124 = por %p122, %p123
    %p126 = scmp.ne.s32.totalorder %s111, %s125
    %p127 = scmp.eq.s32.totalorder %s17, 0
    %p128 = por %p126, %p127
    %s129 = ssub.s32 %s11, %s18
    %p130 = scmp.eq.s32.totalorder %s129, 0
    %s132 = sadd.s32 %s131, 1
    %s133 = scalar_select %p130, %s131, %s132
    %p136 = pneg %p130
    %p137 = scmp.eq.s32.totalorder %s11, 1
    %p138 = por %p136, %p137
    %p139 = scmp.ne.s32.totalorder %s131, %s134
    %p140 = scmp.eq.s32.totalorder %s11, 0
    %p141 = por %p139, %p140
    %p142 = scmp.ne.s32.totalorder %s131, %s134
    %p143 = scmp.eq.s32.totalorder %s16, 1
    %p144 = por %p142, %p143
    %p145 = scmp.ne.s32.totalorder %s134, %s135
    %p146 = scmp.eq.s32.totalorder %s16, 0
    %p147 = por %p145, %p146
    %p148 = scmp.ne.s32.totalorder %s134, %s135
    %p149 = scmp.eq.s32.totalorder %s17, 1
    %p150 = por %p148, %p149
    %p152 = scmp.ne.s32.totalorder %s135, %s151
    %p153 = scmp.eq.s32.totalorder %s17, 0
    %p154 = por %p152, %p153
    %p155 = scmp.le.s32.totalorder 1, %s11
    %p156 = scmp.lt.s32.totalorder %s11, 3
    %p157 = pnand %p155, %p156
    %p158 = pneg %p157
    // Predicated region
    $region9: #{encoder1_forward_impl.1} parent=5 // pred_check
      _
    $region10: #{encoder1_forward_impl.1} parent=5 // pred_check_branch
      %160 = sbr.rel (%p157) target = $region12
    $region11: #{encoder1_forward_impl.1} parent=5 // pred_region
      %s161 = ssub.s32 %s11, 1
      // Predicated region
      $region13: #{encoder1_forward_impl.1} parent=11 // pred_check
        %p162 = pneg %p58
      $region14: #{encoder1_forward_impl.1} parent=11 // pred_check_branch
        %164 = sbr.rel (%p162) target = $region16
      $region15: #{encoder1_forward_impl.1} parent=11 // pred_region
        _
      $region16: #{encoder1_forward_impl.1} parent=11 // pred_fallthru
        _
      // Predicated region
      $region17: #{encoder1_forward_impl.1} parent=11 // pred_check
        %p165 = pneg %p79
      $region18: #{encoder1_forward_impl.1} parent=11 // pred_check_branch
        %167 = sbr.rel (%p165) target = $region20
      $region19: #{encoder1_forward_impl.1} parent=11 // pred_region
        _
      $region20: #{encoder1_forward_impl.1} parent=11 // pred_fallthru
        _
      // Predicated region
      $region21: #{encoder1_forward_impl.1} parent=11 // pred_check
        %p168 = pneg %p100
      $region22: #{encoder1_forward_impl.1} parent=11 // pred_check_branch
        %170 = sbr.rel (%p168) target = $region24
      $region23: #{encoder1_forward_impl.1} parent=11 // pred_region
        _
      $region24: #{encoder1_forward_impl.1} parent=11 // pred_fallthru
        _
      // Predicated region
      $region25: #{encoder1_forward_impl.1} parent=11 // pred_check
        %p171 = pneg %p121
      $region26: #{encoder1_forward_impl.1} parent=11 // pred_check_branch
        %173 = sbr.rel (%p171) target = $region28
      $region27: #{encoder1_forward_impl.1} parent=11 // pred_region
        _
      $region28: #{encoder1_forward_impl.1} parent=11 // pred_fallthru
        _
    $region12: #{encoder1_forward_impl.1} parent=5 // pred_fallthru
      _
    %p174 = scmp.lt.s32.totalorder %s11, 2
    // Predicated region
    $region29: #{encoder1_forward_impl.1} parent=5 // pred_check
      %p175 = pneg %p174
    $region30: #{encoder1_forward_impl.1} parent=5 // pred_check_branch
      %177 = sbr.rel (%p175) target = $region32
    $region31: #{encoder1_forward_impl.1} parent=5 // pred_region
      // Predicated region
      $region33: #{encoder1_forward_impl.1} parent=31 // pred_check
        %p178 = pneg %p31
      $region34: #{encoder1_forward_impl.1} parent=31 // pred_check_branch
        %180 = sbr.rel (%p178) target = $region36
      $region35: #{encoder1_forward_impl.1} parent=31 // pred_region
        %p181 = scmp.lt.s32.totalorder %s11, 1
        %s182 = scalar_select %p181, %s11, 1
        %s183 = smul.addr %s182, 32
        %s184 = smul.addr %s183, 8
        %s185 = scalar_lea.vmem %s0, %s184
      $region36: #{encoder1_forward_impl.1} parent=31 // pred_fallthru
        _
    $region32: #{encoder1_forward_impl.1} parent=5 // pred_fallthru
      _
    %p186 = scmp.le.s32.totalorder 1, %s11
    %p187 = scmp.lt.s32.totalorder %s11, 3
    %p188 = pnand %p186, %p187
    %p189 = pneg %p188
    // Predicated region
    $region37: #{encoder1_forward_impl.1} parent=5 // pred_check
      _
    $region38: #{encoder1_forward_impl.1} parent=5 // pred_check_branch
      %191 = sbr.rel (%p188) target = $region40
    $region39: #{encoder1_forward_impl.1} parent=5 // pred_region
      %s192 = ssub.s32 %s11, 1
      %p193 = scmp.lt.s32.totalorder %s16, 1
      %s194 = scalar_select %p193, %s16, 1
      %s195 = smul.addr %s194, 32
      %s196 = smul.addr %s195, 8
      %s197 = scalar_lea.vmem %s0, %s196
      %p198 = pneg %p37
      %p199 = pneg %p34
      %p200 = pneg %p58
      %p201 = pneg %p55
      %p202 = pneg %p79
      %p203 = pneg %p76
      %p204 = pneg %p100
      %p205 = pneg %p97
      %p206 = pneg %p121
      %p207 = pneg %p118
      %p208 = pneg %p147
      %p209 = pneg %p144
      %p210 = scmp.lt.s32.totalorder %s16, 1
      %s211 = scalar_select %p210, %s16, 1
      %s212 = smul.addr %s211, 16
      %s213 = smul.addr %s212, 8
      %s214 = scalar_lea.vmem %s5, %s213
      %p215 = scmp.lt.s32.totalorder %s16, 1
      %s216 = scalar_select %p215, %s16, 1
      %s217 = smul.addr %s216, 32
      %s218 = smul.addr %s217, 8
      %s219 = scalar_lea.vmem %s0, %s218
      %p220 = scmp.lt.s32.totalorder %s16, 1
      %s221 = scalar_select %p220, %s16, 1
      %s222 = smul.addr %s221, 16
      %s223 = smul.addr %s222, 8
      %s224 = scalar_lea.vmem %s5, %s223
      %v226 = vld [vmem:[%s219] sm:$0xff]
      %v227 = vld [vmem:[%s219 + $0x8] sm:$0xff]
      %v228 = vld [vmem:[%s219 + $0x10] sm:$0xff]
      %v229 = vld [vmem:[%s219 + $0x18] sm:$0xff]
      %v230 = vld [vmem:[%s219 + $0x20] sm:$0xff]
      %v231 = vld [vmem:[%s219 + $0x28] sm:$0xff]
      %v232 = vld [vmem:[%s219 + $0x30] sm:$0xff]
      %v233 = vld [vmem:[%s219 + $0x38] sm:$0xff]
      %v234 = vld [vmem:[%s219 + $0x40] sm:$0xff]
      %v235 = vld [vmem:[%s219 + $0x48] sm:$0xff]
      %v236 = vld [vmem:[%s219 + $0x50] sm:$0xff]
      %v237 = vld [vmem:[%s219 + $0x58] sm:$0xff]
      %v238 = vld [vmem:[%s219 + $0x60] sm:$0xff]
      %v239 = vld [vmem:[%s219 + $0x68] sm:$0xff]
      %v240 = vld [vmem:[%s219 + $0x70] sm:$0xff]
      %v241 = vld [vmem:[%s219 + $0x78] sm:$0xff]
      %v242 = vld [vmem:[%s219 + $0x80] sm:$0xff]
      %v243 = vld [vmem:[%s219 + $0x88] sm:$0xff]
      %v244 = vld [vmem:[%s219 + $0x90] sm:$0xff]
      %v245 = vld [vmem:[%s219 + $0x98] sm:$0xff]
      %v246 = vld [vmem:[%s219 + $0xa0] sm:$0xff]
      %v247 = vld [vmem:[%s219 + $0xa8] sm:$0xff]
      %v248 = vld [vmem:[%s219 + $0xb0] sm:$0xff]
      %v249 = vld [vmem:[%s219 + $0xb8] sm:$0xff]
      %v250 = vld [vmem:[%s219 + $0xc0] sm:$0xff]
      %v251 = vld [vmem:[%s219 + $0xc8] sm:$0xff]
      %v252 = vld [vmem:[%s219 + $0xd0] sm:$0xff]
      %v253 = vld [vmem:[%s219 + $0xd8] sm:$0xff]
      %v254 = vld [vmem:[%s219 + $0xe0] sm:$0xff]
      %v255 = vld [vmem:[%s219 + $0xe8] sm:$0xff]
      %v256 = vld [vmem:[%s219 + $0xf0] sm:$0xff]
      %v257 = vld [vmem:[%s219 + $0xf8] sm:$0xff]
      %v258 = vpack.c.bf16 %v227, %v226
      %v259 = vpack.c.bf16 %v229, %v228
      %v260 = vpack.c.bf16 %v231, %v230
      %v261 = vpack.c.bf16 %v233, %v232
      %v262 = vpack.c.bf16 %v235, %v234
      %v263 = vpack.c.bf16 %v237, %v236
      %v264 = vpack.c.bf16 %v239, %v238
      %v265 = vpack.c.bf16 %v241, %v240
      %v266 = vpack.c.bf16 %v243, %v242
      %v267 = vpack.c.bf16 %v245, %v244
      %v268 = vpack.c.bf16 %v247, %v246
      %v269 = vpack.c.bf16 %v249, %v248
      %v270 = vpack.c.bf16 %v251, %v250
      %v271 = vpack.c.bf16 %v253, %v252
      %v272 = vpack.c.bf16 %v255, %v254
      %v273 = vpack.c.bf16 %v257, %v256
      %vm274 = vcmask 19456
      %275 = vst.msk [vmem:[#allocation2] sm:$0xf] %vm274, 0
      %276 = vst.msk [vmem:[#allocation2 + $0x4] sm:$0xf] %vm274, 0
      %vm277 = vcmask 16384
      %278 = vst.msk [vmem:[#allocation2 + $0x8] sm:$0x1] %vm277, 0
      %s279 = scalar_lea.vmem [#allocation2], 204
      %280 = vst.msk [vmem:[%s279] sm:$0xf] %vm274, 0
      %281 = vst.msk [vmem:[%s279 + $0x4] sm:$0xf] %vm274, 0
      %282 = vst.msk [vmem:[%s279 + $0x8] sm:$0x1] %vm277, 0
      %s283 = scalar_lea.vmem [#allocation2], 12
      %vm284 = vcmask 16384
      %vm285 = vsmask.f32 256
      %vm286 = vmand %vm284, %vm285
      %v287 = vld [vmem:[%s283] sm:$0x1]
      %v288 = vsel %vm286, 0, %v287
      %289 = vst [vmem:[%s283] sm:$0x1] %v288
      %v290 = vld [vmem:[%s283 + $0xc] sm:$0x1]
      %v291 = vsel %vm286, 0, %v290
      %292 = vst [vmem:[%s283 + $0xc] sm:$0x1] %v291
      %v293 = vld [vmem:[%s283 + $0x18] sm:$0x1]
      %v294 = vsel %vm286, 0, %v293
      %295 = vst [vmem:[%s283 + $0x18] sm:$0x1] %v294
      %v296 = vld [vmem:[%s283 + $0x24] sm:$0x1]
      %v297 = vsel %vm286, 0, %v296
      %298 = vst [vmem:[%s283 + $0x24] sm:$0x1] %v297
      %v299 = vld [vmem:[%s283 + $0x30] sm:$0x1]
      %v300 = vsel %vm286, 0, %v299
      %301 = vst [vmem:[%s283 + $0x30] sm:$0x1] %v300
      %v302 = vld [vmem:[%s283 + $0x3c] sm:$0x1]
      %v303 = vsel %vm286, 0, %v302
      %304 = vst [vmem:[%s283 + $0x3c] sm:$0x1] %v303
      %v305 = vld [vmem:[%s283 + $0x48] sm:$0x1]
      %v306 = vsel %vm286, 0, %v305
      %307 = vst [vmem:[%s283 + $0x48] sm:$0x1] %v306
      %v308 = vld [vmem:[%s283 + $0x54] sm:$0x1]
      %v309 = vsel %vm286, 0, %v308
      %310 = vst [vmem:[%s283 + $0x54] sm:$0x1] %v309
      %v311 = vld [vmem:[%s283 + $0x60] sm:$0x1]
      %v312 = vsel %vm286, 0, %v311
      %313 = vst [vmem:[%s283 + $0x60] sm:$0x1] %v312
      %v314 = vld [vmem:[%s283 + $0x6c] sm:$0x1]
      %v315 = vsel %vm286, 0, %v314
      %316 = vst [vmem:[%s283 + $0x6c] sm:$0x1] %v315
      %v317 = vld [vmem:[%s283 + $0x78] sm:$0x1]
      %v318 = vsel %vm286, 0, %v317
      %319 = vst [vmem:[%s283 + $0x78] sm:$0x1] %v318
      %v320 = vld [vmem:[%s283 + $0x84] sm:$0x1]
      %v321 = vsel %vm286, 0, %v320
      %322 = vst [vmem:[%s283 + $0x84] sm:$0x1] %v321
      %v323 = vld [vmem:[%s283 + $0x90] sm:$0x1]
      %v324 = vsel %vm286, 0, %v323
      %325 = vst [vmem:[%s283 + $0x90] sm:$0x1] %v324
      %v326 = vld [vmem:[%s283 + $0x9c] sm:$0x1]
      %v327 = vsel %vm286, 0, %v326
      %328 = vst [vmem:[%s283 + $0x9c] sm:$0x1] %v327
      %v329 = vld [vmem:[%s283 + $0xa8] sm:$0x1]
      %v330 = vsel %vm286, 0, %v329
      %331 = vst [vmem:[%s283 + $0xa8] sm:$0x1] %v330
      %v332 = vld [vmem:[%s283 + $0xb4] sm:$0x1]
      %v333 = vsel %vm286, 0, %v332
      %334 = vst [vmem:[%s283 + $0xb4] sm:$0x1] %v333
      %vm335 = vsmask.f32 7938
      %vm336 = vmand %vm284, %vm335
      %v337 = vld [vmem:[%s283 + $0x8] sm:$0x1]
      %v338 = vsel %vm336, 0, %v337
      %339 = vst [vmem:[%s283 + $0x8] sm:$0x1] %v338
      %v340 = vld [vmem:[%s283 + $0x14] sm:$0x1]
      %v341 = vsel %vm336, 0, %v340
      %342 = vst [vmem:[%s283 + $0x14] sm:$0x1] %v341
      %v343 = vld [vmem:[%s283 + $0x20] sm:$0x1]
      %v344 = vsel %vm336, 0, %v343
      %345 = vst [vmem:[%s283 + $0x20] sm:$0x1] %v344
      %v346 = vld [vmem:[%s283 + $0x2c] sm:$0x1]
      %v347 = vsel %vm336, 0, %v346
      %348 = vst [vmem:[%s283 + $0x2c] sm:$0x1] %v347
      %v349 = vld [vmem:[%s283 + $0x38] sm:$0x1]
      %v350 = vsel %vm336, 0, %v349
      %351 = vst [vmem:[%s283 + $0x38] sm:$0x1] %v350
      %v352 = vld [vmem:[%s283 + $0x44] sm:$0x1]
      %v353 = vsel %vm336, 0, %v352
      %354 = vst [vmem:[%s283 + $0x44] sm:$0x1] %v353
      %v355 = vld [vmem:[%s283 + $0x50] sm:$0x1]
      %v356 = vsel %vm336, 0, %v355
      %357 = vst [vmem:[%s283 + $0x50] sm:$0x1] %v356
      %v358 = vld [vmem:[%s283 + $0x5c] sm:$0x1]
      %v359 = vsel %vm336, 0, %v358
      %360 = vst [vmem:[%s283 + $0x5c] sm:$0x1] %v359
      %v361 = vld [vmem:[%s283 + $0x68] sm:$0x1]
      %v362 = vsel %vm336, 0, %v361
      %363 = vst [vmem:[%s283 + $0x68] sm:$0x1] %v362
      %v364 = vld [vmem:[%s283 + $0x74] sm:$0x1]
      %v365 = vsel %vm336, 0, %v364
      %366 = vst [vmem:[%s283 + $0x74] sm:$0x1] %v365
      %v367 = vld [vmem:[%s283 + $0x80] sm:$0x1]
      %v368 = vsel %vm336, 0, %v367
      %369 = vst [vmem:[%s283 + $0x80] sm:$0x1] %v368
      %v370 = vld [vmem:[%s283 + $0x8c] sm:$0x1]
      %v371 = vsel %vm336, 0, %v370
      %372 = vst [vmem:[%s283 + $0x8c] sm:$0x1] %v371
      %v373 = vld [vmem:[%s283 + $0x98] sm:$0x1]
      %v374 = vsel %vm336, 0, %v373
      %375 = vst [vmem:[%s283 + $0x98] sm:$0x1] %v374
      %v376 = vld [vmem:[%s283 + $0xa4] sm:$0x1]
      %v377 = vsel %vm336, 0, %v376
      %378 = vst [vmem:[%s283 + $0xa4] sm:$0x1] %v377
      %v379 = vld [vmem:[%s283 + $0xb0] sm:$0x1]
      %v380 = vsel %vm336, 0, %v379
      %381 = vst [vmem:[%s283 + $0xb0] sm:$0x1] %v380
      %v382 = vld [vmem:[%s283 + $0xbc] sm:$0x1]
      %v383 = vsel %vm336, 0, %v382
      %384 = vst [vmem:[%s283 + $0xbc] sm:$0x1] %v383
      %v401 = vunpack.c.l.b16 %v258
      %v402 = vunpack.c.h.b16 %v258
      %v403 = vunpack.c.l.b16 %v259
      %v404 = vunpack.c.h.b16 %v259
      %v405 = vunpack.c.l.b16 %v260
      %v406 = vunpack.c.h.b16 %v260
      %v407 = vunpack.c.l.b16 %v261
      %v408 = vunpack.c.h.b16 %v261
      %v409 = vunpack.c.l.b16 %v262
      %v410 = vunpack.c.h.b16 %v262
      %v411 = vunpack.c.l.b16 %v263
      %v412 = vunpack.c.h.b16 %v263
      %v413 = vunpack.c.l.b16 %v264
      %v414 = vunpack.c.h.b16 %v264
      %v415 = vunpack.c.l.b16 %v265
      %v416 = vunpack.c.h.b16 %v265
      %v417 = vunpack.c.l.b16 %v266
      %v418 = vunpack.c.h.b16 %v266
      %v419 = vunpack.c.l.b16 %v267
      %v420 = vunpack.c.h.b16 %v267
      %v421 = vunpack.c.l.b16 %v268
      %v422 = vunpack.c.h.b16 %v268
      %v423 = vunpack.c.l.b16 %v269
      %v424 = vunpack.c.h.b16 %v269
      %v425 = vunpack.c.l.b16 %v270
      %v426 = vunpack.c.h.b16 %v270
      %v427 = vunpack.c.l.b16 %v271
      %v428 = vunpack.c.h.b16 %v271
      %v429 = vunpack.c.l.b16 %v272
      %v430 = vunpack.c.h.b16 %v272
      %v431 = vunpack.c.l.b16 %v273
      %v432 = vunpack.c.h.b16 %v273
      %v433 = vpack.c.b16 %v401, %v401
      %v434 = vpack.c.b16 %v402, %v402
      %v435 = vpack.c.b16 %v403, %v403
      %v436 = vpack.c.b16 %v404, %v404
      %v437 = vpack.c.b16 %v405, %v405
      %v438 = vpack.c.b16 %v406, %v406
      %v439 = vpack.c.b16 %v407, %v407
      %v440 = vpack.c.b16 %v408, %v408
      %v441 = vpack.c.b16 %v409, %v409
      %v442 = vpack.c.b16 %v410, %v410
      %v443 = vpack.c.b16 %v411, %v411
      %v444 = vpack.c.b16 %v412, %v412
      %v445 = vpack.c.b16 %v413, %v413
      %v446 = vpack.c.b16 %v414, %v414
      %v447 = vpack.c.b16 %v415, %v415
      %v448 = vpack.c.b16 %v416, %v416
      %v449 = vpack.c.b16 %v417, %v417
      %v450 = vpack.c.b16 %v418, %v418
      %v451 = vpack.c.b16 %v419, %v419
      %v452 = vpack.c.b16 %v420, %v420
      %v453 = vpack.c.b16 %v421, %v421
      %v454 = vpack.c.b16 %v422, %v422
      %v455 = vpack.c.b16 %v423, %v423
      %v456 = vpack.c.b16 %v424, %v424
      %v457 = vpack.c.b16 %v425, %v425
      %v458 = vpack.c.b16 %v426, %v426
      %v459 = vpack.c.b16 %v427, %v427
      %v460 = vpack.c.b16 %v428, %v428
      %v461 = vpack.c.b16 %v429, %v429
      %v462 = vpack.c.b16 %v430, %v430
      %v463 = vpack.c.b16 %v431, %v431
      %v464 = vpack.c.b16 %v432, %v432
      %vm465 = vsmask.f32 4368
      %vm466 = vmor %vm285, %vm465
      %v468 = vshrl.u32 %v433, 16
      %v470 = vrot.slane %v468, 7
      %v471 = vshll.u32 %v433, 16
      %v473 = vor.u32 %v470, %v471
      %v474 = vrot.slane %v470, 4
      %v476 = vshrl.u32 %v434, 16
      %v478 = vrot.slane %v476, 7
      %v479 = vshll.u32 %v434, 16
      %v481 = vor.u32 %v478, %v479
      %v482 = vsel %vm466, %v474, %v481
      %v483 = vrot.slane %v478, 4
      %v485 = vshrl.u32 %v435, 16
      %v487 = vrot.slane %v485, 7
      %v488 = vshll.u32 %v435, 16
      %v490 = vor.u32 %v487, %v488
      %v491 = vrot.slane %v487, 4
      %v493 = vshrl.u32 %v436, 16
      %v495 = vrot.slane %v493, 7
      %v496 = vshll.u32 %v436, 16
      %v498 = vor.u32 %v495, %v496
      %v499 = vsel %vm466, %v491, %v498
      %v500 = vrot.slane %v495, 4
      %v502 = vshrl.u32 %v437, 16
      %v504 = vrot.slane %v502, 7
      %v505 = vshll.u32 %v437, 16
      %v507 = vor.u32 %v504, %v505
      %v508 = vrot.slane %v504, 4
      %v510 = vshrl.u32 %v438, 16
      %v512 = vrot.slane %v510, 7
      %v513 = vshll.u32 %v438, 16
      %v515 = vor.u32 %v512, %v513
      %v516 = vsel %vm466, %v508, %v515
      %v517 = vrot.slane %v512, 4
      %v519 = vshrl.u32 %v439, 16
      %v521 = vrot.slane %v519, 7
      %v522 = vshll.u32 %v439, 16
      %v524 = vor.u32 %v521, %v522
      %v525 = vrot.slane %v521, 4
      %v527 = vshrl.u32 %v440, 16
      %v529 = vrot.slane %v527, 7
      %v530 = vshll.u32 %v440, 16
      %v532 = vor.u32 %v529, %v530
      %v533 = vsel %vm466, %v525, %v532
      %v534 = vrot.slane %v529, 4
      %v536 = vshrl.u32 %v441, 16
      %v538 = vrot.slane %v536, 7
      %v539 = vshll.u32 %v441, 16
      %v541 = vor.u32 %v538, %v539
      %v542 = vrot.slane %v538, 4
      %v544 = vshrl.u32 %v442, 16
      %v546 = vrot.slane %v544, 7
      %v547 = vshll.u32 %v442, 16
      %v549 = vor.u32 %v546, %v547
      %v550 = vsel %vm466, %v542, %v549
      %v551 = vrot.slane %v546, 4
      %v553 = vshrl.u32 %v443, 16
      %v555 = vrot.slane %v553, 7
      %v556 = vshll.u32 %v443, 16
      %v558 = vor.u32 %v555, %v556
      %v559 = vrot.slane %v555, 4
      %v561 = vshrl.u32 %v444, 16
      %v563 = vrot.slane %v561, 7
      %v564 = vshll.u32 %v444, 16
      %v566 = vor.u32 %v563, %v564
      %v567 = vsel %vm466, %v559, %v566
      %v568 = vrot.slane %v563, 4
      %v570 = vshrl.u32 %v445, 16
      %v572 = vrot.slane %v570, 7
      %v573 = vshll.u32 %v445, 16
      %v575 = vor.u32 %v572, %v573
      %v576 = vrot.slane %v572, 4
      %v578 = vshrl.u32 %v446, 16
      %v580 = vrot.slane %v578, 7
      %v581 = vshll.u32 %v446, 16
      %v583 = vor.u32 %v580, %v581
      %v584 = vsel %vm466, %v576, %v583
      %v585 = vrot.slane %v580, 4
      %v587 = vshrl.u32 %v447, 16
      %v589 = vrot.slane %v587, 7
      %v590 = vshll.u32 %v447, 16
      %v592 = vor.u32 %v589, %v590
      %v593 = vrot.slane %v589, 4
      %v595 = vshrl.u32 %v448, 16
      %v597 = vrot.slane %v595, 7
      %v598 = vshll.u32 %v448, 16
      %v600 = vor.u32 %v597, %v598
      %v601 = vsel %vm466, %v593, %v600
      %v602 = vrot.slane %v597, 4
      %v604 = vshrl.u32 %v449, 16
      %v606 = vrot.slane %v604, 7
      %v607 = vshll.u32 %v449, 16
      %v609 = vor.u32 %v606, %v607
      %v610 = vrot.slane %v606, 4
      %v612 = vshrl.u32 %v450, 16
      %v614 = vrot.slane %v612, 7
      %v615 = vshll.u32 %v450, 16
      %v617 = vor.u32 %v614, %v615
      %v618 = vsel %vm466, %v610, %v617
      %v619 = vrot.slane %v614, 4
      %v621 = vshrl.u32 %v451, 16
      %v623 = vrot.slane %v621, 7
      %v624 = vshll.u32 %v451, 16
      %v626 = vor.u32 %v623, %v624
      %v627 = vrot.slane %v623, 4
      %v629 = vshrl.u32 %v452, 16
      %v631 = vrot.slane %v629, 7
      %v632 = vshll.u32 %v452, 16
      %v634 = vor.u32 %v631, %v632
      %v635 = vsel %vm466, %v627, %v634
      %v636 = vrot.slane %v631, 4
      %v638 = vshrl.u32 %v453, 16
      %v640 = vrot.slane %v638, 7
      %v641 = vshll.u32 %v453, 16
      %v643 = vor.u32 %v640, %v641
      %v644 = vrot.slane %v640, 4
      %v646 = vshrl.u32 %v454, 16
      %v648 = vrot.slane %v646, 7
      %v649 = vshll.u32 %v454, 16
      %v651 = vor.u32 %v648, %v649
      %v652 = vsel %vm466, %v644, %v651
      %v653 = vrot.slane %v648, 4
      %v655 = vshrl.u32 %v455, 16
      %v657 = vrot.slane %v655, 7
      %v658 = vshll.u32 %v455, 16
      %v660 = vor.u32 %v657, %v658
      %v661 = vrot.slane %v657, 4
      %v663 = vshrl.u32 %v456, 16
      %v665 = vrot.slane %v663, 7
      %v666 = vshll.u32 %v456, 16
      %v668 = vor.u32 %v665, %v666
      %v669 = vsel %vm466, %v661, %v668
      %v670 = vrot.slane %v665, 4
      %v672 = vshrl.u32 %v457, 16
      %v674 = vrot.slane %v672, 7
      %v675 = vshll.u32 %v457, 16
      %v677 = vor.u32 %v674, %v675
      %v678 = vrot.slane %v674, 4
      %v680 = vshrl.u32 %v458, 16
      %v682 = vrot.slane %v680, 7
      %v683 = vshll.u32 %v458, 16
      %v685 = vor.u32 %v682, %v683
      %v686 = vsel %vm466, %v678, %v685
      %v687 = vrot.slane %v682, 4
      %v689 = vshrl.u32 %v459, 16
      %v691 = vrot.slane %v689, 7
      %v692 = vshll.u32 %v459, 16
      %v694 = vor.u32 %v691, %v692
      %v695 = vrot.slane %v691, 4
      %v697 = vshrl.u32 %v460, 16
      %v699 = vrot.slane %v697, 7
      %v700 = vshll.u32 %v460, 16
      %v702 = vor.u32 %v699, %v700
      %v703 = vsel %vm466, %v695, %v702
      %v704 = vrot.slane %v699, 4
      %v706 = vshrl.u32 %v461, 16
      %v708 = vrot.slane %v706, 7
      %v709 = vshll.u32 %v461, 16
      %v711 = vor.u32 %v708, %v709
      %v712 = vrot.slane %v708, 4
      %v714 = vshrl.u32 %v462, 16
      %v716 = vrot.slane %v714, 7
      %v717 = vshll.u32 %v462, 16
      %v719 = vor.u32 %v716, %v717
      %v720 = vsel %vm466, %v712, %v719
      %v721 = vrot.slane %v716, 4
      %v723 = vshrl.u32 %v463, 16
      %v725 = vrot.slane %v723, 7
      %v726 = vshll.u32 %v463, 16
      %v728 = vor.u32 %v725, %v726
      %v729 = vrot.slane %v725, 4
      %v731 = vshrl.u32 %v464, 16
      %v733 = vrot.slane %v731, 7
      %v734 = vshll.u32 %v464, 16
      %v736 = vor.u32 %v733, %v734
      %v737 = vsel %vm466, %v729, %v736
      %v738 = vrot.slane %v733, 4
      %vm787 = vcmask 19456
      %vm788 = vmand %vm787, %vm335
      %v789 = vld [vmem:[%s283] sm:$0xf]
      %v790 = vsel %vm788, %v473, %v789
      %791 = vst [vmem:[%s283] sm:$0xf] %v790
      %792 = vst.msk [vmem:[%s283 + $0x4] sm:$0xf] %vm274, %v482
      %v793 = vld [vmem:[%s283 + $0x8] sm:$0x1]
      %v794 = vsel %vm286, %v483, %v793
      %795 = vst [vmem:[%s283 + $0x8] sm:$0x1] %v794
      %v796 = vld [vmem:[%s283 + $0xc] sm:$0xf]
      %v797 = vsel %vm788, %v490, %v796
      %798 = vst [vmem:[%s283 + $0xc] sm:$0xf] %v797
      %799 = vst.msk [vmem:[%s283 + $0x10] sm:$0xf] %vm274, %v499
      %v800 = vld [vmem:[%s283 + $0x14] sm:$0x1]
      %v801 = vsel %vm286, %v500, %v800
      %802 = vst [vmem:[%s283 + $0x14] sm:$0x1] %v801
      %v803 = vld [vmem:[%s283 + $0x18] sm:$0xf]
      %v804 = vsel %vm788, %v507, %v803
      %805 = vst [vmem:[%s283 + $0x18] sm:$0xf] %v804
      %806 = vst.msk [vmem:[%s283 + $0x1c] sm:$0xf] %vm274, %v516
      %v807 = vld [vmem:[%s283 + $0x20] sm:$0x1]
      %v808 = vsel %vm286, %v517, %v807
      %809 = vst [vmem:[%s283 + $0x20] sm:$0x1] %v808
      %v810 = vld [vmem:[%s283 + $0x24] sm:$0xf]
      %v811 = vsel %vm788, %v524, %v810
      %812 = vst [vmem:[%s283 + $0x24] sm:$0xf] %v811
      %813 = vst.msk [vmem:[%s283 + $0x28] sm:$0xf] %vm274, %v533
      %v814 = vld [vmem:[%s283 + $0x2c] sm:$0x1]
      %v815 = vsel %vm286, %v534, %v814
      %816 = vst [vmem:[%s283 + $0x2c] sm:$0x1] %v815
      %v817 = vld [vmem:[%s283 + $0x30] sm:$0xf]
      %v818 = vsel %vm788, %v541, %v817
      %819 = vst [vmem:[%s283 + $0x30] sm:$0xf] %v818
      %820 = vst.msk [vmem:[%s283 + $0x34] sm:$0xf] %vm274, %v550
      %v821 = vld [vmem:[%s283 + $0x38] sm:$0x1]
      %v822 = vsel %vm286, %v551, %v821
      %823 = vst [vmem:[%s283 + $0x38] sm:$0x1] %v822
      %v824 = vld [vmem:[%s283 + $0x3c] sm:$0xf]
      %v825 = vsel %vm788, %v558, %v824
      %826 = vst [vmem:[%s283 + $0x3c] sm:$0xf] %v825
      %827 = vst.msk [vmem:[%s283 + $0x40] sm:$0xf] %vm274, %v567
      %v828 = vld [vmem:[%s283 + $0x44] sm:$0x1]
      %v829 = vsel %vm286, %v568, %v828
      %830 = vst [vmem:[%s283 + $0x44] sm:$0x1] %v829
      %v831 = vld [vmem:[%s283 + $0x48] sm:$0xf]
      %v832 = vsel %vm788, %v575, %v831
      %833 = vst [vmem:[%s283 + $0x48] sm:$0xf] %v832
      %834 = vst.msk [vmem:[%s283 + $0x4c] sm:$0xf] %vm274, %v584
      %v835 = vld [vmem:[%s283 + $0x50] sm:$0x1]
      %v836 = vsel %vm286, %v585, %v835
      %837 = vst [vmem:[%s283 + $0x50] sm:$0x1] %v836
      %v838 = vld [vmem:[%s283 + $0x54] sm:$0xf]
      %v839 = vsel %vm788, %v592, %v838
      %840 = vst [vmem:[%s283 + $0x54] sm:$0xf] %v839
      %841 = vst.msk [vmem:[%s283 + $0x58] sm:$0xf] %vm274, %v601
      %v842 = vld [vmem:[%s283 + $0x5c] sm:$0x1]
      %v843 = vsel %vm286, %v602, %v842
      %844 = vst [vmem:[%s283 + $0x5c] sm:$0x1] %v843
      %v845 = vld [vmem:[%s283 + $0x60] sm:$0xf]
      %v846 = vsel %vm788, %v609, %v845
      %847 = vst [vmem:[%s283 + $0x60] sm:$0xf] %v846
      %848 = vst.msk [vmem:[%s283 + $0x64] sm:$0xf] %vm274, %v618
      %v849 = vld [vmem:[%s283 + $0x68] sm:$0x1]
      %v850 = vsel %vm286, %v619, %v849
      %851 = vst [vmem:[%s283 + $0x68] sm:$0x1] %v850
      %v852 = vld [vmem:[%s283 + $0x6c] sm:$0xf]
      %v853 = vsel %vm788, %v626, %v852
      %854 = vst [vmem:[%s283 + $0x6c] sm:$0xf] %v853
      %855 = vst.msk [vmem:[%s283 + $0x70] sm:$0xf] %vm274, %v635
      %v856 = vld [vmem:[%s283 + $0x74] sm:$0x1]
      %v857 = vsel %vm286, %v636, %v856
      %858 = vst [vmem:[%s283 + $0x74] sm:$0x1] %v857
      %v859 = vld [vmem:[%s283 + $0x78] sm:$0xf]
      %v860 = vsel %vm788, %v643, %v859
      %861 = vst [vmem:[%s283 + $0x78] sm:$0xf] %v860
      %862 = vst.msk [vmem:[%s283 + $0x7c] sm:$0xf] %vm274, %v652
      %v863 = vld [vmem:[%s283 + $0x80] sm:$0x1]
      %v864 = vsel %vm286, %v653, %v863
      %865 = vst [vmem:[%s283 + $0x80] sm:$0x1] %v864
      %v866 = vld [vmem:[%s283 + $0x84] sm:$0xf]
      %v867 = vsel %vm788, %v660, %v866
      %868 = vst [vmem:[%s283 + $0x84] sm:$0xf] %v867
      %869 = vst.msk [vmem:[%s283 + $0x88] sm:$0xf] %vm274, %v669
      %v870 = vld [vmem:[%s283 + $0x8c] sm:$0x1]
      %v871 = vsel %vm286, %v670, %v870
      %872 = vst [vmem:[%s283 + $0x8c] sm:$0x1] %v871
      %v873 = vld [vmem:[%s283 + $0x90] sm:$0xf]
      %v874 = vsel %vm788, %v677, %v873
      %875 = vst [vmem:[%s283 + $0x90] sm:$0xf] %v874
      %876 = vst.msk [vmem:[%s283 + $0x94] sm:$0xf] %vm274, %v686
      %v877 = vld [vmem:[%s283 + $0x98] sm:$0x1]
      %v878 = vsel %vm286, %v687, %v877
      %879 = vst [vmem:[%s283 + $0x98] sm:$0x1] %v878
      %v880 = vld [vmem:[%s283 + $0x9c] sm:$0xf]
      %v881 = vsel %vm788, %v694, %v880
      %882 = vst [vmem:[%s283 + $0x9c] sm:$0xf] %v881
      %883 = vst.msk [vmem:[%s283 + $0xa0] sm:$0xf] %vm274, %v703
      %v884 = vld [vmem:[%s283 + $0xa4] sm:$0x1]
      %v885 = vsel %vm286, %v704, %v884
      %886 = vst [vmem:[%s283 + $0xa4] sm:$0x1] %v885
      %v887 = vld [vmem:[%s283 + $0xa8] sm:$0xf]
      %v888 = vsel %vm788, %v711, %v887
      %889 = vst [vmem:[%s283 + $0xa8] sm:$0xf] %v888
      %890 = vst.msk [vmem:[%s283 + $0xac] sm:$0xf] %vm274, %v720
      %v891 = vld [vmem:[%s283 + $0xb0] sm:$0x1]
      %v892 = vsel %vm286, %v721, %v891
      %893 = vst [vmem:[%s283 + $0xb0] sm:$0x1] %v892
      %v894 = vld [vmem:[%s283 + $0xb4] sm:$0xf]
      %v895 = vsel %vm788, %v728, %v894
      %896 = vst [vmem:[%s283 + $0xb4] sm:$0xf] %v895
      %897 = vst.msk [vmem:[%s283 + $0xb8] sm:$0xf] %vm274, %v737
      %v898 = vld [vmem:[%s283 + $0xbc] sm:$0x1]
      %v899 = vsel %vm286, %v738, %v898
      %900 = vst [vmem:[%s283 + $0xbc] sm:$0x1] %v899
      %v901 = vld [vmem:[#allocation2] sm:$0xf]
      %v902 = vld [vmem:[#allocation2 + $0x4] sm:$0xf]
      %v903 = vld [vmem:[#allocation2 + $0xc] sm:$0xf]
      %v904 = vld [vmem:[#allocation2 + $0x10] sm:$0xf]
      %v905 = vld [vmem:[#allocation2 + $0x18] sm:$0xf]
      %v906 = vld [vmem:[#allocation2 + $0x1c] sm:$0xf]
      %v907 = vld [vmem:[#allocation2 + $0x24] sm:$0xf]
      %v908 = vld [vmem:[#allocation2 + $0x28] sm:$0xf]
      %v909 = vld [vmem:[#allocation2 + $0x30] sm:$0xf]
      %v910 = vld [vmem:[#allocation2 + $0x34] sm:$0xf]
      %v911 = vld [vmem:[#allocation2 + $0x3c] sm:$0xf]
      %v912 = vld [vmem:[#allocation2 + $0x40] sm:$0xf]
      %v913 = vld [vmem:[#allocation2 + $0x48] sm:$0xf]
      %v914 = vld [vmem:[#allocation2 + $0x4c] sm:$0xf]
      %v915 = vld [vmem:[#allocation2 + $0x54] sm:$0xf]
      %v916 = vld [vmem:[#allocation2 + $0x58] sm:$0xf]
      %v917 = vld [vmem:[#allocation2 + $0x60] sm:$0xf]
      %v918 = vld [vmem:[#allocation2 + $0x64] sm:$0xf]
      %v919 = vld [vmem:[#allocation2 + $0x6c] sm:$0xf]
      %v920 = vld [vmem:[#allocation2 + $0x70] sm:$0xf]
      %v921 = vld [vmem:[#allocation2 + $0x78] sm:$0xf]
      %v922 = vld [vmem:[#allocation2 + $0x7c] sm:$0xf]
      %v923 = vld [vmem:[#allocation2 + $0x84] sm:$0xf]
      %v924 = vld [vmem:[#allocation2 + $0x88] sm:$0xf]
      %v925 = vld [vmem:[#allocation2 + $0x90] sm:$0xf]
      %v926 = vld [vmem:[#allocation2 + $0x94] sm:$0xf]
      %v927 = vld [vmem:[#allocation2 + $0x9c] sm:$0xf]
      %v928 = vld [vmem:[#allocation2 + $0xa0] sm:$0xf]
      %v929 = vld [vmem:[#allocation2 + $0xa8] sm:$0xf]
      %v930 = vld [vmem:[#allocation2 + $0xac] sm:$0xf]
      %v931 = vld [vmem:[#allocation2 + $0xb4] sm:$0xf]
      %v932 = vld [vmem:[#allocation2 + $0xb8] sm:$0xf]
      %v933 = vld [vmem:[#allocation2 + $0x8] sm:$0x1]
      %v934 = vld [vmem:[#allocation2 + $0x14] sm:$0x1]
      %v935 = vld [vmem:[#allocation2 + $0x20] sm:$0x1]
      %v936 = vld [vmem:[#allocation2 + $0x2c] sm:$0x1]
      %v937 = vld [vmem:[#allocation2 + $0x38] sm:$0x1]
      %v938 = vld [vmem:[#allocation2 + $0x44] sm:$0x1]
      %v939 = vld [vmem:[#allocation2 + $0x50] sm:$0x1]
      %v940 = vld [vmem:[#allocation2 + $0x5c] sm:$0x1]
      %v941 = vld [vmem:[#allocation2 + $0x68] sm:$0x1]
      %v942 = vld [vmem:[#allocation2 + $0x74] sm:$0x1]
      %v943 = vld [vmem:[#allocation2 + $0x80] sm:$0x1]
      %v944 = vld [vmem:[#allocation2 + $0x8c] sm:$0x1]
      %v945 = vld [vmem:[#allocation2 + $0x98] sm:$0x1]
      %v946 = vld [vmem:[#allocation2 + $0xa4] sm:$0x1]
      %v947 = vld [vmem:[#allocation2 + $0xb0] sm:$0x1]
      %v948 = vld [vmem:[#allocation2 + $0xbc] sm:$0x1]
      %v949 = vld [vmem:[#allocation2] sm:$0xe]
      %v950 = vld [vmem:[#allocation2 + $0xc] sm:$0xe]
      %v951 = vld [vmem:[#allocation2 + $0x18] sm:$0xe]
      %v952 = vld [vmem:[#allocation2 + $0x24] sm:$0xe]
      %v953 = vld [vmem:[#allocation2 + $0x30] sm:$0xe]
      %v954 = vld [vmem:[#allocation2 + $0x3c] sm:$0xe]
      %v955 = vld [vmem:[#allocation2 + $0x48] sm:$0xe]
      %v956 = vld [vmem:[#allocation2 + $0x54] sm:$0xe]
      %v957 = vld [vmem:[#allocation2 + $0x60] sm:$0xe]
      %v958 = vld [vmem:[#allocation2 + $0x6c] sm:$0xe]
      %v959 = vld [vmem:[#allocation2 + $0x78] sm:$0xe]
      %v960 = vld [vmem:[#allocation2 + $0x84] sm:$0xe]
      %v961 = vld [vmem:[#allocation2 + $0x90] sm:$0xe]
      %v962 = vld [vmem:[#allocation2 + $0x9c] sm:$0xe]
      %v963 = vld [vmem:[#allocation2 + $0xa8] sm:$0xe]
      %v964 = vld [vmem:[#allocation2 + $0xb4] sm:$0xe]
      %v965 = vld [vmem:[%s283] sm:$0xf]
      %v966 = vld [vmem:[%s283 + $0x4] sm:$0xf]
      %v967 = vld [vmem:[%s283 + $0xc] sm:$0xf]
      %v968 = vld [vmem:[%s283 + $0x10] sm:$0xf]
      %v969 = vld [vmem:[%s283 + $0x18] sm:$0xf]
      %v970 = vld [vmem:[%s283 + $0x1c] sm:$0xf]
      %v971 = vld [vmem:[%s283 + $0x24] sm:$0xf]
      %v972 = vld [vmem:[%s283 + $0x28] sm:$0xf]
      %v973 = vld [vmem:[%s283 + $0x30] sm:$0xf]
      %v974 = vld [vmem:[%s283 + $0x34] sm:$0xf]
      %v975 = vld [vmem:[%s283 + $0x3c] sm:$0xf]
      %v976 = vld [vmem:[%s283 + $0x40] sm:$0xf]
      %v977 = vld [vmem:[%s283 + $0x48] sm:$0xf]
      %v978 = vld [vmem:[%s283 + $0x4c] sm:$0xf]
      %v979 = vld [vmem:[%s283 + $0x54] sm:$0xf]
      %v980 = vld [vmem:[%s283 + $0x58] sm:$0xf]
      %v981 = vld [vmem:[%s283 + $0x60] sm:$0xf]
      %v982 = vld [vmem:[%s283 + $0x64] sm:$0xf]
      %v983 = vld [vmem:[%s283 + $0x6c] sm:$0xf]
      %v984 = vld [vmem:[%s283 + $0x70] sm:$0xf]
      %v985 = vld [vmem:[%s283 + $0x78] sm:$0xf]
      %v986 = vld [vmem:[%s283 + $0x7c] sm:$0xf]
      %v987 = vld [vmem:[%s283 + $0x84] sm:$0xf]
      %v988 = vld [vmem:[%s283 + $0x88] sm:$0xf]
      %v989 = vld [vmem:[%s283 + $0x90] sm:$0xf]
      %v990 = vld [vmem:[%s283 + $0x94] sm:$0xf]
      %v991 = vld [vmem:[%s283 + $0x9c] sm:$0xf]
      %v992 = vld [vmem:[%s283 + $0xa0] sm:$0xf]
      %v993 = vld [vmem:[%s283 + $0xa8] sm:$0xf]
      %v994 = vld [vmem:[%s283 + $0xac] sm:$0xf]
      %v995 = vld [vmem:[%s283 + $0xb4] sm:$0xf]
      %v996 = vld [vmem:[%s283 + $0xb8] sm:$0xf]
      %v997 = vld [vmem:[%s283 + $0x8] sm:$0x1]
      %v998 = vld [vmem:[%s283 + $0x14] sm:$0x1]
      %v999 = vld [vmem:[%s283 + $0x20] sm:$0x1]
      %v1000 = vld [vmem:[%s283 + $0x2c] sm:$0x1]
      %v1001 = vld [vmem:[%s283 + $0x38] sm:$0x1]
      %v1002 = vld [vmem:[%s283 + $0x44] sm:$0x1]
      %v1003 = vld [vmem:[%s283 + $0x50] sm:$0x1]
      %v1004 = vld [vmem:[%s283 + $0x5c] sm:$0x1]
      %v1005 = vld [vmem:[%s283 + $0x68] sm:$0x1]
      %v1006 = vld [vmem:[%s283 + $0x74] sm:$0x1]
      %v1007 = vld [vmem:[%s283 + $0x80] sm:$0x1]
      %v1008 = vld [vmem:[%s283 + $0x8c] sm:$0x1]
      %v1009 = vld [vmem:[%s283 + $0x98] sm:$0x1]
      %v1010 = vld [vmem:[%s283 + $0xa4] sm:$0x1]
      %v1011 = vld [vmem:[%s283 + $0xb0] sm:$0x1]
      %v1012 = vld [vmem:[%s283 + $0xbc] sm:$0x1]
      %v1013 = vld [vmem:[%s283] sm:$0xe]
      %v1014 = vld [vmem:[%s283 + $0xc] sm:$0xe]
      %v1015 = vld [vmem:[%s283 + $0x18] sm:$0xe]
      %v1016 = vld [vmem:[%s283 + $0x24] sm:$0xe]
      %v1017 = vld [vmem:[%s283 + $0x30] sm:$0xe]
      %v1018 = vld [vmem:[%s283 + $0x3c] sm:$0xe]
      %v1019 = vld [vmem:[%s283 + $0x48] sm:$0xe]
      %v1020 = vld [vmem:[%s283 + $0x54] sm:$0xe]
      %v1021 = vld [vmem:[%s283 + $0x60] sm:$0xe]
      %v1022 = vld [vmem:[%s283 + $0x6c] sm:$0xe]
      %v1023 = vld [vmem:[%s283 + $0x78] sm:$0xe]
      %v1024 = vld [vmem:[%s283 + $0x84] sm:$0xe]
      %v1025 = vld [vmem:[%s283 + $0x90] sm:$0xe]
      %v1026 = vld [vmem:[%s283 + $0x9c] sm:$0xe]
      %v1027 = vld [vmem:[%s283 + $0xa8] sm:$0xe]
      %v1028 = vld [vmem:[%s283 + $0xb4] sm:$0xe]
      %s1029 = scalar_lea.vmem [#allocation2], 24
      %v1030 = vld [vmem:[%s1029] sm:$0xf]
      %v1031 = vld [vmem:[%s1029 + $0x4] sm:$0xf]
      %v1032 = vld [vmem:[%s1029 + $0xc] sm:$0xf]
      %v1033 = vld [vmem:[%s1029 + $0x10] sm:$0xf]
      %v1034 = vld [vmem:[%s1029 + $0x18] sm:$0xf]
      %v1035 = vld [vmem:[%s1029 + $0x1c] sm:$0xf]
      %v1036 = vld [vmem:[%s1029 + $0x24] sm:$0xf]
      %v1037 = vld [vmem:[%s1029 + $0x28] sm:$0xf]
      %v1038 = vld [vmem:[%s1029 + $0x30] sm:$0xf]
      %v1039 = vld [vmem:[%s1029 + $0x34] sm:$0xf]
      %v1040 = vld [vmem:[%s1029 + $0x3c] sm:$0xf]
      %v1041 = vld [vmem:[%s1029 + $0x40] sm:$0xf]
      %v1042 = vld [vmem:[%s1029 + $0x48] sm:$0xf]
      %v1043 = vld [vmem:[%s1029 + $0x4c] sm:$0xf]
      %v1044 = vld [vmem:[%s1029 + $0x54] sm:$0xf]
      %v1045 = vld [vmem:[%s1029 + $0x58] sm:$0xf]
      %v1046 = vld [vmem:[%s1029 + $0x60] sm:$0xf]
      %v1047 = vld [vmem:[%s1029 + $0x64] sm:$0xf]
      %v1048 = vld [vmem:[%s1029 + $0x6c] sm:$0xf]
      %v1049 = vld [vmem:[%s1029 + $0x70] sm:$0xf]
      %v1050 = vld [vmem:[%s1029 + $0x78] sm:$0xf]
      %v1051 = vld [vmem:[%s1029 + $0x7c] sm:$0xf]
      %v1052 = vld [vmem:[%s1029 + $0x84] sm:$0xf]
      %v1053 = vld [vmem:[%s1029 + $0x88] sm:$0xf]
      %v1054 = vld [vmem:[%s1029 + $0x90] sm:$0xf]
      %v1055 = vld [vmem:[%s1029 + $0x94] sm:$0xf]
      %v1056 = vld [vmem:[%s1029 + $0x9c] sm:$0xf]
      %v1057 = vld [vmem:[%s1029 + $0xa0] sm:$0xf]
      %v1058 = vld [vmem:[%s1029 + $0xa8] sm:$0xf]
      %v1059 = vld [vmem:[%s1029 + $0xac] sm:$0xf]
      %v1060 = vld [vmem:[%s1029 + $0xb4] sm:$0xf]
      %v1061 = vld [vmem:[%s1029 + $0xb8] sm:$0xf]
      %v1062 = vld [vmem:[%s1029 + $0x8] sm:$0x1]
      %v1063 = vld [vmem:[%s1029 + $0x14] sm:$0x1]
      %v1064 = vld [vmem:[%s1029 + $0x20] sm:$0x1]
      %v1065 = vld [vmem:[%s1029 + $0x2c] sm:$0x1]
      %v1066 = vld [vmem:[%s1029 + $0x38] sm:$0x1]
      %v1067 = vld [vmem:[%s1029 + $0x44] sm:$0x1]
      %v1068 = vld [vmem:[%s1029 + $0x50] sm:$0x1]
      %v1069 = vld [vmem:[%s1029 + $0x5c] sm:$0x1]
      %v1070 = vld [vmem:[%s1029 + $0x68] sm:$0x1]
      %v1071 = vld [vmem:[%s1029 + $0x74] sm:$0x1]
      %v1072 = vld [vmem:[%s1029 + $0x80] sm:$0x1]
      %v1073 = vld [vmem:[%s1029 + $0x8c] sm:$0x1]
      %v1074 = vld [vmem:[%s1029 + $0x98] sm:$0x1]
      %v1075 = vld [vmem:[%s1029 + $0xa4] sm:$0x1]
      %v1076 = vld [vmem:[%s1029 + $0xb0] sm:$0x1]
      %v1077 = vld [vmem:[%s1029 + $0xbc] sm:$0x1]
      %v1078 = vld [vmem:[%s1029] sm:$0xe]
      %v1079 = vld [vmem:[%s1029 + $0xc] sm:$0xe]
      %v1080 = vld [vmem:[%s1029 + $0x18] sm:$0xe]
      %v1081 = vld [vmem:[%s1029 + $0x24] sm:$0xe]
      %v1082 = vld [vmem:[%s1029 + $0x30] sm:$0xe]
      %v1083 = vld [vmem:[%s1029 + $0x3c] sm:$0xe]
      %v1084 = vld [vmem:[%s1029 + $0x48] sm:$0xe]
      %v1085 = vld [vmem:[%s1029 + $0x54] sm:$0xe]
      %v1086 = vld [vmem:[%s1029 + $0x60] sm:$0xe]
      %v1087 = vld [vmem:[%s1029 + $0x6c] sm:$0xe]
      %v1088 = vld [vmem:[%s1029 + $0x78] sm:$0xe]
      %v1089 = vld [vmem:[%s1029 + $0x84] sm:$0xe]
      %v1090 = vld [vmem:[%s1029 + $0x90] sm:$0xe]
      %v1091 = vld [vmem:[%s1029 + $0x9c] sm:$0xe]
      %v1092 = vld [vmem:[%s1029 + $0xa8] sm:$0xe]
      %v1093 = vld [vmem:[%s1029 + $0xb4] sm:$0xe]
      %v1126 = vunpack.c.l.b16 %v901
      %v1127 = vunpack.c.l.b16 %v902
      %v1128 = vunpack.c.l.b16 %v903
      %v1129 = vunpack.c.l.b16 %v904
      %v1130 = vunpack.c.l.b16 %v905
      %v1131 = vunpack.c.l.b16 %v906
      %v1132 = vunpack.c.l.b16 %v907
      %v1133 = vunpack.c.l.b16 %v908
      %v1134 = vunpack.c.l.b16 %v909
      %v1135 = vunpack.c.l.b16 %v910
      %v1136 = vunpack.c.l.b16 %v911
      %v1137 = vunpack.c.l.b16 %v912
      %v1138 = vunpack.c.l.b16 %v913
      %v1139 = vunpack.c.l.b16 %v914
      %v1140 = vunpack.c.l.b16 %v915
      %v1141 = vunpack.c.l.b16 %v916
      %v1142 = vunpack.c.l.b16 %v917
      %v1143 = vunpack.c.l.b16 %v918
      %v1144 = vunpack.c.l.b16 %v919
      %v1145 = vunpack.c.l.b16 %v920
      %v1146 = vunpack.c.l.b16 %v921
      %v1147 = vunpack.c.l.b16 %v922
      %v1148 = vunpack.c.l.b16 %v923
      %v1149 = vunpack.c.l.b16 %v924
      %v1150 = vunpack.c.l.b16 %v925
      %v1151 = vunpack.c.l.b16 %v926
      %v1152 = vunpack.c.l.b16 %v927
      %v1153 = vunpack.c.l.b16 %v928
      %v1154 = vunpack.c.l.b16 %v929
      %v1155 = vunpack.c.l.b16 %v930
      %v1156 = vunpack.c.l.b16 %v931
      %v1157 = vunpack.c.l.b16 %v932
      %v1158 = vpack.c.b16 %v1127, %v1126
      %v1159 = vpack.c.b16 %v1129, %v1128
      %v1160 = vpack.c.b16 %v1131, %v1130
      %v1161 = vpack.c.b16 %v1133, %v1132
      %v1162 = vpack.c.b16 %v1135, %v1134
      %v1163 = vpack.c.b16 %v1137, %v1136
      %v1164 = vpack.c.b16 %v1139, %v1138
      %v1165 = vpack.c.b16 %v1141, %v1140
      %v1166 = vpack.c.b16 %v1143, %v1142
      %v1167 = vpack.c.b16 %v1145, %v1144
      %v1168 = vpack.c.b16 %v1147, %v1146
      %v1169 = vpack.c.b16 %v1149, %v1148
      %v1170 = vpack.c.b16 %v1151, %v1150
      %v1171 = vpack.c.b16 %v1153, %v1152
      %v1172 = vpack.c.b16 %v1155, %v1154
      %v1173 = vpack.c.b16 %v1157, %v1156
      %v1190 = vunpack.c.l.b16 %v933
      %v1191 = vunpack.c.l.b16 %v934
      %v1192 = vunpack.c.l.b16 %v935
      %v1193 = vunpack.c.l.b16 %v936
      %v1194 = vunpack.c.l.b16 %v937
      %v1195 = vunpack.c.l.b16 %v938
      %v1196 = vunpack.c.l.b16 %v939
      %v1197 = vunpack.c.l.b16 %v940
      %v1198 = vunpack.c.l.b16 %v941
      %v1199 = vunpack.c.l.b16 %v942
      %v1200 = vunpack.c.l.b16 %v943
      %v1201 = vunpack.c.l.b16 %v944
      %v1202 = vunpack.c.l.b16 %v945
      %v1203 = vunpack.c.l.b16 %v946
      %v1204 = vunpack.c.l.b16 %v947
      %v1205 = vunpack.c.l.b16 %v948
      %v1206 = vpack.c.b16 %v1190, %v1190
      %v1207 = vpack.c.b16 %v1191, %v1191
      %v1208 = vpack.c.b16 %v1192, %v1192
      %v1209 = vpack.c.b16 %v1193, %v1193
      %v1210 = vpack.c.b16 %v1194, %v1194
      %v1211 = vpack.c.b16 %v1195, %v1195
      %v1212 = vpack.c.b16 %v1196, %v1196
      %v1213 = vpack.c.b16 %v1197, %v1197
      %v1214 = vpack.c.b16 %v1198, %v1198
      %v1215 = vpack.c.b16 %v1199, %v1199
      %v1216 = vpack.c.b16 %v1200, %v1200
      %v1217 = vpack.c.b16 %v1201, %v1201
      %v1218 = vpack.c.b16 %v1202, %v1202
      %v1219 = vpack.c.b16 %v1203, %v1203
      %v1220 = vpack.c.b16 %v1204, %v1204
      %v1221 = vpack.c.b16 %v1205, %v1205
      %vm1222 = vsmask.f32 7424
      %v1224 = vshrl.u32 %v1158, 16
      %v1226 = vshll.u32 %v1158, 16
      %v1228 = vrot.slane %v1226, 1
      %v1229 = vor.u32 %v1224, %v1228
      %v1231 = vshll.u32 %v1206, 16
      %v1233 = vrot.slane %v1231, 1
      %v1234 = vsel %vm1222, %v1229, %v1233
      %v1236 = vshrl.u32 %v1159, 16
      %v1238 = vshll.u32 %v1159, 16
      %v1240 = vrot.slane %v1238, 1
      %v1241 = vor.u32 %v1236, %v1240
      %v1243 = vshll.u32 %v1207, 16
      %v1245 = vrot.slane %v1243, 1
      %v1246 = vsel %vm1222, %v1241, %v1245
      %v1248 = vshrl.u32 %v1160, 16
      %v1250 = vshll.u32 %v1160, 16
      %v1252 = vrot.slane %v1250, 1
      %v1253 = vor.u32 %v1248, %v1252
      %v1255 = vshll.u32 %v1208, 16
      %v1257 = vrot.slane %v1255, 1
      %v1258 = vsel %vm1222, %v1253, %v1257
      %v1260 = vshrl.u32 %v1161, 16
      %v1262 = vshll.u32 %v1161, 16
      %v1264 = vrot.slane %v1262, 1
      %v1265 = vor.u32 %v1260, %v1264
      %v1267 = vshll.u32 %v1209, 16
      %v1269 = vrot.slane %v1267, 1
      %v1270 = vsel %vm1222, %v1265, %v1269
      %v1272 = vshrl.u32 %v1162, 16
      %v1274 = vshll.u32 %v1162, 16
      %v1276 = vrot.slane %v1274, 1
      %v1277 = vor.u32 %v1272, %v1276
      %v1279 = vshll.u32 %v1210, 16
      %v1281 = vrot.slane %v1279, 1
      %v1282 = vsel %vm1222, %v1277, %v1281
      %v1284 = vshrl.u32 %v1163, 16
      %v1286 = vshll.u32 %v1163, 16
      %v1288 = vrot.slane %v1286, 1
      %v1289 = vor.u32 %v1284, %v1288
      %v1291 = vshll.u32 %v1211, 16
      %v1293 = vrot.slane %v1291, 1
      %v1294 = vsel %vm1222, %v1289, %v1293
      %v1296 = vshrl.u32 %v1164, 16
      %v1298 = vshll.u32 %v1164, 16
      %v1300 = vrot.slane %v1298, 1
      %v1301 = vor.u32 %v1296, %v1300
      %v1303 = vshll.u32 %v1212, 16
      %v1305 = vrot.slane %v1303, 1
      %v1306 = vsel %vm1222, %v1301, %v1305
      %v1308 = vshrl.u32 %v1165, 16
      %v1310 = vshll.u32 %v1165, 16
      %v1312 = vrot.slane %v1310, 1
      %v1313 = vor.u32 %v1308, %v1312
      %v1315 = vshll.u32 %v1213, 16
      %v1317 = vrot.slane %v1315, 1
      %v1318 = vsel %vm1222, %v1313, %v1317
      %v1320 = vshrl.u32 %v1166, 16
      %v1322 = vshll.u32 %v1166, 16
      %v1324 = vrot.slane %v1322, 1
      %v1325 = vor.u32 %v1320, %v1324
      %v1327 = vshll.u32 %v1214, 16
      %v1329 = vrot.slane %v1327, 1
      %v1330 = vsel %vm1222, %v1325, %v1329
      %v1332 = vshrl.u32 %v1167, 16
      %v1334 = vshll.u32 %v1167, 16
      %v1336 = vrot.slane %v1334, 1
      %v1337 = vor.u32 %v1332, %v1336
      %v1339 = vshll.u32 %v1215, 16
      %v1341 = vrot.slane %v1339, 1
      %v1342 = vsel %vm1222, %v1337, %v1341
      %v1344 = vshrl.u32 %v1168, 16
      %v1346 = vshll.u32 %v1168, 16
      %v1348 = vrot.slane %v1346, 1
      %v1349 = vor.u32 %v1344, %v1348
      %v1351 = vshll.u32 %v1216, 16
      %v1353 = vrot.slane %v1351, 1
      %v1354 = vsel %vm1222, %v1349, %v1353
      %v1356 = vshrl.u32 %v1169, 16
      %v1358 = vshll.u32 %v1169, 16
      %v1360 = vrot.slane %v1358, 1
      %v1361 = vor.u32 %v1356, %v1360
      %v1363 = vshll.u32 %v1217, 16
      %v1365 = vrot.slane %v1363, 1
      %v1366 = vsel %vm1222, %v1361, %v1365
      %v1368 = vshrl.u32 %v1170, 16
      %v1370 = vshll.u32 %v1170, 16
      %v1372 = vrot.slane %v1370, 1
      %v1373 = vor.u32 %v1368, %v1372
      %v1375 = vshll.u32 %v1218, 16
      %v1377 = vrot.slane %v1375, 1
      %v1378 = vsel %vm1222, %v1373, %v1377
      %v1380 = vshrl.u32 %v1171, 16
      %v1382 = vshll.u32 %v1171, 16
      %v1384 = vrot.slane %v1382, 1
      %v1385 = vor.u32 %v1380, %v1384
      %v1387 = vshll.u32 %v1219, 16
      %v1389 = vrot.slane %v1387, 1
      %v1390 = vsel %vm1222, %v1385, %v1389
      %v1392 = vshrl.u32 %v1172, 16
      %v1394 = vshll.u32 %v1172, 16
      %v1396 = vrot.slane %v1394, 1
      %v1397 = vor.u32 %v1392, %v1396
      %v1399 = vshll.u32 %v1220, 16
      %v1401 = vrot.slane %v1399, 1
      %v1402 = vsel %vm1222, %v1397, %v1401
      %v1404 = vshrl.u32 %v1173, 16
      %v1406 = vshll.u32 %v1173, 16
      %v1408 = vrot.slane %v1406, 1
      %v1409 = vor.u32 %v1404, %v1408
      %v1411 = vshll.u32 %v1221, 16
      %v1413 = vrot.slane %v1411, 1
      %v1414 = vsel %vm1222, %v1409, %v1413
      %1415 = vrot.lane.b32.xlu0 %v1234, 3
      %v1416 = vpop.permute.xlu0 %1415
      %1417 = vrot.lane.b32.xlu0 %v1246, 3
      %v1418 = vpop.permute.xlu0 %1417
      %1419 = vrot.lane.b32.xlu0 %v1258, 3
      %v1420 = vpop.permute.xlu0 %1419
      %1421 = vrot.lane.b32.xlu0 %v1270, 3
      %v1422 = vpop.permute.xlu0 %1421
      %1423 = vrot.lane.b32.xlu0 %v1282, 3
      %v1424 = vpop.permute.xlu0 %1423
      %1425 = vrot.lane.b32.xlu0 %v1294, 3
      %v1426 = vpop.permute.xlu0 %1425
      %1427 = vrot.lane.b32.xlu0 %v1306, 3
      %v1428 = vpop.permute.xlu0 %1427
      %1429 = vrot.lane.b32.xlu0 %v1318, 3
      %v1430 = vpop.permute.xlu0 %1429
      %1431 = vrot.lane.b32.xlu0 %v1330, 3
      %v1432 = vpop.permute.xlu0 %1431
      %1433 = vrot.lane.b32.xlu0 %v1342, 3
      %v1434 = vpop.permute.xlu0 %1433
      %1435 = vrot.lane.b32.xlu0 %v1354, 3
      %v1436 = vpop.permute.xlu0 %1435
      %1437 = vrot.lane.b32.xlu0 %v1366, 3
      %v1438 = vpop.permute.xlu0 %1437
      %1439 = vrot.lane.b32.xlu0 %v1378, 3
      %v1440 = vpop.permute.xlu0 %1439
      %1441 = vrot.lane.b32.xlu0 %v1390, 3
      %v1442 = vpop.permute.xlu0 %1441
      %1443 = vrot.lane.b32.xlu0 %v1402, 3
      %v1444 = vpop.permute.xlu0 %1443
      %1445 = vrot.lane.b32.xlu0 %v1414, 3
      %v1446 = vpop.permute.xlu0 %1445
      %v1463 = vunpack.c.l.b16 %v949
      %v1464 = vunpack.c.l.b16 %v950
      %v1465 = vunpack.c.l.b16 %v951
      %v1466 = vunpack.c.l.b16 %v952
      %v1467 = vunpack.c.l.b16 %v953
      %v1468 = vunpack.c.l.b16 %v954
      %v1469 = vunpack.c.l.b16 %v955
      %v1470 = vunpack.c.l.b16 %v956
      %v1471 = vunpack.c.l.b16 %v957
      %v1472 = vunpack.c.l.b16 %v958
      %v1473 = vunpack.c.l.b16 %v959
      %v1474 = vunpack.c.l.b16 %v960
      %v1475 = vunpack.c.l.b16 %v961
      %v1476 = vunpack.c.l.b16 %v962
      %v1477 = vunpack.c.l.b16 %v963
      %v1478 = vunpack.c.l.b16 %v964
      %v1479 = vpack.c.b16 %v1127, %v1463
      %v1480 = vpack.c.b16 %v1129, %v1464
      %v1481 = vpack.c.b16 %v1131, %v1465
      %v1482 = vpack.c.b16 %v1133, %v1466
      %v1483 = vpack.c.b16 %v1135, %v1467
      %v1484 = vpack.c.b16 %v1137, %v1468
      %v1485 = vpack.c.b16 %v1139, %v1469
      %v1486 = vpack.c.b16 %v1141, %v1470
      %v1487 = vpack.c.b16 %v1143, %v1471
      %v1488 = vpack.c.b16 %v1145, %v1472
      %v1489 = vpack.c.b16 %v1147, %v1473
      %v1490 = vpack.c.b16 %v1149, %v1474
      %v1491 = vpack.c.b16 %v1151, %v1475
      %v1492 = vpack.c.b16 %v1153, %v1476
      %v1493 = vpack.c.b16 %v1155, %v1477
      %v1494 = vpack.c.b16 %v1157, %v1478
      %vm1495 = vcmask 1046528
      %v1496 = vrot.slane %v1479, 1
      %v1497 = vrot.slane %v1206, 1
      %v1498 = vsel %vm1495, %v1496, %v1497
      %v1499 = vrot.slane %v1480, 1
      %v1500 = vrot.slane %v1207, 1
      %v1501 = vsel %vm1495, %v1499, %v1500
      %v1502 = vrot.slane %v1481, 1
      %v1503 = vrot.slane %v1208, 1
      %v1504 = vsel %vm1495, %v1502, %v1503
      %v1505 = vrot.slane %v1482, 1
      %v1506 = vrot.slane %v1209, 1
      %v1507 = vsel %vm1495, %v1505, %v1506
      %v1508 = vrot.slane %v1483, 1
      %v1509 = vrot.slane %v1210, 1
      %v1510 = vsel %vm1495, %v1508, %v1509
      %v1511 = vrot.slane %v1484, 1
      %v1512 = vrot.slane %v1211, 1
      %v1513 = vsel %vm1495, %v1511, %v1512
      %v1514 = vrot.slane %v1485, 1
      %v1515 = vrot.slane %v1212, 1
      %v1516 = vsel %vm1495, %v1514, %v1515
      %v1517 = vrot.slane %v1486, 1
      %v1518 = vrot.slane %v1213, 1
      %v1519 = vsel %vm1495, %v1517, %v1518
      %v1520 = vrot.slane %v1487, 1
      %v1521 = vrot.slane %v1214, 1
      %v1522 = vsel %vm1495, %v1520, %v1521
      %v1523 = vrot.slane %v1488, 1
      %v1524 = vrot.slane %v1215, 1
      %v1525 = vsel %vm1495, %v1523, %v1524
      %v1526 = vrot.slane %v1489, 1
      %v1527 = vrot.slane %v1216, 1
      %v1528 = vsel %vm1495, %v1526, %v1527
      %v1529 = vrot.slane %v1490, 1
      %v1530 = vrot.slane %v1217, 1
      %v1531 = vsel %vm1495, %v1529, %v1530
      %v1532 = vrot.slane %v1491, 1
      %v1533 = vrot.slane %v1218, 1
      %v1534 = vsel %vm1495, %v1532, %v1533
      %v1535 = vrot.slane %v1492, 1
      %v1536 = vrot.slane %v1219, 1
      %v1537 = vsel %vm1495, %v1535, %v1536
      %v1538 = vrot.slane %v1493, 1
      %v1539 = vrot.slane %v1220, 1
      %v1540 = vsel %vm1495, %v1538, %v1539
      %v1541 = vrot.slane %v1494, 1
      %v1542 = vrot.slane %v1221, 1
      %v1543 = vsel %vm1495, %v1541, %v1542
      %1544 = vrot.lane.b32.xlu0 %v1498, 6
      %v1545 = vpop.permute.xlu0 %1544
      %1546 = vrot.lane.b32.xlu0 %v1501, 6
      %v1547 = vpop.permute.xlu0 %1546
      %1548 = vrot.lane.b32.xlu0 %v1504, 6
      %v1549 = vpop.permute.xlu0 %1548
      %1550 = vrot.lane.b32.xlu0 %v1507, 6
      %v1551 = vpop.permute.xlu0 %1550
      %1552 = vrot.lane.b32.xlu0 %v1510, 6
      %v1553 = vpop.permute.xlu0 %1552
      %1554 = vrot.lane.b32.xlu0 %v1513, 6
      %v1555 = vpop.permute.xlu0 %1554
      %1556 = vrot.lane.b32.xlu0 %v1516, 6
      %v1557 = vpop.permute.xlu0 %1556
      %1558 = vrot.lane.b32.xlu0 %v1519, 6
      %v1559 = vpop.permute.xlu0 %1558
      %1560 = vrot.lane.b32.xlu0 %v1522, 6
      %v1561 = vpop.permute.xlu0 %1560
      %1562 = vrot.lane.b32.xlu0 %v1525, 6
      %v1563 = vpop.permute.xlu0 %1562
      %1564 = vrot.lane.b32.xlu0 %v1528, 6
      %v1565 = vpop.permute.xlu0 %1564
      %1566 = vrot.lane.b32.xlu0 %v1531, 6
      %v1567 = vpop.permute.xlu0 %1566
      %1568 = vrot.lane.b32.xlu0 %v1534, 6
      %v1569 = vpop.permute.xlu0 %1568
      %1570 = vrot.lane.b32.xlu0 %v1537, 6
      %v1571 = vpop.permute.xlu0 %1570
      %1572 = vrot.lane.b32.xlu0 %v1540, 6
      %v1573 = vpop.permute.xlu0 %1572
      %1574 = vrot.lane.b32.xlu0 %v1543, 6
      %v1575 = vpop.permute.xlu0 %1574
      %v1608 = vunpack.c.l.b16 %v965
      %v1609 = vunpack.c.l.b16 %v966
      %v1610 = vunpack.c.l.b16 %v967
      %v1611 = vunpack.c.l.b16 %v968
      %v1612 = vunpack.c.l.b16 %v969
      %v1613 = vunpack.c.l.b16 %v970
      %v1614 = vunpack.c.l.b16 %v971
      %v1615 = vunpack.c.l.b16 %v972
      %v1616 = vunpack.c.l.b16 %v973
      %v1617 = vunpack.c.l.b16 %v974
      %v1618 = vunpack.c.l.b16 %v975
      %v1619 = vunpack.c.l.b16 %v976
      %v1620 = vunpack.c.l.b16 %v977
      %v1621 = vunpack.c.l.b16 %v978
      %v1622 = vunpack.c.l.b16 %v979
      %v1623 = vunpack.c.l.b16 %v980
      %v1624 = vunpack.c.l.b16 %v981
      %v1625 = vunpack.c.l.b16 %v982
      %v1626 = vunpack.c.l.b16 %v983
      %v1627 = vunpack.c.l.b16 %v984
      %v1628 = vunpack.c.l.b16 %v985
      %v1629 = vunpack.c.l.b16 %v986
      %v1630 = vunpack.c.l.b16 %v987
      %v1631 = vunpack.c.l.b16 %v988
      %v1632 = vunpack.c.l.b16 %v989
      %v1633 = vunpack.c.l.b16 %v990
      %v1634 = vunpack.c.l.b16 %v991
      %v1635 = vunpack.c.l.b16 %v992
      %v1636 = vunpack.c.l.b16 %v993
      %v1637 = vunpack.c.l.b16 %v994
      %v1638 = vunpack.c.l.b16 %v995
      %v1639 = vunpack.c.l.b16 %v996
      %v1640 = vpack.c.b16 %v1609, %v1608
      %v1641 = vpack.c.b16 %v1611, %v1610
      %v1642 = vpack.c.b16 %v1613, %v1612
      %v1643 = vpack.c.b16 %v1615, %v1614
      %v1644 = vpack.c.b16 %v1617, %v1616
      %v1645 = vpack.c.b16 %v1619, %v1618
      %v1646 = vpack.c.b16 %v1621, %v1620
      %v1647 = vpack.c.b16 %v1623, %v1622
      %v1648 = vpack.c.b16 %v1625, %v1624
      %v1649 = vpack.c.b16 %v1627, %v1626
      %v1650 = vpack.c.b16 %v1629, %v1628
      %v1651 = vpack.c.b16 %v1631, %v1630
      %v1652 = vpack.c.b16 %v1633, %v1632
      %v1653 = vpack.c.b16 %v1635, %v1634
      %v1654 = vpack.c.b16 %v1637, %v1636
      %v1655 = vpack.c.b16 %v1639, %v1638
      %1656 = vrot.lane.b32.xlu0 %v1640, 9
      %v1657 = vpop.permute.xlu0 %1656
      %1658 = vrot.lane.b32.xlu0 %v1641, 9
      %v1659 = vpop.permute.xlu0 %1658
      %1660 = vrot.lane.b32.xlu0 %v1642, 9
      %v1661 = vpop.permute.xlu0 %1660
      %1662 = vrot.lane.b32.xlu0 %v1643, 9
      %v1663 = vpop.permute.xlu0 %1662
      %1664 = vrot.lane.b32.xlu0 %v1644, 9
      %v1665 = vpop.permute.xlu0 %1664
      %1666 = vrot.lane.b32.xlu0 %v1645, 9
      %v1667 = vpop.permute.xlu0 %1666
      %1668 = vrot.lane.b32.xlu0 %v1646, 9
      %v1669 = vpop.permute.xlu0 %1668
      %1670 = vrot.lane.b32.xlu0 %v1647, 9
      %v1671 = vpop.permute.xlu0 %1670
      %1672 = vrot.lane.b32.xlu0 %v1648, 9
      %v1673 = vpop.permute.xlu0 %1672
      %1674 = vrot.lane.b32.xlu0 %v1649, 9
      %v1675 = vpop.permute.xlu0 %1674
      %1676 = vrot.lane.b32.xlu0 %v1650, 9
      %v1677 = vpop.permute.xlu0 %1676
      %1678 = vrot.lane.b32.xlu0 %v1651, 9
      %v1679 = vpop.permute.xlu0 %1678
      %1680 = vrot.lane.b32.xlu0 %v1652, 9
      %v1681 = vpop.permute.xlu0 %1680
      %1682 = vrot.lane.b32.xlu0 %v1653, 9
      %v1683 = vpop.permute.xlu0 %1682
      %1684 = vrot.lane.b32.xlu0 %v1654, 9
      %v1685 = vpop.permute.xlu0 %1684
      %1686 = vrot.lane.b32.xlu0 %v1655, 9
      %v1687 = vpop.permute.xlu0 %1686
      %v1704 = vunpack.c.l.b16 %v997
      %v1705 = vunpack.c.l.b16 %v998
      %v1706 = vunpack.c.l.b16 %v999
      %v1707 = vunpack.c.l.b16 %v1000
      %v1708 = vunpack.c.l.b16 %v1001
      %v1709 = vunpack.c.l.b16 %v1002
      %v1710 = vunpack.c.l.b16 %v1003
      %v1711 = vunpack.c.l.b16 %v1004
      %v1712 = vunpack.c.l.b16 %v1005
      %v1713 = vunpack.c.l.b16 %v1006
      %v1714 = vunpack.c.l.b16 %v1007
      %v1715 = vunpack.c.l.b16 %v1008
      %v1716 = vunpack.c.l.b16 %v1009
      %v1717 = vunpack.c.l.b16 %v1010
      %v1718 = vunpack.c.l.b16 %v1011
      %v1719 = vunpack.c.l.b16 %v1012
      %v1720 = vpack.c.b16 %v1704, %v1704
      %v1721 = vpack.c.b16 %v1705, %v1705
      %v1722 = vpack.c.b16 %v1706, %v1706
      %v1723 = vpack.c.b16 %v1707, %v1707
      %v1724 = vpack.c.b16 %v1708, %v1708
      %v1725 = vpack.c.b16 %v1709, %v1709
      %v1726 = vpack.c.b16 %v1710, %v1710
      %v1727 = vpack.c.b16 %v1711, %v1711
      %v1728 = vpack.c.b16 %v1712, %v1712
      %v1729 = vpack.c.b16 %v1713, %v1713
      %v1730 = vpack.c.b16 %v1714, %v1714
      %v1731 = vpack.c.b16 %v1715, %v1715
      %v1732 = vpack.c.b16 %v1716, %v1716
      %v1733 = vpack.c.b16 %v1717, %v1717
      %v1734 = vpack.c.b16 %v1718, %v1718
      %v1735 = vpack.c.b16 %v1719, %v1719
      %v1737 = vshrl.u32 %v1640, 16
      %v1739 = vshll.u32 %v1640, 16
      %v1741 = vrot.slane %v1739, 1
      %v1742 = vor.u32 %v1737, %v1741
      %v1744 = vshll.u32 %v1720, 16
      %v1746 = vrot.slane %v1744, 1
      %v1747 = vsel %vm1222, %v1742, %v1746
      %v1749 = vshrl.u32 %v1641, 16
      %v1751 = vshll.u32 %v1641, 16
      %v1753 = vrot.slane %v1751, 1
      %v1754 = vor.u32 %v1749, %v1753
      %v1756 = vshll.u32 %v1721, 16
      %v1758 = vrot.slane %v1756, 1
      %v1759 = vsel %vm1222, %v1754, %v1758
      %v1761 = vshrl.u32 %v1642, 16
      %v1763 = vshll.u32 %v1642, 16
      %v1765 = vrot.slane %v1763, 1
      %v1766 = vor.u32 %v1761, %v1765
      %v1768 = vshll.u32 %v1722, 16
      %v1770 = vrot.slane %v1768, 1
      %v1771 = vsel %vm1222, %v1766, %v1770
      %v1773 = vshrl.u32 %v1643, 16
      %v1775 = vshll.u32 %v1643, 16
      %v1777 = vrot.slane %v1775, 1
      %v1778 = vor.u32 %v1773, %v1777
      %v1780 = vshll.u32 %v1723, 16
      %v1782 = vrot.slane %v1780, 1
      %v1783 = vsel %vm1222, %v1778, %v1782
      %v1785 = vshrl.u32 %v1644, 16
      %v1787 = vshll.u32 %v1644, 16
      %v1789 = vrot.slane %v1787, 1
      %v1790 = vor.u32 %v1785, %v1789
      %v1792 = vshll.u32 %v1724, 16
      %v1794 = vrot.slane %v1792, 1
      %v1795 = vsel %vm1222, %v1790, %v1794
      %v1797 = vshrl.u32 %v1645, 16
      %v1799 = vshll.u32 %v1645, 16
      %v1801 = vrot.slane %v1799, 1
      %v1802 = vor.u32 %v1797, %v1801
      %v1804 = vshll.u32 %v1725, 16
      %v1806 = vrot.slane %v1804, 1
      %v1807 = vsel %vm1222, %v1802, %v1806
      %v1809 = vshrl.u32 %v1646, 16
      %v1811 = vshll.u32 %v1646, 16
      %v1813 = vrot.slane %v1811, 1
      %v1814 = vor.u32 %v1809, %v1813
      %v1816 = vshll.u32 %v1726, 16
      %v1818 = vrot.slane %v1816, 1
      %v1819 = vsel %vm1222, %v1814, %v1818
      %v1821 = vshrl.u32 %v1647, 16
      %v1823 = vshll.u32 %v1647, 16
      %v1825 = vrot.slane %v1823, 1
      %v1826 = vor.u32 %v1821, %v1825
      %v1828 = vshll.u32 %v1727, 16
      %v1830 = vrot.slane %v1828, 1
      %v1831 = vsel %vm1222, %v1826, %v1830
      %v1833 = vshrl.u32 %v1648, 16
      %v1835 = vshll.u32 %v1648, 16
      %v1837 = vrot.slane %v1835, 1
      %v1838 = vor.u32 %v1833, %v1837
      %v1840 = vshll.u32 %v1728, 16
      %v1842 = vrot.slane %v1840, 1
      %v1843 = vsel %vm1222, %v1838, %v1842
      %v1845 = vshrl.u32 %v1649, 16
      %v1847 = vshll.u32 %v1649, 16
      %v1849 = vrot.slane %v1847, 1
      %v1850 = vor.u32 %v1845, %v1849
      %v1852 = vshll.u32 %v1729, 16
      %v1854 = vrot.slane %v1852, 1
      %v1855 = vsel %vm1222, %v1850, %v1854
      %v1857 = vshrl.u32 %v1650, 16
      %v1859 = vshll.u32 %v1650, 16
      %v1861 = vrot.slane %v1859, 1
      %v1862 = vor.u32 %v1857, %v1861
      %v1864 = vshll.u32 %v1730, 16
      %v1866 = vrot.slane %v1864, 1
      %v1867 = vsel %vm1222, %v1862, %v1866
      %v1869 = vshrl.u32 %v1651, 16
      %v1871 = vshll.u32 %v1651, 16
      %v1873 = vrot.slane %v1871, 1
      %v1874 = vor.u32 %v1869, %v1873
      %v1876 = vshll.u32 %v1731, 16
      %v1878 = vrot.slane %v1876, 1
      %v1879 = vsel %vm1222, %v1874, %v1878
      %v1881 = vshrl.u32 %v1652, 16
      %v1883 = vshll.u32 %v1652, 16
      %v1885 = vrot.slane %v1883, 1
      %v1886 = vor.u32 %v1881, %v1885
      %v1888 = vshll.u32 %v1732, 16
      %v1890 = vrot.slane %v1888, 1
      %v1891 = vsel %vm1222, %v1886, %v1890
      %v1893 = vshrl.u32 %v1653, 16
      %v1895 = vshll.u32 %v1653, 16
      %v1897 = vrot.slane %v1895, 1
      %v1898 = vor.u32 %v1893, %v1897
      %v1900 = vshll.u32 %v1733, 16
      %v1902 = vrot.slane %v1900, 1
      %v1903 = vsel %vm1222, %v1898, %v1902
      %v1905 = vshrl.u32 %v1654, 16
      %v1907 = vshll.u32 %v1654, 16
      %v1909 = vrot.slane %v1907, 1
      %v1910 = vor.u32 %v1905, %v1909
      %v1912 = vshll.u32 %v1734, 16
      %v1914 = vrot.slane %v1912, 1
      %v1915 = vsel %vm1222, %v1910, %v1914
      %v1917 = vshrl.u32 %v1655, 16
      %v1919 = vshll.u32 %v1655, 16
      %v1921 = vrot.slane %v1919, 1
      %v1922 = vor.u32 %v1917, %v1921
      %v1924 = vshll.u32 %v1735, 16
      %v1926 = vrot.slane %v1924, 1
      %v1927 = vsel %vm1222, %v1922, %v1926
      %1928 = vrot.lane.b32.xlu0 %v1747, 12
      %v1929 = vpop.permute.xlu0 %1928
      %1930 = vrot.lane.b32.xlu0 %v1759, 12
      %v1931 = vpop.permute.xlu0 %1930
      %1932 = vrot.lane.b32.xlu0 %v1771, 12
      %v1933 = vpop.permute.xlu0 %1932
      %1934 = vrot.lane.b32.xlu0 %v1783, 12
      %v1935 = vpop.permute.xlu0 %1934
      %1936 = vrot.lane.b32.xlu0 %v1795, 12
      %v1937 = vpop.permute.xlu0 %1936
      %1938 = vrot.lane.b32.xlu0 %v1807, 12
      %v1939 = vpop.permute.xlu0 %1938
      %1940 = vrot.lane.b32.xlu0 %v1819, 12
      %v1941 = vpop.permute.xlu0 %1940
      %1942 = vrot.lane.b32.xlu0 %v1831, 12
      %v1943 = vpop.permute.xlu0 %1942
      %1944 = vrot.lane.b32.xlu0 %v1843, 12
      %v1945 = vpop.permute.xlu0 %1944
      %1946 = vrot.lane.b32.xlu0 %v1855, 12
      %v1947 = vpop.permute.xlu0 %1946
      %1948 = vrot.lane.b32.xlu0 %v1867, 12
      %v1949 = vpop.permute.xlu0 %1948
      %1950 = vrot.lane.b32.xlu0 %v1879, 12
      %v1951 = vpop.permute.xlu0 %1950
      %1952 = vrot.lane.b32.xlu0 %v1891, 12
      %v1953 = vpop.permute.xlu0 %1952
      %1954 = vrot.lane.b32.xlu0 %v1903, 12
      %v1955 = vpop.permute.xlu0 %1954
      %1956 = vrot.lane.b32.xlu0 %v1915, 12
      %v1957 = vpop.permute.xlu0 %1956
      %1958 = vrot.lane.b32.xlu0 %v1927, 12
      %v1959 = vpop.permute.xlu0 %1958
      %v1976 = vunpack.c.l.b16 %v1013
      %v1977 = vunpack.c.l.b16 %v1014
      %v1978 = vunpack.c.l.b16 %v1015
      %v1979 = vunpack.c.l.b16 %v1016
      %v1980 = vunpack.c.l.b16 %v1017
      %v1981 = vunpack.c.l.b16 %v1018
      %v1982 = vunpack.c.l.b16 %v1019
      %v1983 = vunpack.c.l.b16 %v1020
      %v1984 = vunpack.c.l.b16 %v1021
      %v1985 = vunpack.c.l.b16 %v1022
      %v1986 = vunpack.c.l.b16 %v1023
      %v1987 = vunpack.c.l.b16 %v1024
      %v1988 = vunpack.c.l.b16 %v1025
      %v1989 = vunpack.c.l.b16 %v1026
      %v1990 = vunpack.c.l.b16 %v1027
      %v1991 = vunpack.c.l.b16 %v1028
      %v1992 = vpack.c.b16 %v1609, %v1976
      %v1993 = vpack.c.b16 %v1611, %v1977
      %v1994 = vpack.c.b16 %v1613, %v1978
      %v1995 = vpack.c.b16 %v1615, %v1979
      %v1996 = vpack.c.b16 %v1617, %v1980
      %v1997 = vpack.c.b16 %v1619, %v1981
      %v1998 = vpack.c.b16 %v1621, %v1982
      %v1999 = vpack.c.b16 %v1623, %v1983
      %v2000 = vpack.c.b16 %v1625, %v1984
      %v2001 = vpack.c.b16 %v1627, %v1985
      %v2002 = vpack.c.b16 %v1629, %v1986
      %v2003 = vpack.c.b16 %v1631, %v1987
      %v2004 = vpack.c.b16 %v1633, %v1988
      %v2005 = vpack.c.b16 %v1635, %v1989
      %v2006 = vpack.c.b16 %v1637, %v1990
      %v2007 = vpack.c.b16 %v1639, %v1991
      %v2008 = vrot.slane %v1992, 1
      %v2009 = vrot.slane %v1720, 1
      %v2010 = vsel %vm1495, %v2008, %v2009
      %v2011 = vrot.slane %v1993, 1
      %v2012 = vrot.slane %v1721, 1
      %v2013 = vsel %vm1495, %v2011, %v2012
      %v2014 = vrot.slane %v1994, 1
      %v2015 = vrot.slane %v1722, 1
      %v2016 = vsel %vm1495, %v2014, %v2015
      %v2017 = vrot.slane %v1995, 1
      %v2018 = vrot.slane %v1723, 1
      %v2019 = vsel %vm1495, %v2017, %v2018
      %v2020 = vrot.slane %v1996, 1
      %v2021 = vrot.slane %v1724, 1
      %v2022 = vsel %vm1495, %v2020, %v2021
      %v2023 = vrot.slane %v1997, 1
      %v2024 = vrot.slane %v1725, 1
      %v2025 = vsel %vm1495, %v2023, %v2024
      %v2026 = vrot.slane %v1998, 1
      %v2027 = vrot.slane %v1726, 1
      %v2028 = vsel %vm1495, %v2026, %v2027
      %v2029 = vrot.slane %v1999, 1
      %v2030 = vrot.slane %v1727, 1
      %v2031 = vsel %vm1495, %v2029, %v2030
      %v2032 = vrot.slane %v2000, 1
      %v2033 = vrot.slane %v1728, 1
      %v2034 = vsel %vm1495, %v2032, %v2033
      %v2035 = vrot.slane %v2001, 1
      %v2036 = vrot.slane %v1729, 1
      %v2037 = vsel %vm1495, %v2035, %v2036
      %v2038 = vrot.slane %v2002, 1
      %v2039 = vrot.slane %v1730, 1
      %v2040 = vsel %vm1495, %v2038, %v2039
      %v2041 = vrot.slane %v2003, 1
      %v2042 = vrot.slane %v1731, 1
      %v2043 = vsel %vm1495, %v2041, %v2042
      %v2044 = vrot.slane %v2004, 1
      %v2045 = vrot.slane %v1732, 1
      %v2046 = vsel %vm1495, %v2044, %v2045
      %v2047 = vrot.slane %v2005, 1
      %v2048 = vrot.slane %v1733, 1
      %v2049 = vsel %vm1495, %v2047, %v2048
      %v2050 = vrot.slane %v2006, 1
      %v2051 = vrot.slane %v1734, 1
      %v2052 = vsel %vm1495, %v2050, %v2051
      %v2053 = vrot.slane %v2007, 1
      %v2054 = vrot.slane %v1735, 1
      %v2055 = vsel %vm1495, %v2053, %v2054
      %2056 = vrot.lane.b32.xlu0 %v2010, 15
      %v2057 = vpop.permute.xlu0 %2056
      %2058 = vrot.lane.b32.xlu0 %v2013, 15
      %v2059 = vpop.permute.xlu0 %2058
      %2060 = vrot.lane.b32.xlu0 %v2016, 15
      %v2061 = vpop.permute.xlu0 %2060
      %2062 = vrot.lane.b32.xlu0 %v2019, 15
      %v2063 = vpop.permute.xlu0 %2062
      %2064 = vrot.lane.b32.xlu0 %v2022, 15
      %v2065 = vpop.permute.xlu0 %2064
      %2066 = vrot.lane.b32.xlu0 %v2025, 15
      %v2067 = vpop.permute.xlu0 %2066
      %2068 = vrot.lane.b32.xlu0 %v2028, 15
      %v2069 = vpop.permute.xlu0 %2068
      %2070 = vrot.lane.b32.xlu0 %v2031, 15
      %v2071 = vpop.permute.xlu0 %2070
      %2072 = vrot.lane.b32.xlu0 %v2034, 15
      %v2073 = vpop.permute.xlu0 %2072
      %2074 = vrot.lane.b32.xlu0 %v2037, 15
      %v2075 = vpop.permute.xlu0 %2074
      %2076 = vrot.lane.b32.xlu0 %v2040, 15
      %v2077 = vpop.permute.xlu0 %2076
      %2078 = vrot.lane.b32.xlu0 %v2043, 15
      %v2079 = vpop.permute.xlu0 %2078
      %2080 = vrot.lane.b32.xlu0 %v2046, 15
      %v2081 = vpop.permute.xlu0 %2080
      %2082 = vrot.lane.b32.xlu0 %v2049, 15
      %v2083 = vpop.permute.xlu0 %2082
      %2084 = vrot.lane.b32.xlu0 %v2052, 15
      %v2085 = vpop.permute.xlu0 %2084
      %2086 = vrot.lane.b32.xlu0 %v2055, 15
      %v2087 = vpop.permute.xlu0 %2086
      %v2120 = vunpack.c.l.b16 %v1030
      %v2121 = vunpack.c.l.b16 %v1031
      %v2122 = vunpack.c.l.b16 %v1032
      %v2123 = vunpack.c.l.b16 %v1033
      %v2124 = vunpack.c.l.b16 %v1034
      %v2125 = vunpack.c.l.b16 %v1035
      %v2126 = vunpack.c.l.b16 %v1036
      %v2127 = vunpack.c.l.b16 %v1037
      %v2128 = vunpack.c.l.b16 %v1038
      %v2129 = vunpack.c.l.b16 %v1039
      %v2130 = vunpack.c.l.b16 %v1040
      %v2131 = vunpack.c.l.b16 %v1041
      %v2132 = vunpack.c.l.b16 %v1042
      %v2133 = vunpack.c.l.b16 %v1043
      %v2134 = vunpack.c.l.b16 %v1044
      %v2135 = vunpack.c.l.b16 %v1045
      %v2136 = vunpack.c.l.b16 %v1046
      %v2137 = vunpack.c.l.b16 %v1047
      %v2138 = vunpack.c.l.b16 %v1048
      %v2139 = vunpack.c.l.b16 %v1049
      %v2140 = vunpack.c.l.b16 %v1050
      %v2141 = vunpack.c.l.b16 %v1051
      %v2142 = vunpack.c.l.b16 %v1052
      %v2143 = vunpack.c.l.b16 %v1053
      %v2144 = vunpack.c.l.b16 %v1054
      %v2145 = vunpack.c.l.b16 %v1055
      %v2146 = vunpack.c.l.b16 %v1056
      %v2147 = vunpack.c.l.b16 %v1057
      %v2148 = vunpack.c.l.b16 %v1058
      %v2149 = vunpack.c.l.b16 %v1059
      %v2150 = vunpack.c.l.b16 %v1060
      %v2151 = vunpack.c.l.b16 %v1061
      %v2152 = vpack.c.b16 %v2121, %v2120
      %v2153 = vpack.c.b16 %v2123, %v2122
      %v2154 = vpack.c.b16 %v2125, %v2124
      %v2155 = vpack.c.b16 %v2127, %v2126
      %v2156 = vpack.c.b16 %v2129, %v2128
      %v2157 = vpack.c.b16 %v2131, %v2130
      %v2158 = vpack.c.b16 %v2133, %v2132
      %v2159 = vpack.c.b16 %v2135, %v2134
      %v2160 = vpack.c.b16 %v2137, %v2136
      %v2161 = vpack.c.b16 %v2139, %v2138
      %v2162 = vpack.c.b16 %v2141, %v2140
      %v2163 = vpack.c.b16 %v2143, %v2142
      %v2164 = vpack.c.b16 %v2145, %v2144
      %v2165 = vpack.c.b16 %v2147, %v2146
      %v2166 = vpack.c.b16 %v2149, %v2148
      %v2167 = vpack.c.b16 %v2151, %v2150
      %2168 = vrot.lane.b32.xlu0 %v2152, 18
      %v2169 = vpop.permute.xlu0 %2168
      %2170 = vrot.lane.b32.xlu0 %v2153, 18
      %v2171 = vpop.permute.xlu0 %2170
      %2172 = vrot.lane.b32.xlu0 %v2154, 18
      %v2173 = vpop.permute.xlu0 %2172
      %2174 = vrot.lane.b32.xlu0 %v2155, 18
      %v2175 = vpop.permute.xlu0 %2174
      %2176 = vrot.lane.b32.xlu0 %v2156, 18
      %v2177 = vpop.permute.xlu0 %2176
      %2178 = vrot.lane.b32.xlu0 %v2157, 18
      %v2179 = vpop.permute.xlu0 %2178
      %2180 = vrot.lane.b32.xlu0 %v2158, 18
      %v2181 = vpop.permute.xlu0 %2180
      %2182 = vrot.lane.b32.xlu0 %v2159, 18
      %v2183 = vpop.permute.xlu0 %2182
      %2184 = vrot.lane.b32.xlu0 %v2160, 18
      %v2185 = vpop.permute.xlu0 %2184
      %2186 = vrot.lane.b32.xlu0 %v2161, 18
      %v2187 = vpop.permute.xlu0 %2186
      %2188 = vrot.lane.b32.xlu0 %v2162, 18
      %v2189 = vpop.permute.xlu0 %2188
      %2190 = vrot.lane.b32.xlu0 %v2163, 18
      %v2191 = vpop.permute.xlu0 %2190
      %2192 = vrot.lane.b32.xlu0 %v2164, 18
      %v2193 = vpop.permute.xlu0 %2192
      %2194 = vrot.lane.b32.xlu0 %v2165, 18
      %v2195 = vpop.permute.xlu0 %2194
      %2196 = vrot.lane.b32.xlu0 %v2166, 18
      %v2197 = vpop.permute.xlu0 %2196
      %2198 = vrot.lane.b32.xlu0 %v2167, 18
      %v2199 = vpop.permute.xlu0 %2198
      %v2216 = vunpack.c.l.b16 %v1062
      %v2217 = vunpack.c.l.b16 %v1063
      %v2218 = vunpack.c.l.b16 %v1064
      %v2219 = vunpack.c.l.b16 %v1065
      %v2220 = vunpack.c.l.b16 %v1066
      %v2221 = vunpack.c.l.b16 %v1067
      %v2222 = vunpack.c.l.b16 %v1068
      %v2223 = vunpack.c.l.b16 %v1069
      %v2224 = vunpack.c.l.b16 %v1070
      %v2225 = vunpack.c.l.b16 %v1071
      %v2226 = vunpack.c.l.b16 %v1072
      %v2227 = vunpack.c.l.b16 %v1073
      %v2228 = vunpack.c.l.b16 %v1074
      %v2229 = vunpack.c.l.b16 %v1075
      %v2230 = vunpack.c.l.b16 %v1076
      %v2231 = vunpack.c.l.b16 %v1077
      %v2232 = vpack.c.b16 %v2216, %v2216
      %v2233 = vpack.c.b16 %v2217, %v2217
      %v2234 = vpack.c.b16 %v2218, %v2218
      %v2235 = vpack.c.b16 %v2219, %v2219
      %v2236 = vpack.c.b16 %v2220, %v2220
      %v2237 = vpack.c.b16 %v2221, %v2221
      %v2238 = vpack.c.b16 %v2222, %v2222
      %v2239 = vpack.c.b16 %v2223, %v2223
      %v2240 = vpack.c.b16 %v2224, %v2224
      %v2241 = vpack.c.b16 %v2225, %v2225
      %v2242 = vpack.c.b16 %v2226, %v2226
      %v2243 = vpack.c.b16 %v2227, %v2227
      %v2244 = vpack.c.b16 %v2228, %v2228
      %v2245 = vpack.c.b16 %v2229, %v2229
      %v2246 = vpack.c.b16 %v2230, %v2230
      %v2247 = vpack.c.b16 %v2231, %v2231
      %v2249 = vshrl.u32 %v2152, 16
      %v2251 = vshll.u32 %v2152, 16
      %v2253 = vrot.slane %v2251, 1
      %v2254 = vor.u32 %v2249, %v2253
      %v2256 = vshll.u32 %v2232, 16
      %v2258 = vrot.slane %v2256, 1
      %v2259 = vsel %vm1222, %v2254, %v2258
      %v2261 = vshrl.u32 %v2153, 16
      %v2263 = vshll.u32 %v2153, 16
      %v2265 = vrot.slane %v2263, 1
      %v2266 = vor.u32 %v2261, %v2265
      %v2268 = vshll.u32 %v2233, 16
      %v2270 = vrot.slane %v2268, 1
      %v2271 = vsel %vm1222, %v2266, %v2270
      %v2273 = vshrl.u32 %v2154, 16
      %v2275 = vshll.u32 %v2154, 16
      %v2277 = vrot.slane %v2275, 1
      %v2278 = vor.u32 %v2273, %v2277
      %v2280 = vshll.u32 %v2234, 16
      %v2282 = vrot.slane %v2280, 1
      %v2283 = vsel %vm1222, %v2278, %v2282
      %v2285 = vshrl.u32 %v2155, 16
      %v2287 = vshll.u32 %v2155, 16
      %v2289 = vrot.slane %v2287, 1
      %v2290 = vor.u32 %v2285, %v2289
      %v2292 = vshll.u32 %v2235, 16
      %v2294 = vrot.slane %v2292, 1
      %v2295 = vsel %vm1222, %v2290, %v2294
      %v2297 = vshrl.u32 %v2156, 16
      %v2299 = vshll.u32 %v2156, 16
      %v2301 = vrot.slane %v2299, 1
      %v2302 = vor.u32 %v2297, %v2301
      %v2304 = vshll.u32 %v2236, 16
      %v2306 = vrot.slane %v2304, 1
      %v2307 = vsel %vm1222, %v2302, %v2306
      %v2309 = vshrl.u32 %v2157, 16
      %v2311 = vshll.u32 %v2157, 16
      %v2313 = vrot.slane %v2311, 1
      %v2314 = vor.u32 %v2309, %v2313
      %v2316 = vshll.u32 %v2237, 16
      %v2318 = vrot.slane %v2316, 1
      %v2319 = vsel %vm1222, %v2314, %v2318
      %v2321 = vshrl.u32 %v2158, 16
      %v2323 = vshll.u32 %v2158, 16
      %v2325 = vrot.slane %v2323, 1
      %v2326 = vor.u32 %v2321, %v2325
      %v2328 = vshll.u32 %v2238, 16
      %v2330 = vrot.slane %v2328, 1
      %v2331 = vsel %vm1222, %v2326, %v2330
      %v2333 = vshrl.u32 %v2159, 16
      %v2335 = vshll.u32 %v2159, 16
      %v2337 = vrot.slane %v2335, 1
      %v2338 = vor.u32 %v2333, %v2337
      %v2340 = vshll.u32 %v2239, 16
      %v2342 = vrot.slane %v2340, 1
      %v2343 = vsel %vm1222, %v2338, %v2342
      %v2345 = vshrl.u32 %v2160, 16
      %v2347 = vshll.u32 %v2160, 16
      %v2349 = vrot.slane %v2347, 1
      %v2350 = vor.u32 %v2345, %v2349
      %v2352 = vshll.u32 %v2240, 16
      %v2354 = vrot.slane %v2352, 1
      %v2355 = vsel %vm1222, %v2350, %v2354
      %v2357 = vshrl.u32 %v2161, 16
      %v2359 = vshll.u32 %v2161, 16
      %v2361 = vrot.slane %v2359, 1
      %v2362 = vor.u32 %v2357, %v2361
      %v2364 = vshll.u32 %v2241, 16
      %v2366 = vrot.slane %v2364, 1
      %v2367 = vsel %vm1222, %v2362, %v2366
      %v2369 = vshrl.u32 %v2162, 16
      %v2371 = vshll.u32 %v2162, 16
      %v2373 = vrot.slane %v2371, 1
      %v2374 = vor.u32 %v2369, %v2373
      %v2376 = vshll.u32 %v2242, 16
      %v2378 = vrot.slane %v2376, 1
      %v2379 = vsel %vm1222, %v2374, %v2378
      %v2381 = vshrl.u32 %v2163, 16
      %v2383 = vshll.u32 %v2163, 16
      %v2385 = vrot.slane %v2383, 1
      %v2386 = vor.u32 %v2381, %v2385
      %v2388 = vshll.u32 %v2243, 16
      %v2390 = vrot.slane %v2388, 1
      %v2391 = vsel %vm1222, %v2386, %v2390
      %v2393 = vshrl.u32 %v2164, 16
      %v2395 = vshll.u32 %v2164, 16
      %v2397 = vrot.slane %v2395, 1
      %v2398 = vor.u32 %v2393, %v2397
      %v2400 = vshll.u32 %v2244, 16
      %v2402 = vrot.slane %v2400, 1
      %v2403 = vsel %vm1222, %v2398, %v2402
      %v2405 = vshrl.u32 %v2165, 16
      %v2407 = vshll.u32 %v2165, 16
      %v2409 = vrot.slane %v2407, 1
      %v2410 = vor.u32 %v2405, %v2409
      %v2412 = vshll.u32 %v2245, 16
      %v2414 = vrot.slane %v2412, 1
      %v2415 = vsel %vm1222, %v2410, %v2414
      %v2417 = vshrl.u32 %v2166, 16
      %v2419 = vshll.u32 %v2166, 16
      %v2421 = vrot.slane %v2419, 1
      %v2422 = vor.u32 %v2417, %v2421
      %v2424 = vshll.u32 %v2246, 16
      %v2426 = vrot.slane %v2424, 1
      %v2427 = vsel %vm1222, %v2422, %v2426
      %v2429 = vshrl.u32 %v2167, 16
      %v2431 = vshll.u32 %v2167, 16
      %v2433 = vrot.slane %v2431, 1
      %v2434 = vor.u32 %v2429, %v2433
      %v2436 = vshll.u32 %v2247, 16
      %v2438 = vrot.slane %v2436, 1
      %v2439 = vsel %vm1222, %v2434, %v2438
      %2440 = vrot.lane.b32.xlu0 %v2259, 21
      %v2441 = vpop.permute.xlu0 %2440
      %2442 = vrot.lane.b32.xlu0 %v2271, 21
      %v2443 = vpop.permute.xlu0 %2442
      %2444 = vrot.lane.b32.xlu0 %v2283, 21
      %v2445 = vpop.permute.xlu0 %2444
      %2446 = vrot.lane.b32.xlu0 %v2295, 21
      %v2447 = vpop.permute.xlu0 %2446
      %2448 = vrot.lane.b32.xlu0 %v2307, 21
      %v2449 = vpop.permute.xlu0 %2448
      %2450 = vrot.lane.b32.xlu0 %v2319, 21
      %v2451 = vpop.permute.xlu0 %2450
      %2452 = vrot.lane.b32.xlu0 %v2331, 21
      %v2453 = vpop.permute.xlu0 %2452
      %2454 = vrot.lane.b32.xlu0 %v2343, 21
      %v2455 = vpop.permute.xlu0 %2454
      %2456 = vrot.lane.b32.xlu0 %v2355, 21
      %v2457 = vpop.permute.xlu0 %2456
      %2458 = vrot.lane.b32.xlu0 %v2367, 21
      %v2459 = vpop.permute.xlu0 %2458
      %2460 = vrot.lane.b32.xlu0 %v2379, 21
      %v2461 = vpop.permute.xlu0 %2460
      %2462 = vrot.lane.b32.xlu0 %v2391, 21
      %v2463 = vpop.permute.xlu0 %2462
      %2464 = vrot.lane.b32.xlu0 %v2403, 21
      %v2465 = vpop.permute.xlu0 %2464
      %2466 = vrot.lane.b32.xlu0 %v2415, 21
      %v2467 = vpop.permute.xlu0 %2466
      %2468 = vrot.lane.b32.xlu0 %v2427, 21
      %v2469 = vpop.permute.xlu0 %2468
      %2470 = vrot.lane.b32.xlu0 %v2439, 21
      %v2471 = vpop.permute.xlu0 %2470
      %v2488 = vunpack.c.l.b16 %v1078
      %v2489 = vunpack.c.l.b16 %v1079
      %v2490 = vunpack.c.l.b16 %v1080
      %v2491 = vunpack.c.l.b16 %v1081
      %v2492 = vunpack.c.l.b16 %v1082
      %v2493 = vunpack.c.l.b16 %v1083
      %v2494 = vunpack.c.l.b16 %v1084
      %v2495 = vunpack.c.l.b16 %v1085
      %v2496 = vunpack.c.l.b16 %v1086
      %v2497 = vunpack.c.l.b16 %v1087
      %v2498 = vunpack.c.l.b16 %v1088
      %v2499 = vunpack.c.l.b16 %v1089
      %v2500 = vunpack.c.l.b16 %v1090
      %v2501 = vunpack.c.l.b16 %v1091
      %v2502 = vunpack.c.l.b16 %v1092
      %v2503 = vunpack.c.l.b16 %v1093
      %v2504 = vpack.c.b16 %v2121, %v2488
      %v2505 = vpack.c.b16 %v2123, %v2489
      %v2506 = vpack.c.b16 %v2125, %v2490
      %v2507 = vpack.c.b16 %v2127, %v2491
      %v2508 = vpack.c.b16 %v2129, %v2492
      %v2509 = vpack.c.b16 %v2131, %v2493
      %v2510 = vpack.c.b16 %v2133, %v2494
      %v2511 = vpack.c.b16 %v2135, %v2495
      %v2512 = vpack.c.b16 %v2137, %v2496
      %v2513 = vpack.c.b16 %v2139, %v2497
      %v2514 = vpack.c.b16 %v2141, %v2498
      %v2515 = vpack.c.b16 %v2143, %v2499
      %v2516 = vpack.c.b16 %v2145, %v2500
      %v2517 = vpack.c.b16 %v2147, %v2501
      %v2518 = vpack.c.b16 %v2149, %v2502
      %v2519 = vpack.c.b16 %v2151, %v2503
      %v2520 = vrot.slane %v2504, 1
      %v2521 = vrot.slane %v2232, 1
      %v2522 = vsel %vm1495, %v2520, %v2521
      %v2523 = vrot.slane %v2505, 1
      %v2524 = vrot.slane %v2233, 1
      %v2525 = vsel %vm1495, %v2523, %v2524
      %v2526 = vrot.slane %v2506, 1
      %v2527 = vrot.slane %v2234, 1
      %v2528 = vsel %vm1495, %v2526, %v2527
      %v2529 = vrot.slane %v2507, 1
      %v2530 = vrot.slane %v2235, 1
      %v2531 = vsel %vm1495, %v2529, %v2530
      %v2532 = vrot.slane %v2508, 1
      %v2533 = vrot.slane %v2236, 1
      %v2534 = vsel %vm1495, %v2532, %v2533
      %v2535 = vrot.slane %v2509, 1
      %v2536 = vrot.slane %v2237, 1
      %v2537 = vsel %vm1495, %v2535, %v2536
      %v2538 = vrot.slane %v2510, 1
      %v2539 = vrot.slane %v2238, 1
      %v2540 = vsel %vm1495, %v2538, %v2539
      %v2541 = vrot.slane %v2511, 1
      %v2542 = vrot.slane %v2239, 1
      %v2543 = vsel %vm1495, %v2541, %v2542
      %v2544 = vrot.slane %v2512, 1
      %v2545 = vrot.slane %v2240, 1
      %v2546 = vsel %vm1495, %v2544, %v2545
      %v2547 = vrot.slane %v2513, 1
      %v2548 = vrot.slane %v2241, 1
      %v2549 = vsel %vm1495, %v2547, %v2548
      %v2550 = vrot.slane %v2514, 1
      %v2551 = vrot.slane %v2242, 1
      %v2552 = vsel %vm1495, %v2550, %v2551
      %v2553 = vrot.slane %v2515, 1
      %v2554 = vrot.slane %v2243, 1
      %v2555 = vsel %vm1495, %v2553, %v2554
      %v2556 = vrot.slane %v2516, 1
      %v2557 = vrot.slane %v2244, 1
      %v2558 = vsel %vm1495, %v2556, %v2557
      %v2559 = vrot.slane %v2517, 1
      %v2560 = vrot.slane %v2245, 1
      %v2561 = vsel %vm1495, %v2559, %v2560
      %v2562 = vrot.slane %v2518, 1
      %v2563 = vrot.slane %v2246, 1
      %v2564 = vsel %vm1495, %v2562, %v2563
      %v2565 = vrot.slane %v2519, 1
      %v2566 = vrot.slane %v2247, 1
      %v2567 = vsel %vm1495, %v2565, %v2566
      %2568 = vrot.lane.b32.xlu0 %v2522, 24
      %v2569 = vpop.permute.xlu0 %2568
      %2570 = vrot.lane.b32.xlu0 %v2525, 24
      %v2571 = vpop.permute.xlu0 %2570
      %2572 = vrot.lane.b32.xlu0 %v2528, 24
      %v2573 = vpop.permute.xlu0 %2572
      %2574 = vrot.lane.b32.xlu0 %v2531, 24
      %v2575 = vpop.permute.xlu0 %2574
      %2576 = vrot.lane.b32.xlu0 %v2534, 24
      %v2577 = vpop.permute.xlu0 %2576
      %2578 = vrot.lane.b32.xlu0 %v2537, 24
      %v2579 = vpop.permute.xlu0 %2578
      %2580 = vrot.lane.b32.xlu0 %v2540, 24
      %v2581 = vpop.permute.xlu0 %2580
      %2582 = vrot.lane.b32.xlu0 %v2543, 24
      %v2583 = vpop.permute.xlu0 %2582
      %2584 = vrot.lane.b32.xlu0 %v2546, 24
      %v2585 = vpop.permute.xlu0 %2584
      %2586 = vrot.lane.b32.xlu0 %v2549, 24
      %v2587 = vpop.permute.xlu0 %2586
      %2588 = vrot.lane.b32.xlu0 %v2552, 24
      %v2589 = vpop.permute.xlu0 %2588
      %2590 = vrot.lane.b32.xlu0 %v2555, 24
      %v2591 = vpop.permute.xlu0 %2590
      %2592 = vrot.lane.b32.xlu0 %v2558, 24
      %v2593 = vpop.permute.xlu0 %2592
      %2594 = vrot.lane.b32.xlu0 %v2561, 24
      %v2595 = vpop.permute.xlu0 %2594
      %2596 = vrot.lane.b32.xlu0 %v2564, 24
      %v2597 = vpop.permute.xlu0 %2596
      %2598 = vrot.lane.b32.xlu0 %v2567, 24
      %v2599 = vpop.permute.xlu0 %2598
      %vm2600 = vcmask 23552
      %v2602 = vsel %vm2600, %v1158, %v1416
      %v2604 = vsel %vm2600, %v1159, %v1418
      %v2606 = vsel %vm2600, %v1160, %v1420
      %v2608 = vsel %vm2600, %v1161, %v1422
      %v2610 = vsel %vm2600, %v1162, %v1424
      %v2612 = vsel %vm2600, %v1163, %v1426
      %v2614 = vsel %vm2600, %v1164, %v1428
      %v2616 = vsel %vm2600, %v1165, %v1430
      %v2618 = vsel %vm2600, %v1166, %v1432
      %v2620 = vsel %vm2600, %v1167, %v1434
      %v2622 = vsel %vm2600, %v1168, %v1436
      %v2624 = vsel %vm2600, %v1169, %v1438
      %v2626 = vsel %vm2600, %v1170, %v1440
      %v2628 = vsel %vm2600, %v1171, %v1442
      %v2630 = vsel %vm2600, %v1172, %v1444
      %v2632 = vsel %vm2600, %v1173, %v1446
      %vm2633 = vcmask 48128
      %v2635 = vsel %vm2633, %v2602, %v1545
      %v2637 = vsel %vm2633, %v2604, %v1547
      %v2639 = vsel %vm2633, %v2606, %v1549
      %v2641 = vsel %vm2633, %v2608, %v1551
      %v2643 = vsel %vm2633, %v2610, %v1553
      %v2645 = vsel %vm2633, %v2612, %v1555
      %v2647 = vsel %vm2633, %v2614, %v1557
      %v2649 = vsel %vm2633, %v2616, %v1559
      %v2651 = vsel %vm2633, %v2618, %v1561
      %v2653 = vsel %vm2633, %v2620, %v1563
      %v2655 = vsel %vm2633, %v2622, %v1565
      %v2657 = vsel %vm2633, %v2624, %v1567
      %v2659 = vsel %vm2633, %v2626, %v1569
      %v2661 = vsel %vm2633, %v2628, %v1571
      %v2663 = vsel %vm2633, %v2630, %v1573
      %v2665 = vsel %vm2633, %v2632, %v1575
      %vm2666 = vcmask 72704
      %v2668 = vsel %vm2666, %v2635, %v1657
      %v2670 = vsel %vm2666, %v2637, %v1659
      %v2672 = vsel %vm2666, %v2639, %v1661
      %v2674 = vsel %vm2666, %v2641, %v1663
      %v2676 = vsel %vm2666, %v2643, %v1665
      %v2678 = vsel %vm2666, %v2645, %v1667
      %v2680 = vsel %vm2666, %v2647, %v1669
      %v2682 = vsel %vm2666, %v2649, %v1671
      %v2684 = vsel %vm2666, %v2651, %v1673
      %v2686 = vsel %vm2666, %v2653, %v1675
      %v2688 = vsel %vm2666, %v2655, %v1677
      %v2690 = vsel %vm2666, %v2657, %v1679
      %v2692 = vsel %vm2666, %v2659, %v1681
      %v2694 = vsel %vm2666, %v2661, %v1683
      %v2696 = vsel %vm2666, %v2663, %v1685
      %v2698 = vsel %vm2666, %v2665, %v1687
      %vm2699 = vcmask 97280
      %v2701 = vsel %vm2699, %v2668, %v1929
      %v2703 = vsel %vm2699, %v2670, %v1931
      %v2705 = vsel %vm2699, %v2672, %v1933
      %v2707 = vsel %vm2699, %v2674, %v1935
      %v2709 = vsel %vm2699, %v2676, %v1937
      %v2711 = vsel %vm2699, %v2678, %v1939
      %v2713 = vsel %vm2699, %v2680, %v1941
      %v2715 = vsel %vm2699, %v2682, %v1943
      %v2717 = vsel %vm2699, %v2684, %v1945
      %v2719 = vsel %vm2699, %v2686, %v1947
      %v2721 = vsel %vm2699, %v2688, %v1949
      %v2723 = vsel %vm2699, %v2690, %v1951
      %v2725 = vsel %vm2699, %v2692, %v1953
      %v2727 = vsel %vm2699, %v2694, %v1955
      %v2729 = vsel %vm2699, %v2696, %v1957
      %v2731 = vsel %vm2699, %v2698, %v1959
      %vm2732 = vcmask 121856
      %v2734 = vsel %vm2732, %v2701, %v2057
      %v2736 = vsel %vm2732, %v2703, %v2059
      %v2738 = vsel %vm2732, %v2705, %v2061
      %v2740 = vsel %vm2732, %v2707, %v2063
      %v2742 = vsel %vm2732, %v2709, %v2065
      %v2744 = vsel %vm2732, %v2711, %v2067
      %v2746 = vsel %vm2732, %v2713, %v2069
      %v2748 = vsel %vm2732, %v2715, %v2071
      %v2750 = vsel %vm2732, %v2717, %v2073
      %v2752 = vsel %vm2732, %v2719, %v2075
      %v2754 = vsel %vm2732, %v2721, %v2077
      %v2756 = vsel %vm2732, %v2723, %v2079
      %v2758 = vsel %vm2732, %v2725, %v2081
      %v2760 = vsel %vm2732, %v2727, %v2083
      %v2762 = vsel %vm2732, %v2729, %v2085
      %v2764 = vsel %vm2732, %v2731, %v2087
      %vm2765 = vcmask 146432
      %v2767 = vsel %vm2765, %v2734, %v2169
      %v2769 = vsel %vm2765, %v2736, %v2171
      %v2771 = vsel %vm2765, %v2738, %v2173
      %v2773 = vsel %vm2765, %v2740, %v2175
      %v2775 = vsel %vm2765, %v2742, %v2177
      %v2777 = vsel %vm2765, %v2744, %v2179
      %v2779 = vsel %vm2765, %v2746, %v2181
      %v2781 = vsel %vm2765, %v2748, %v2183
      %v2783 = vsel %vm2765, %v2750, %v2185
      %v2785 = vsel %vm2765, %v2752, %v2187
      %v2787 = vsel %vm2765, %v2754, %v2189
      %v2789 = vsel %vm2765, %v2756, %v2191
      %v2791 = vsel %vm2765, %v2758, %v2193
      %v2793 = vsel %vm2765, %v2760, %v2195
      %v2795 = vsel %vm2765, %v2762, %v2197
      %v2797 = vsel %vm2765, %v2764, %v2199
      %vm2798 = vcmask 171008
      %v2800 = vsel %vm2798, %v2767, %v2441
      %v2802 = vsel %vm2798, %v2769, %v2443
      %v2804 = vsel %vm2798, %v2771, %v2445
      %v2806 = vsel %vm2798, %v2773, %v2447
      %v2808 = vsel %vm2798, %v2775, %v2449
      %v2810 = vsel %vm2798, %v2777, %v2451
      %v2812 = vsel %vm2798, %v2779, %v2453
      %v2814 = vsel %vm2798, %v2781, %v2455
      %v2816 = vsel %vm2798, %v2783, %v2457
      %v2818 = vsel %vm2798, %v2785, %v2459
      %v2820 = vsel %vm2798, %v2787, %v2461
      %v2822 = vsel %vm2798, %v2789, %v2463
      %v2824 = vsel %vm2798, %v2791, %v2465
      %v2826 = vsel %vm2798, %v2793, %v2467
      %v2828 = vsel %vm2798, %v2795, %v2469
      %v2830 = vsel %vm2798, %v2797, %v2471
      %vm2831 = vcmask 195584
      %v2833 = vsel %vm2831, %v2800, %v2569
      %v2835 = vsel %vm2831, %v2802, %v2571
      %v2837 = vsel %vm2831, %v2804, %v2573
      %v2839 = vsel %vm2831, %v2806, %v2575
      %v2841 = vsel %vm2831, %v2808, %v2577
      %v2843 = vsel %vm2831, %v2810, %v2579
      %v2845 = vsel %vm2831, %v2812, %v2581
      %v2847 = vsel %vm2831, %v2814, %v2583
      %v2849 = vsel %vm2831, %v2816, %v2585
      %v2851 = vsel %vm2831, %v2818, %v2587
      %v2853 = vsel %vm2831, %v2820, %v2589
      %v2855 = vsel %vm2831, %v2822, %v2591
      %v2857 = vsel %vm2831, %v2824, %v2593
      %v2859 = vsel %vm2831, %v2826, %v2595
      %v2861 = vsel %vm2831, %v2828, %v2597
      %v2863 = vsel %vm2831, %v2830, %v2599
      %v2864 = vld [vmem:[%s1] sm:$0xf]
      %v2865 = vld [vmem:[%s1 + $0x4] sm:$0xf]
      %v2866 = vld [vmem:[%s1 + $0x8] sm:$0xf]
      %v2867 = vld [vmem:[%s1 + $0xc] sm:$0x3]
      %v2868 = vld [vmem:[%s2] sm:$0x1]
      %v2870 = vlaneseq
      %v2871 = vshrl.u32 %v2870, 7
      %v2872 = vsub.s32 0, %v2871
      %v2873 = vrot.slane %v2868, %v2872
      %v2879 = vunpack.c.l.b16 %v2864
      %v2880 = vunpack.c.l.b16 %v2865
      %v2881 = vunpack.c.l.b16 %v2866
      %v2882 = vunpack.c.l.b16 %v2867
      %v2883 = vpack.c.b16 %v2880, %v2879
      %v2884 = vpack.c.b16 %v2882, %v2881
      %vm2886 = vcmask 220160
      %v2887 = vsel %vm2886, %v2833, 0
      %v2889 = vsel %vm2886, %v2835, 0
      %v2891 = vsel %vm2886, %v2837, 0
      %v2893 = vsel %vm2886, %v2839, 0
      %v2895 = vsel %vm2886, %v2841, 0
      %v2897 = vsel %vm2886, %v2843, 0
      %v2899 = vsel %vm2886, %v2845, 0
      %v2901 = vsel %vm2886, %v2847, 0
      %v2903 = vsel %vm2886, %v2849, 0
      %v2905 = vsel %vm2886, %v2851, 0
      %v2907 = vsel %vm2886, %v2853, 0
      %v2909 = vsel %vm2886, %v2855, 0
      %v2911 = vsel %vm2886, %v2857, 0
      %v2913 = vsel %vm2886, %v2859, 0
      %v2915 = vsel %vm2886, %v2861, 0
      %v2917 = vsel %vm2886, %v2863, 0
      %vm2919 = vcmask 1044480
      %vm2920 = vcmask 1045504
      %v2921 = vsel %vm2919, 4294967295, 65535
      %v2922 = vsel %vm2920, %v2921, 0
      %v2924 = vand.u32 %v2884, %v2922
      %2926 = vmatprep.subr.bf16.mxu0 0
      %2927 = vmatpush1.bf16.msra.mxu0 %v2883
      %2928 = vmatprep.subr.bf16.mxu0 0
      %2929 = vmatpush1.bf16.msra.mxu0 %v2924
      %2930 = vmatprep.subr.bf16.mxu0 0
      %2931 = vmatpush1.bf16.msra.mxu0 0
      %2932 = vmatprep.subr.bf16.mxu0 0
      %2933 = vmatpush1.bf16.msra.mxu0 0
      %2934 = vmatprep.subr.bf16.mxu0 0
      %2935 = vmatpush1.bf16.msra.mxu0 0
      %2936 = vmatprep.subr.bf16.mxu0 0
      %2937 = vmatpush1.bf16.msra.mxu0 0
      %2938 = vmatprep.subr.bf16.mxu0 0
      %2939 = vmatpush1.bf16.msra.mxu0 0
      %2940 = vmatprep.subr.bf16.mxu0 0
      %2941 = vmatpush1.bf16.msra.mxu0 0
      %2942 = vmatprep.subr.bf16.mxu0 0
      %2943 = vmatpush1.bf16.msra.mxu0 0
      %2944 = vmatprep.subr.bf16.mxu0 0
      %2945 = vmatpush1.bf16.msra.mxu0 0
      %2946 = vmatprep.subr.bf16.mxu0 0
      %2947 = vmatpush1.bf16.msra.mxu0 0
      %2948 = vmatprep.subr.bf16.mxu0 0
      %2949 = vmatpush1.bf16.msra.mxu0 0
      %2950 = vmatprep.subr.bf16.mxu0 0
      %2951 = vmatpush1.bf16.msra.mxu0 0
      %2952 = vmatprep.subr.bf16.mxu0 0
      %2953 = vmatpush1.bf16.msra.mxu0 0
      %2954 = vmatprep.subr.bf16.mxu0 0
      %2955 = vmatpush1.bf16.msra.mxu0 0
      %2956 = vmatprep.subr.bf16.mxu0 0
      %2957 = vmatpush1.bf16.msra.mxu0 0
      %2958 = vmatprep.mubr.bf16.mxu0 0
      %2959 = vmatmul.mubr.bf16.gmra.mrb[0].mxu0 %v2887
      %v2960 = vpop.f32.mrb[0].mxu0
      %v2961 = vadd.f32 %v2873, %v2960
      %v2962 = vpop.f32.mrb[0].mxu0
      %v2963 = vpop.f32.mrb[0].mxu0
      %v2964 = vadd.f32 %v2873, %v2963
      %v2965 = vpop.f32.mrb[0].mxu0
      %2966 = vmatprep.mubr.bf16.mxu0 0
      %2967 = vmatmul.mubr.bf16.gmra.mrb[0].mxu0 %v2889
      %v2968 = vpop.f32.mrb[0].mxu0
      %v2969 = vadd.f32 %v2873, %v2968
      %v2970 = vpop.f32.mrb[0].mxu0
      %v2971 = vpop.f32.mrb[0].mxu0
      %v2972 = vadd.f32 %v2873, %v2971
      %v2973 = vpop.f32.mrb[0].mxu0
      %2974 = vmatprep.mubr.bf16.mxu0 0
      %2975 = vmatmul.mubr.bf16.gmra.mrb[0].mxu0 %v2891
      %v2976 = vpop.f32.mrb[0].mxu0
      %v2977 = vadd.f32 %v2873, %v2976
      %v2978 = vpop.f32.mrb[0].mxu0
      %v2979 = vpop.f32.mrb[0].mxu0
      %v2980 = vadd.f32 %v2873, %v2979
      %v2981 = vpop.f32.mrb[0].mxu0
      %2982 = vmatprep.mubr.bf16.mxu0 0
      %2983 = vmatmul.mubr.bf16.gmra.mrb[0].mxu0 %v2893
      %v2984 = vpop.f32.mrb[0].mxu0
      %v2985 = vadd.f32 %v2873, %v2984
      %v2986 = vpop.f32.mrb[0].mxu0
      %v2987 = vpop.f32.mrb[0].mxu0
      %v2988 = vadd.f32 %v2873, %v2987
      %v2989 = vpop.f32.mrb[0].mxu0
      %2990 = vmatprep.mubr.bf16.mxu0 0
      %2991 = vmatmul.mubr.bf16.gmra.mrb[0].mxu0 %v2895
      %v2992 = vpop.f32.mrb[0].mxu0
      %v2993 = vadd.f32 %v2873, %v2992
      %v2994 = vpop.f32.mrb[0].mxu0
      %v2995 = vpop.f32.mrb[0].mxu0
      %v2996 = vadd.f32 %v2873, %v2995
      %v2997 = vpop.f32.mrb[0].mxu0
      %2998 = vmatprep.mubr.bf16.mxu0 0
      %2999 = vmatmul.mubr.bf16.gmra.mrb[0].mxu0 %v2897
      %v3000 = vpop.f32.mrb[0].mxu0
      %v3001 = vadd.f32 %v2873, %v3000
      %v3002 = vpop.f32.mrb[0].mxu0
      %v3003 = vpop.f32.mrb[0].mxu0
      %v3004 = vadd.f32 %v2873, %v3003
      %v3005 = vpop.f32.mrb[0].mxu0
      %3006 = vmatprep.mubr.bf16.mxu0 0
      %3007 = vmatmul.mubr.bf16.gmra.mrb[0].mxu0 %v2899
      %v3008 = vpop.f32.mrb[0].mxu0
      %v3009 = vadd.f32 %v2873, %v3008
      %v3010 = vpop.f32.mrb[0].mxu0
      %v3011 = vpop.f32.mrb[0].mxu0
      %v3012 = vadd.f32 %v2873, %v3011
      %v3013 = vpop.f32.mrb[0].mxu0
      %3014 = vmatprep.mubr.bf16.mxu0 0
      %3015 = vmatmul.mubr.bf16.gmra.mrb[0].mxu0 %v2901
      %v3016 = vpop.f32.mrb[0].mxu0
      %v3017 = vadd.f32 %v2873, %v3016
      %v3018 = vpop.f32.mrb[0].mxu0
      %v3019 = vpop.f32.mrb[0].mxu0
      %v3020 = vadd.f32 %v2873, %v3019
      %v3021 = vpop.f32.mrb[0].mxu0
      %3022 = vmatprep.mubr.bf16.mxu0 0
      %3023 = vmatmul.mubr.bf16.gmra.mrb[0].mxu0 %v2903
      %v3024 = vpop.f32.mrb[0].mxu0
      %v3025 = vadd.f32 %v2873, %v3024
      %v3026 = vpop.f32.mrb[0].mxu0
      %v3027 = vpop.f32.mrb[0].mxu0
      %v3028 = vadd.f32 %v2873, %v3027
      %v3029 = vpop.f32.mrb[0].mxu0
      %3030 = vmatprep.mubr.bf16.mxu0 0
      %3031 = vmatmul.mubr.bf16.gmra.mrb[0].mxu0 %v2905
      %v3032 = vpop.f32.mrb[0].mxu0
      %v3033 = vadd.f32 %v2873, %v3032
      %v3034 = vpop.f32.mrb[0].mxu0
      %v3035 = vpop.f32.mrb[0].mxu0
      %v3036 = vadd.f32 %v2873, %v3035
      %v3037 = vpop.f32.mrb[0].mxu0
      %3038 = vmatprep.mubr.bf16.mxu0 0
      %3039 = vmatmul.mubr.bf16.gmra.mrb[0].mxu0 %v2907
      %v3040 = vpop.f32.mrb[0].mxu0
      %v3041 = vadd.f32 %v2873, %v3040
      %v3042 = vpop.f32.mrb[0].mxu0
      %v3043 = vpop.f32.mrb[0].mxu0
      %v3044 = vadd.f32 %v2873, %v3043
      %v3045 = vpop.f32.mrb[0].mxu0
      %3046 = vmatprep.mubr.bf16.mxu0 0
      %3047 = vmatmul.mubr.bf16.gmra.mrb[0].mxu0 %v2909
      %v3048 = vpop.f32.mrb[0].mxu0
      %v3049 = vadd.f32 %v2873, %v3048
      %v3050 = vpop.f32.mrb[0].mxu0
      %v3051 = vpop.f32.mrb[0].mxu0
      %v3052 = vadd.f32 %v2873, %v3051
      %v3053 = vpop.f32.mrb[0].mxu0
      %3054 = vmatprep.mubr.bf16.mxu0 0
      %3055 = vmatmul.mubr.bf16.gmra.mrb[0].mxu0 %v2911
      %v3056 = vpop.f32.mrb[0].mxu0
      %v3057 = vadd.f32 %v2873, %v3056
      %v3058 = vpop.f32.mrb[0].mxu0
      %v3059 = vpop.f32.mrb[0].mxu0
      %v3060 = vadd.f32 %v2873, %v3059
      %v3061 = vpop.f32.mrb[0].mxu0
      %3062 = vmatprep.mubr.bf16.mxu0 0
      %3063 = vmatmul.mubr.bf16.gmra.mrb[0].mxu0 %v2913
      %v3064 = vpop.f32.mrb[0].mxu0
      %v3065 = vadd.f32 %v2873, %v3064
      %v3066 = vpop.f32.mrb[0].mxu0
      %v3067 = vpop.f32.mrb[0].mxu0
      %v3068 = vadd.f32 %v2873, %v3067
      %v3069 = vpop.f32.mrb[0].mxu0
      %3070 = vmatprep.mubr.bf16.mxu0 0
      %3071 = vmatmul.mubr.bf16.gmra.mrb[0].mxu0 %v2915
      %v3072 = vpop.f32.mrb[0].mxu0
      %v3073 = vadd.f32 %v2873, %v3072
      %v3074 = vpop.f32.mrb[0].mxu0
      %v3075 = vpop.f32.mrb[0].mxu0
      %v3076 = vadd.f32 %v2873, %v3075
      %v3077 = vpop.f32.mrb[0].mxu0
      %3078 = vmatprep.mubr.bf16.mxu0 0
      %3079 = vmatmul.mubr.bf16.gmra.mrb[0].mxu0 %v2917
      %v3080 = vpop.f32.mrb[0].mxu0
      %v3081 = vadd.f32 %v2873, %v3080
      %v3082 = vpop.f32.mrb[0].mxu0
      %v3083 = vpop.f32.mrb[0].mxu0
      %v3084 = vadd.f32 %v2873, %v3083
      %v3085 = vpop.f32.mrb[0].mxu0
      %3086 = vdwg.mxu0
      %v3087 = vmax.f32 %v2961, 0.0
      %v3088 = vmax.f32 %v2964, 0.0
      %v3089 = vmax.f32 %v2969, 0.0
      %v3090 = vmax.f32 %v2972, 0.0
      %v3091 = vmax.f32 %v2977, 0.0
      %v3092 = vmax.f32 %v2980, 0.0
      %v3093 = vmax.f32 %v2985, 0.0
      %v3094 = vmax.f32 %v2988, 0.0
      %v3095 = vmax.f32 %v2993, 0.0
      %v3096 = vmax.f32 %v2996, 0.0
      %v3097 = vmax.f32 %v3001, 0.0
      %v3098 = vmax.f32 %v3004, 0.0
      %v3099 = vmax.f32 %v3009, 0.0
      %v3100 = vmax.f32 %v3012, 0.0
      %v3101 = vmax.f32 %v3017, 0.0
      %v3102 = vmax.f32 %v3020, 0.0
      %v3103 = vmax.f32 %v3025, 0.0
      %v3104 = vmax.f32 %v3028, 0.0
      %v3105 = vmax.f32 %v3033, 0.0
      %v3106 = vmax.f32 %v3036, 0.0
      %v3107 = vmax.f32 %v3041, 0.0
      %v3108 = vmax.f32 %v3044, 0.0
      %v3109 = vmax.f32 %v3049, 0.0
      %v3110 = vmax.f32 %v3052, 0.0
      %v3111 = vmax.f32 %v3057, 0.0
      %v3112 = vmax.f32 %v3060, 0.0
      %v3113 = vmax.f32 %v3065, 0.0
      %v3114 = vmax.f32 %v3068, 0.0
      %v3115 = vmax.f32 %v3073, 0.0
      %v3116 = vmax.f32 %v3076, 0.0
      %v3117 = vmax.f32 %v3081, 0.0
      %v3118 = vmax.f32 %v3084, 0.0
      %v3119 = vpack.c.bf16 %v3088, %v3087
      %v3120 = vpack.c.bf16 %v3090, %v3089
      %v3121 = vpack.c.bf16 %v3092, %v3091
      %v3122 = vpack.c.bf16 %v3094, %v3093
      %v3123 = vpack.c.bf16 %v3096, %v3095
      %v3124 = vpack.c.bf16 %v3098, %v3097
      %v3125 = vpack.c.bf16 %v3100, %v3099
      %v3126 = vpack.c.bf16 %v3102, %v3101
      %v3127 = vpack.c.bf16 %v3104, %v3103
      %v3128 = vpack.c.bf16 %v3106, %v3105
      %v3129 = vpack.c.bf16 %v3108, %v3107
      %v3130 = vpack.c.bf16 %v3110, %v3109
      %v3131 = vpack.c.bf16 %v3112, %v3111
      %v3132 = vpack.c.bf16 %v3114, %v3113
      %v3133 = vpack.c.bf16 %v3116, %v3115
      %v3134 = vpack.c.bf16 %v3118, %v3117
      %vm3135 = vcmask 257024
      %3136 = vst.msk [vmem:[#allocation3] sm:$0xf] %vm3135, 0
      %3137 = vst.msk [vmem:[#allocation3 + $0x4] sm:$0xf] %vm3135, 0
      %vm3138 = vcmask 253952
      %3139 = vst.msk [vmem:[#allocation3 + $0x8] sm:$0x1] %vm3138, 0
      %s3140 = scalar_lea.vmem [#allocation3], 204
      %3141 = vst.msk [vmem:[%s3140] sm:$0xf] %vm3135, 0
      %3142 = vst.msk [vmem:[%s3140 + $0x4] sm:$0xf] %vm3135, 0
      %3143 = vst.msk [vmem:[%s3140 + $0x8] sm:$0x1] %vm3138, 0
      %s3144 = scalar_lea.vmem [#allocation3], 12
      %vm3145 = vcmask 253952
      %vm3146 = vmand %vm3145, %vm285
      %v3147 = vld [vmem:[%s3144] sm:$0x1]
      %v3148 = vsel %vm3146, 0, %v3147
      %3149 = vst [vmem:[%s3144] sm:$0x1] %v3148
      %v3150 = vld [vmem:[%s3144 + $0xc] sm:$0x1]
      %v3151 = vsel %vm3146, 0, %v3150
      %3152 = vst [vmem:[%s3144 + $0xc] sm:$0x1] %v3151
      %v3153 = vld [vmem:[%s3144 + $0x18] sm:$0x1]
      %v3154 = vsel %vm3146, 0, %v3153
      %3155 = vst [vmem:[%s3144 + $0x18] sm:$0x1] %v3154
      %v3156 = vld [vmem:[%s3144 + $0x24] sm:$0x1]
      %v3157 = vsel %vm3146, 0, %v3156
      %3158 = vst [vmem:[%s3144 + $0x24] sm:$0x1] %v3157
      %v3159 = vld [vmem:[%s3144 + $0x30] sm:$0x1]
      %v3160 = vsel %vm3146, 0, %v3159
      %3161 = vst [vmem:[%s3144 + $0x30] sm:$0x1] %v3160
      %v3162 = vld [vmem:[%s3144 + $0x3c] sm:$0x1]
      %v3163 = vsel %vm3146, 0, %v3162
      %3164 = vst [vmem:[%s3144 + $0x3c] sm:$0x1] %v3163
      %v3165 = vld [vmem:[%s3144 + $0x48] sm:$0x1]
      %v3166 = vsel %vm3146, 0, %v3165
      %3167 = vst [vmem:[%s3144 + $0x48] sm:$0x1] %v3166
      %v3168 = vld [vmem:[%s3144 + $0x54] sm:$0x1]
      %v3169 = vsel %vm3146, 0, %v3168
      %3170 = vst [vmem:[%s3144 + $0x54] sm:$0x1] %v3169
      %v3171 = vld [vmem:[%s3144 + $0x60] sm:$0x1]
      %v3172 = vsel %vm3146, 0, %v3171
      %3173 = vst [vmem:[%s3144 + $0x60] sm:$0x1] %v3172
      %v3174 = vld [vmem:[%s3144 + $0x6c] sm:$0x1]
      %v3175 = vsel %vm3146, 0, %v3174
      %3176 = vst [vmem:[%s3144 + $0x6c] sm:$0x1] %v3175
      %v3177 = vld [vmem:[%s3144 + $0x78] sm:$0x1]
      %v3178 = vsel %vm3146, 0, %v3177
      %3179 = vst [vmem:[%s3144 + $0x78] sm:$0x1] %v3178
      %v3180 = vld [vmem:[%s3144 + $0x84] sm:$0x1]
      %v3181 = vsel %vm3146, 0, %v3180
      %3182 = vst [vmem:[%s3144 + $0x84] sm:$0x1] %v3181
      %v3183 = vld [vmem:[%s3144 + $0x90] sm:$0x1]
      %v3184 = vsel %vm3146, 0, %v3183
      %3185 = vst [vmem:[%s3144 + $0x90] sm:$0x1] %v3184
      %v3186 = vld [vmem:[%s3144 + $0x9c] sm:$0x1]
      %v3187 = vsel %vm3146, 0, %v3186
      %3188 = vst [vmem:[%s3144 + $0x9c] sm:$0x1] %v3187
      %v3189 = vld [vmem:[%s3144 + $0xa8] sm:$0x1]
      %v3190 = vsel %vm3146, 0, %v3189
      %3191 = vst [vmem:[%s3144 + $0xa8] sm:$0x1] %v3190
      %v3192 = vld [vmem:[%s3144 + $0xb4] sm:$0x1]
      %v3193 = vsel %vm3146, 0, %v3192
      %3194 = vst [vmem:[%s3144 + $0xb4] sm:$0x1] %v3193
      %vm3195 = vmand %vm3145, %vm335
      %v3196 = vld [vmem:[%s3144 + $0x8] sm:$0x1]
      %v3197 = vsel %vm3195, 0, %v3196
      %3198 = vst [vmem:[%s3144 + $0x8] sm:$0x1] %v3197
      %v3199 = vld [vmem:[%s3144 + $0x14] sm:$0x1]
      %v3200 = vsel %vm3195, 0, %v3199
      %3201 = vst [vmem:[%s3144 + $0x14] sm:$0x1] %v3200
      %v3202 = vld [vmem:[%s3144 + $0x20] sm:$0x1]
      %v3203 = vsel %vm3195, 0, %v3202
      %3204 = vst [vmem:[%s3144 + $0x20] sm:$0x1] %v3203
      %v3205 = vld [vmem:[%s3144 + $0x2c] sm:$0x1]
      %v3206 = vsel %vm3195, 0, %v3205
      %3207 = vst [vmem:[%s3144 + $0x2c] sm:$0x1] %v3206
      %v3208 = vld [vmem:[%s3144 + $0x38] sm:$0x1]
      %v3209 = vsel %vm3195, 0, %v3208
      %3210 = vst [vmem:[%s3144 + $0x38] sm:$0x1] %v3209
      %v3211 = vld [vmem:[%s3144 + $0x44] sm:$0x1]
      %v3212 = vsel %vm3195, 0, %v3211
      %3213 = vst [vmem:[%s3144 + $0x44] sm:$0x1] %v3212
      %v3214 = vld [vmem:[%s3144 + $0x50] sm:$0x1]
      %v3215 = vsel %vm3195, 0, %v3214
      %3216 = vst [vmem:[%s3144 + $0x50] sm:$0x1] %v3215
      %v3217 = vld [vmem:[%s3144 + $0x5c] sm:$0x1]
      %v3218 = vsel %vm3195, 0, %v3217
      %3219 = vst [vmem:[%s3144 + $0x5c] sm:$0x1] %v3218
      %v3220 = vld [vmem:[%s3144 + $0x68] sm:$0x1]
      %v3221 = vsel %vm3195, 0, %v3220
      %3222 = vst [vmem:[%s3144 + $0x68] sm:$0x1] %v3221
      %v3223 = vld [vmem:[%s3144 + $0x74] sm:$0x1]
      %v3224 = vsel %vm3195, 0, %v3223
      %3225 = vst [vmem:[%s3144 + $0x74] sm:$0x1] %v3224
      %v3226 = vld [vmem:[%s3144 + $0x80] sm:$0x1]
      %v3227 = vsel %vm3195, 0, %v3226
      %3228 = vst [vmem:[%s3144 + $0x80] sm:$0x1] %v3227
      %v3229 = vld [vmem:[%s3144 + $0x8c] sm:$0x1]
      %v3230 = vsel %vm3195, 0, %v3229
      %3231 = vst [vmem:[%s3144 + $0x8c] sm:$0x1] %v3230
      %v3232 = vld [vmem:[%s3144 + $0x98] sm:$0x1]
      %v3233 = vsel %vm3195, 0, %v3232
      %3234 = vst [vmem:[%s3144 + $0x98] sm:$0x1] %v3233
      %v3235 = vld [vmem:[%s3144 + $0xa4] sm:$0x1]
      %v3236 = vsel %vm3195, 0, %v3235
      %3237 = vst [vmem:[%s3144 + $0xa4] sm:$0x1] %v3236
      %v3238 = vld [vmem:[%s3144 + $0xb0] sm:$0x1]
      %v3239 = vsel %vm3195, 0, %v3238
      %3240 = vst [vmem:[%s3144 + $0xb0] sm:$0x1] %v3239
      %v3241 = vld [vmem:[%s3144 + $0xbc] sm:$0x1]
      %v3242 = vsel %vm3195, 0, %v3241
      %3243 = vst [vmem:[%s3144 + $0xbc] sm:$0x1] %v3242
      %v3260 = vunpack.c.l.b16 %v3119
      %v3261 = vunpack.c.h.b16 %v3119
      %v3262 = vunpack.c.l.b16 %v3120
      %v3263 = vunpack.c.h.b16 %v3120
      %v3264 = vunpack.c.l.b16 %v3121
      %v3265 = vunpack.c.h.b16 %v3121
      %v3266 = vunpack.c.l.b16 %v3122
      %v3267 = vunpack.c.h.b16 %v3122
      %v3268 = vunpack.c.l.b16 %v3123
      %v3269 = vunpack.c.h.b16 %v3123
      %v3270 = vunpack.c.l.b16 %v3124
      %v3271 = vunpack.c.h.b16 %v3124
      %v3272 = vunpack.c.l.b16 %v3125
      %v3273 = vunpack.c.h.b16 %v3125
      %v3274 = vunpack.c.l.b16 %v3126
      %v3275 = vunpack.c.h.b16 %v3126
      %v3276 = vunpack.c.l.b16 %v3127
      %v3277 = vunpack.c.h.b16 %v3127
      %v3278 = vunpack.c.l.b16 %v3128
      %v3279 = vunpack.c.h.b16 %v3128
      %v3280 = vunpack.c.l.b16 %v3129
      %v3281 = vunpack.c.h.b16 %v3129
      %v3282 = vunpack.c.l.b16 %v3130
      %v3283 = vunpack.c.h.b16 %v3130
      %v3284 = vunpack.c.l.b16 %v3131
      %v3285 = vunpack.c.h.b16 %v3131
      %v3286 = vunpack.c.l.b16 %v3132
      %v3287 = vunpack.c.h.b16 %v3132
      %v3288 = vunpack.c.l.b16 %v3133
      %v3289 = vunpack.c.h.b16 %v3133
      %v3290 = vunpack.c.l.b16 %v3134
      %v3291 = vunpack.c.h.b16 %v3134
      %v3292 = vpack.c.b16 %v3260, %v3260
      %v3293 = vpack.c.b16 %v3261, %v3261
      %v3294 = vpack.c.b16 %v3262, %v3262
      %v3295 = vpack.c.b16 %v3263, %v3263
      %v3296 = vpack.c.b16 %v3264, %v3264
      %v3297 = vpack.c.b16 %v3265, %v3265
      %v3298 = vpack.c.b16 %v3266, %v3266
      %v3299 = vpack.c.b16 %v3267, %v3267
      %v3300 = vpack.c.b16 %v3268, %v3268
      %v3301 = vpack.c.b16 %v3269, %v3269
      %v3302 = vpack.c.b16 %v3270, %v3270
      %v3303 = vpack.c.b16 %v3271, %v3271
      %v3304 = vpack.c.b16 %v3272, %v3272
      %v3305 = vpack.c.b16 %v3273, %v3273
      %v3306 = vpack.c.b16 %v3274, %v3274
      %v3307 = vpack.c.b16 %v3275, %v3275
      %v3308 = vpack.c.b16 %v3276, %v3276
      %v3309 = vpack.c.b16 %v3277, %v3277
      %v3310 = vpack.c.b16 %v3278, %v3278
      %v3311 = vpack.c.b16 %v3279, %v3279
      %v3312 = vpack.c.b16 %v3280, %v3280
      %v3313 = vpack.c.b16 %v3281, %v3281
      %v3314 = vpack.c.b16 %v3282, %v3282
      %v3315 = vpack.c.b16 %v3283, %v3283
      %v3316 = vpack.c.b16 %v3284, %v3284
      %v3317 = vpack.c.b16 %v3285, %v3285
      %v3318 = vpack.c.b16 %v3286, %v3286
      %v3319 = vpack.c.b16 %v3287, %v3287
      %v3320 = vpack.c.b16 %v3288, %v3288
      %v3321 = vpack.c.b16 %v3289, %v3289
      %v3322 = vpack.c.b16 %v3290, %v3290
      %v3323 = vpack.c.b16 %v3291, %v3291
      %v3325 = vshrl.u32 %v3292, 16
      %v3327 = vrot.slane %v3325, 7
      %v3328 = vshll.u32 %v3292, 16
      %v3330 = vor.u32 %v3327, %v3328
      %v3331 = vrot.slane %v3327, 4
      %v3333 = vshrl.u32 %v3293, 16
      %v3335 = vrot.slane %v3333, 7
      %v3336 = vshll.u32 %v3293, 16
      %v3338 = vor.u32 %v3335, %v3336
      %v3339 = vsel %vm466, %v3331, %v3338
      %v3340 = vrot.slane %v3335, 4
      %v3342 = vshrl.u32 %v3294, 16
      %v3344 = vrot.slane %v3342, 7
      %v3345 = vshll.u32 %v3294, 16
      %v3347 = vor.u32 %v3344, %v3345
      %v3348 = vrot.slane %v3344, 4
      %v3350 = vshrl.u32 %v3295, 16
      %v3352 = vrot.slane %v3350, 7
      %v3353 = vshll.u32 %v3295, 16
      %v3355 = vor.u32 %v3352, %v3353
      %v3356 = vsel %vm466, %v3348, %v3355
      %v3357 = vrot.slane %v3352, 4
      %v3359 = vshrl.u32 %v3296, 16
      %v3361 = vrot.slane %v3359, 7
      %v3362 = vshll.u32 %v3296, 16
      %v3364 = vor.u32 %v3361, %v3362
      %v3365 = vrot.slane %v3361, 4
      %v3367 = vshrl.u32 %v3297, 16
      %v3369 = vrot.slane %v3367, 7
      %v3370 = vshll.u32 %v3297, 16
      %v3372 = vor.u32 %v3369, %v3370
      %v3373 = vsel %vm466, %v3365, %v3372
      %v3374 = vrot.slane %v3369, 4
      %v3376 = vshrl.u32 %v3298, 16
      %v3378 = vrot.slane %v3376, 7
      %v3379 = vshll.u32 %v3298, 16
      %v3381 = vor.u32 %v3378, %v3379
      %v3382 = vrot.slane %v3378, 4
      %v3384 = vshrl.u32 %v3299, 16
      %v3386 = vrot.slane %v3384, 7
      %v3387 = vshll.u32 %v3299, 16
      %v3389 = vor.u32 %v3386, %v3387
      %v3390 = vsel %vm466, %v3382, %v3389
      %v3391 = vrot.slane %v3386, 4
      %v3393 = vshrl.u32 %v3300, 16
      %v3395 = vrot.slane %v3393, 7
      %v3396 = vshll.u32 %v3300, 16
      %v3398 = vor.u32 %v3395, %v3396
      %v3399 = vrot.slane %v3395, 4
      %v3401 = vshrl.u32 %v3301, 16
      %v3403 = vrot.slane %v3401, 7
      %v3404 = vshll.u32 %v3301, 16
      %v3406 = vor.u32 %v3403, %v3404
      %v3407 = vsel %vm466, %v3399, %v3406
      %v3408 = vrot.slane %v3403, 4
      %v3410 = vshrl.u32 %v3302, 16
      %v3412 = vrot.slane %v3410, 7
      %v3413 = vshll.u32 %v3302, 16
      %v3415 = vor.u32 %v3412, %v3413
      %v3416 = vrot.slane %v3412, 4
      %v3418 = vshrl.u32 %v3303, 16
      %v3420 = vrot.slane %v3418, 7
      %v3421 = vshll.u32 %v3303, 16
      %v3423 = vor.u32 %v3420, %v3421
      %v3424 = vsel %vm466, %v3416, %v3423
      %v3425 = vrot.slane %v3420, 4
      %v3427 = vshrl.u32 %v3304, 16
      %v3429 = vrot.slane %v3427, 7
      %v3430 = vshll.u32 %v3304, 16
      %v3432 = vor.u32 %v3429, %v3430
      %v3433 = vrot.slane %v3429, 4
      %v3435 = vshrl.u32 %v3305, 16
      %v3437 = vrot.slane %v3435, 7
      %v3438 = vshll.u32 %v3305, 16
      %v3440 = vor.u32 %v3437, %v3438
      %v3441 = vsel %vm466, %v3433, %v3440
      %v3442 = vrot.slane %v3437, 4
      %v3444 = vshrl.u32 %v3306, 16
      %v3446 = vrot.slane %v3444, 7
      %v3447 = vshll.u32 %v3306, 16
      %v3449 = vor.u32 %v3446, %v3447
      %v3450 = vrot.slane %v3446, 4
      %v3452 = vshrl.u32 %v3307, 16
      %v3454 = vrot.slane %v3452, 7
      %v3455 = vshll.u32 %v3307, 16
      %v3457 = vor.u32 %v3454, %v3455
      %v3458 = vsel %vm466, %v3450, %v3457
      %v3459 = vrot.slane %v3454, 4
      %v3461 = vshrl.u32 %v3308, 16
      %v3463 = vrot.slane %v3461, 7
      %v3464 = vshll.u32 %v3308, 16
      %v3466 = vor.u32 %v3463, %v3464
      %v3467 = vrot.slane %v3463, 4
      %v3469 = vshrl.u32 %v3309, 16
      %v3471 = vrot.slane %v3469, 7
      %v3472 = vshll.u32 %v3309, 16
      %v3474 = vor.u32 %v3471, %v3472
      %v3475 = vsel %vm466, %v3467, %v3474
      %v3476 = vrot.slane %v3471, 4
      %v3478 = vshrl.u32 %v3310, 16
      %v3480 = vrot.slane %v3478, 7
      %v3481 = vshll.u32 %v3310, 16
      %v3483 = vor.u32 %v3480, %v3481
      %v3484 = vrot.slane %v3480, 4
      %v3486 = vshrl.u32 %v3311, 16
      %v3488 = vrot.slane %v3486, 7
      %v3489 = vshll.u32 %v3311, 16
      %v3491 = vor.u32 %v3488, %v3489
      %v3492 = vsel %vm466, %v3484, %v3491
      %v3493 = vrot.slane %v3488, 4
      %v3495 = vshrl.u32 %v3312, 16
      %v3497 = vrot.slane %v3495, 7
      %v3498 = vshll.u32 %v3312, 16
      %v3500 = vor.u32 %v3497, %v3498
      %v3501 = vrot.slane %v3497, 4
      %v3503 = vshrl.u32 %v3313, 16
      %v3505 = vrot.slane %v3503, 7
      %v3506 = vshll.u32 %v3313, 16
      %v3508 = vor.u32 %v3505, %v3506
      %v3509 = vsel %vm466, %v3501, %v3508
      %v3510 = vrot.slane %v3505, 4
      %v3512 = vshrl.u32 %v3314, 16
      %v3514 = vrot.slane %v3512, 7
      %v3515 = vshll.u32 %v3314, 16
      %v3517 = vor.u32 %v3514, %v3515
      %v3518 = vrot.slane %v3514, 4
      %v3520 = vshrl.u32 %v3315, 16
      %v3522 = vrot.slane %v3520, 7
      %v3523 = vshll.u32 %v3315, 16
      %v3525 = vor.u32 %v3522, %v3523
      %v3526 = vsel %vm466, %v3518, %v3525
      %v3527 = vrot.slane %v3522, 4
      %v3529 = vshrl.u32 %v3316, 16
      %v3531 = vrot.slane %v3529, 7
      %v3532 = vshll.u32 %v3316, 16
      %v3534 = vor.u32 %v3531, %v3532
      %v3535 = vrot.slane %v3531, 4
      %v3537 = vshrl.u32 %v3317, 16
      %v3539 = vrot.slane %v3537, 7
      %v3540 = vshll.u32 %v3317, 16
      %v3542 = vor.u32 %v3539, %v3540
      %v3543 = vsel %vm466, %v3535, %v3542
      %v3544 = vrot.slane %v3539, 4
      %v3546 = vshrl.u32 %v3318, 16
      %v3548 = vrot.slane %v3546, 7
      %v3549 = vshll.u32 %v3318, 16
      %v3551 = vor.u32 %v3548, %v3549
      %v3552 = vrot.slane %v3548, 4
      %v3554 = vshrl.u32 %v3319, 16
      %v3556 = vrot.slane %v3554, 7
      %v3557 = vshll.u32 %v3319, 16
      %v3559 = vor.u32 %v3556, %v3557
      %v3560 = vsel %vm466, %v3552, %v3559
      %v3561 = vrot.slane %v3556, 4
      %v3563 = vshrl.u32 %v3320, 16
      %v3565 = vrot.slane %v3563, 7
      %v3566 = vshll.u32 %v3320, 16
      %v3568 = vor.u32 %v3565, %v3566
      %v3569 = vrot.slane %v3565, 4
      %v3571 = vshrl.u32 %v3321, 16
      %v3573 = vrot.slane %v3571, 7
      %v3574 = vshll.u32 %v3321, 16
      %v3576 = vor.u32 %v3573, %v3574
      %v3577 = vsel %vm466, %v3569, %v3576
      %v3578 = vrot.slane %v3573, 4
      %v3580 = vshrl.u32 %v3322, 16
      %v3582 = vrot.slane %v3580, 7
      %v3583 = vshll.u32 %v3322, 16
      %v3585 = vor.u32 %v3582, %v3583
      %v3586 = vrot.slane %v3582, 4
      %v3588 = vshrl.u32 %v3323, 16
      %v3590 = vrot.slane %v3588, 7
      %v3591 = vshll.u32 %v3323, 16
      %v3593 = vor.u32 %v3590, %v3591
      %v3594 = vsel %vm466, %v3586, %v3593
      %v3595 = vrot.slane %v3590, 4
      %vm3644 = vcmask 257024
      %vm3645 = vmand %vm3644, %vm335
      %v3646 = vld [vmem:[%s3144] sm:$0xf]
      %v3647 = vsel %vm3645, %v3330, %v3646
      %3648 = vst [vmem:[%s3144] sm:$0xf] %v3647
      %3649 = vst.msk [vmem:[%s3144 + $0x4] sm:$0xf] %vm3135, %v3339
      %v3650 = vld [vmem:[%s3144 + $0x8] sm:$0x1]
      %v3651 = vsel %vm3146, %v3340, %v3650
      %3652 = vst [vmem:[%s3144 + $0x8] sm:$0x1] %v3651
      %v3653 = vld [vmem:[%s3144 + $0xc] sm:$0xf]
      %v3654 = vsel %vm3645, %v3347, %v3653
      %3655 = vst [vmem:[%s3144 + $0xc] sm:$0xf] %v3654
      %3656 = vst.msk [vmem:[%s3144 + $0x10] sm:$0xf] %vm3135, %v3356
      %v3657 = vld [vmem:[%s3144 + $0x14] sm:$0x1]
      %v3658 = vsel %vm3146, %v3357, %v3657
      %3659 = vst [vmem:[%s3144 + $0x14] sm:$0x1] %v3658
      %v3660 = vld [vmem:[%s3144 + $0x18] sm:$0xf]
      %v3661 = vsel %vm3645, %v3364, %v3660
      %3662 = vst [vmem:[%s3144 + $0x18] sm:$0xf] %v3661
      %3663 = vst.msk [vmem:[%s3144 + $0x1c] sm:$0xf] %vm3135, %v3373
      %v3664 = vld [vmem:[%s3144 + $0x20] sm:$0x1]
      %v3665 = vsel %vm3146, %v3374, %v3664
      %3666 = vst [vmem:[%s3144 + $0x20] sm:$0x1] %v3665
      %v3667 = vld [vmem:[%s3144 + $0x24] sm:$0xf]
      %v3668 = vsel %vm3645, %v3381, %v3667
      %3669 = vst [vmem:[%s3144 + $0x24] sm:$0xf] %v3668
      %3670 = vst.msk [vmem:[%s3144 + $0x28] sm:$0xf] %vm3135, %v3390
      %v3671 = vld [vmem:[%s3144 + $0x2c] sm:$0x1]
      %v3672 = vsel %vm3146, %v3391, %v3671
      %3673 = vst [vmem:[%s3144 + $0x2c] sm:$0x1] %v3672
      %v3674 = vld [vmem:[%s3144 + $0x30] sm:$0xf]
      %v3675 = vsel %vm3645, %v3398, %v3674
      %3676 = vst [vmem:[%s3144 + $0x30] sm:$0xf] %v3675
      %3677 = vst.msk [vmem:[%s3144 + $0x34] sm:$0xf] %vm3135, %v3407
      %v3678 = vld [vmem:[%s3144 + $0x38] sm:$0x1]
      %v3679 = vsel %vm3146, %v3408, %v3678
      %3680 = vst [vmem:[%s3144 + $0x38] sm:$0x1] %v3679
      %v3681 = vld [vmem:[%s3144 + $0x3c] sm:$0xf]
      %v3682 = vsel %vm3645, %v3415, %v3681
      %3683 = vst [vmem:[%s3144 + $0x3c] sm:$0xf] %v3682
      %3684 = vst.msk [vmem:[%s3144 + $0x40] sm:$0xf] %vm3135, %v3424
      %v3685 = vld [vmem:[%s3144 + $0x44] sm:$0x1]
      %v3686 = vsel %vm3146, %v3425, %v3685
      %3687 = vst [vmem:[%s3144 + $0x44] sm:$0x1] %v3686
      %v3688 = vld [vmem:[%s3144 + $0x48] sm:$0xf]
      %v3689 = vsel %vm3645, %v3432, %v3688
      %3690 = vst [vmem:[%s3144 + $0x48] sm:$0xf] %v3689
      %3691 = vst.msk [vmem:[%s3144 + $0x4c] sm:$0xf] %vm3135, %v3441
      %v3692 = vld [vmem:[%s3144 + $0x50] sm:$0x1]
      %v3693 = vsel %vm3146, %v3442, %v3692
      %3694 = vst [vmem:[%s3144 + $0x50] sm:$0x1] %v3693
      %v3695 = vld [vmem:[%s3144 + $0x54] sm:$0xf]
      %v3696 = vsel %vm3645, %v3449, %v3695
      %3697 = vst [vmem:[%s3144 + $0x54] sm:$0xf] %v3696
      %3698 = vst.msk [vmem:[%s3144 + $0x58] sm:$0xf] %vm3135, %v3458
      %v3699 = vld [vmem:[%s3144 + $0x5c] sm:$0x1]
      %v3700 = vsel %vm3146, %v3459, %v3699
      %3701 = vst [vmem:[%s3144 + $0x5c] sm:$0x1] %v3700
      %v3702 = vld [vmem:[%s3144 + $0x60] sm:$0xf]
      %v3703 = vsel %vm3645, %v3466, %v3702
      %3704 = vst [vmem:[%s3144 + $0x60] sm:$0xf] %v3703
      %3705 = vst.msk [vmem:[%s3144 + $0x64] sm:$0xf] %vm3135, %v3475
      %v3706 = vld [vmem:[%s3144 + $0x68] sm:$0x1]
      %v3707 = vsel %vm3146, %v3476, %v3706
      %3708 = vst [vmem:[%s3144 + $0x68] sm:$0x1] %v3707
      %v3709 = vld [vmem:[%s3144 + $0x6c] sm:$0xf]
      %v3710 = vsel %vm3645, %v3483, %v3709
      %3711 = vst [vmem:[%s3144 + $0x6c] sm:$0xf] %v3710
      %3712 = vst.msk [vmem:[%s3144 + $0x70] sm:$0xf] %vm3135, %v3492
      %v3713 = vld [vmem:[%s3144 + $0x74] sm:$0x1]
      %v3714 = vsel %vm3146, %v3493, %v3713
      %3715 = vst [vmem:[%s3144 + $0x74] sm:$0x1] %v3714
      %v3716 = vld [vmem:[%s3144 + $0x78] sm:$0xf]
      %v3717 = vsel %vm3645, %v3500, %v3716
      %3718 = vst [vmem:[%s3144 + $0x78] sm:$0xf] %v3717
      %3719 = vst.msk [vmem:[%s3144 + $0x7c] sm:$0xf] %vm3135, %v3509
      %v3720 = vld [vmem:[%s3144 + $0x80] sm:$0x1]
      %v3721 = vsel %vm3146, %v3510, %v3720
      %3722 = vst [vmem:[%s3144 + $0x80] sm:$0x1] %v3721
      %v3723 = vld [vmem:[%s3144 + $0x84] sm:$0xf]
      %v3724 = vsel %vm3645, %v3517, %v3723
      %3725 = vst [vmem:[%s3144 + $0x84] sm:$0xf] %v3724
      %3726 = vst.msk [vmem:[%s3144 + $0x88] sm:$0xf] %vm3135, %v3526
      %v3727 = vld [vmem:[%s3144 + $0x8c] sm:$0x1]
      %v3728 = vsel %vm3146, %v3527, %v3727
      %3729 = vst [vmem:[%s3144 + $0x8c] sm:$0x1] %v3728
      %v3730 = vld [vmem:[%s3144 + $0x90] sm:$0xf]
      %v3731 = vsel %vm3645, %v3534, %v3730
      %3732 = vst [vmem:[%s3144 + $0x90] sm:$0xf] %v3731
      %3733 = vst.msk [vmem:[%s3144 + $0x94] sm:$0xf] %vm3135, %v3543
      %v3734 = vld [vmem:[%s3144 + $0x98] sm:$0x1]
      %v3735 = vsel %vm3146, %v3544, %v3734
      %3736 = vst [vmem:[%s3144 + $0x98] sm:$0x1] %v3735
      %v3737 = vld [vmem:[%s3144 + $0x9c] sm:$0xf]
      %v3738 = vsel %vm3645, %v3551, %v3737
      %3739 = vst [vmem:[%s3144 + $0x9c] sm:$0xf] %v3738
      %3740 = vst.msk [vmem:[%s3144 + $0xa0] sm:$0xf] %vm3135, %v3560
      %v3741 = vld [vmem:[%s3144 + $0xa4] sm:$0x1]
      %v3742 = vsel %vm3146, %v3561, %v3741
      %3743 = vst [vmem:[%s3144 + $0xa4] sm:$0x1] %v3742
      %v3744 = vld [vmem:[%s3144 + $0xa8] sm:$0xf]
      %v3745 = vsel %vm3645, %v3568, %v3744
      %3746 = vst [vmem:[%s3144 + $0xa8] sm:$0xf] %v3745
      %3747 = vst.msk [vmem:[%s3144 + $0xac] sm:$0xf] %vm3135, %v3577
      %v3748 = vld [vmem:[%s3144 + $0xb0] sm:$0x1]
      %v3749 = vsel %vm3146, %v3578, %v3748
      %3750 = vst [vmem:[%s3144 + $0xb0] sm:$0x1] %v3749
      %v3751 = vld [vmem:[%s3144 + $0xb4] sm:$0xf]
      %v3752 = vsel %vm3645, %v3585, %v3751
      %3753 = vst [vmem:[%s3144 + $0xb4] sm:$0xf] %v3752
      %3754 = vst.msk [vmem:[%s3144 + $0xb8] sm:$0xf] %vm3135, %v3594
      %v3755 = vld [vmem:[%s3144 + $0xbc] sm:$0x1]
      %v3756 = vsel %vm3146, %v3595, %v3755
      %3757 = vst [vmem:[%s3144 + $0xbc] sm:$0x1] %v3756
      %v3758 = vld [vmem:[#allocation3] sm:$0xf]
      %v3759 = vld [vmem:[#allocation3 + $0x4] sm:$0xf]
      %v3760 = vld [vmem:[#allocation3 + $0xc] sm:$0xf]
      %v3761 = vld [vmem:[#allocation3 + $0x10] sm:$0xf]
      %v3762 = vld [vmem:[#allocation3 + $0x18] sm:$0xf]
      %v3763 = vld [vmem:[#allocation3 + $0x1c] sm:$0xf]
      %v3764 = vld [vmem:[#allocation3 + $0x24] sm:$0xf]
      %v3765 = vld [vmem:[#allocation3 + $0x28] sm:$0xf]
      %v3766 = vld [vmem:[#allocation3 + $0x30] sm:$0xf]
      %v3767 = vld [vmem:[#allocation3 + $0x34] sm:$0xf]
      %v3768 = vld [vmem:[#allocation3 + $0x3c] sm:$0xf]
      %v3769 = vld [vmem:[#allocation3 + $0x40] sm:$0xf]
      %v3770 = vld [vmem:[#allocation3 + $0x48] sm:$0xf]
      %v3771 = vld [vmem:[#allocation3 + $0x4c] sm:$0xf]
      %v3772 = vld [vmem:[#allocation3 + $0x54] sm:$0xf]
      %v3773 = vld [vmem:[#allocation3 + $0x58] sm:$0xf]
      %v3774 = vld [vmem:[#allocation3 + $0x60] sm:$0xf]
      %v3775 = vld [vmem:[#allocation3 + $0x64] sm:$0xf]
      %v3776 = vld [vmem:[#allocation3 + $0x6c] sm:$0xf]
      %v3777 = vld [vmem:[#allocation3 + $0x70] sm:$0xf]
      %v3778 = vld [vmem:[#allocation3 + $0x78] sm:$0xf]
      %v3779 = vld [vmem:[#allocation3 + $0x7c] sm:$0xf]
      %v3780 = vld [vmem:[#allocation3 + $0x84] sm:$0xf]
      %v3781 = vld [vmem:[#allocation3 + $0x88] sm:$0xf]
      %v3782 = vld [vmem:[#allocation3 + $0x90] sm:$0xf]
      %v3783 = vld [vmem:[#allocation3 + $0x94] sm:$0xf]
      %v3784 = vld [vmem:[#allocation3 + $0x9c] sm:$0xf]
      %v3785 = vld [vmem:[#allocation3 + $0xa0] sm:$0xf]
      %v3786 = vld [vmem:[#allocation3 + $0xa8] sm:$0xf]
      %v3787 = vld [vmem:[#allocation3 + $0xac] sm:$0xf]
      %v3788 = vld [vmem:[#allocation3 + $0xb4] sm:$0xf]
      %v3789 = vld [vmem:[#allocation3 + $0xb8] sm:$0xf]
      %v3790 = vld [vmem:[#allocation3 + $0x8] sm:$0x1]
      %v3791 = vld [vmem:[#allocation3 + $0x14] sm:$0x1]
      %v3792 = vld [vmem:[#allocation3 + $0x20] sm:$0x1]
      %v3793 = vld [vmem:[#allocation3 + $0x2c] sm:$0x1]
      %v3794 = vld [vmem:[#allocation3 + $0x38] sm:$0x1]
      %v3795 = vld [vmem:[#allocation3 + $0x44] sm:$0x1]
      %v3796 = vld [vmem:[#allocation3 + $0x50] sm:$0x1]
      %v3797 = vld [vmem:[#allocation3 + $0x5c] sm:$0x1]
      %v3798 = vld [vmem:[#allocation3 + $0x68] sm:$0x1]
      %v3799 = vld [vmem:[#allocation3 + $0x74] sm:$0x1]
      %v3800 = vld [vmem:[#allocation3 + $0x80] sm:$0x1]
      %v3801 = vld [vmem:[#allocation3 + $0x8c] sm:$0x1]
      %v3802 = vld [vmem:[#allocation3 + $0x98] sm:$0x1]
      %v3803 = vld [vmem:[#allocation3 + $0xa4] sm:$0x1]
      %v3804 = vld [vmem:[#allocation3 + $0xb0] sm:$0x1]
      %v3805 = vld [vmem:[#allocation3 + $0xbc] sm:$0x1]
      %v3806 = vld [vmem:[#allocation3] sm:$0xe]
      %v3807 = vld [vmem:[#allocation3 + $0xc] sm:$0xe]
      %v3808 = vld [vmem:[#allocation3 + $0x18] sm:$0xe]
      %v3809 = vld [vmem:[#allocation3 + $0x24] sm:$0xe]
      %v3810 = vld [vmem:[#allocation3 + $0x30] sm:$0xe]
      %v3811 = vld [vmem:[#allocation3 + $0x3c] sm:$0xe]
      %v3812 = vld [vmem:[#allocation3 + $0x48] sm:$0xe]
      %v3813 = vld [vmem:[#allocation3 + $0x54] sm:$0xe]
      %v3814 = vld [vmem:[#allocation3 + $0x60] sm:$0xe]
      %v3815 = vld [vmem:[#allocation3 + $0x6c] sm:$0xe]
      %v3816 = vld [vmem:[#allocation3 + $0x78] sm:$0xe]
      %v3817 = vld [vmem:[#allocation3 + $0x84] sm:$0xe]
      %v3818 = vld [vmem:[#allocation3 + $0x90] sm:$0xe]
      %v3819 = vld [vmem:[#allocation3 + $0x9c] sm:$0xe]
      %v3820 = vld [vmem:[#allocation3 + $0xa8] sm:$0xe]
      %v3821 = vld [vmem:[#allocation3 + $0xb4] sm:$0xe]
      %v3822 = vld [vmem:[%s3144] sm:$0xf]
      %v3823 = vld [vmem:[%s3144 + $0x4] sm:$0xf]
      %v3824 = vld [vmem:[%s3144 + $0xc] sm:$0xf]
      %v3825 = vld [vmem:[%s3144 + $0x10] sm:$0xf]
      %v3826 = vld [vmem:[%s3144 + $0x18] sm:$0xf]
      %v3827 = vld [vmem:[%s3144 + $0x1c] sm:$0xf]
      %v3828 = vld [vmem:[%s3144 + $0x24] sm:$0xf]
      %v3829 = vld [vmem:[%s3144 + $0x28] sm:$0xf]
      %v3830 = vld [vmem:[%s3144 + $0x30] sm:$0xf]
      %v3831 = vld [vmem:[%s3144 + $0x34] sm:$0xf]
      %v3832 = vld [vmem:[%s3144 + $0x3c] sm:$0xf]
      %v3833 = vld [vmem:[%s3144 + $0x40] sm:$0xf]
      %v3834 = vld [vmem:[%s3144 + $0x48] sm:$0xf]
      %v3835 = vld [vmem:[%s3144 + $0x4c] sm:$0xf]
      %v3836 = vld [vmem:[%s3144 + $0x54] sm:$0xf]
      %v3837 = vld [vmem:[%s3144 + $0x58] sm:$0xf]
      %v3838 = vld [vmem:[%s3144 + $0x60] sm:$0xf]
      %v3839 = vld [vmem:[%s3144 + $0x64] sm:$0xf]
      %v3840 = vld [vmem:[%s3144 + $0x6c] sm:$0xf]
      %v3841 = vld [vmem:[%s3144 + $0x70] sm:$0xf]
      %v3842 = vld [vmem:[%s3144 + $0x78] sm:$0xf]
      %v3843 = vld [vmem:[%s3144 + $0x7c] sm:$0xf]
      %v3844 = vld [vmem:[%s3144 + $0x84] sm:$0xf]
      %v3845 = vld [vmem:[%s3144 + $0x88] sm:$0xf]
      %v3846 = vld [vmem:[%s3144 + $0x90] sm:$0xf]
      %v3847 = vld [vmem:[%s3144 + $0x94] sm:$0xf]
      %v3848 = vld [vmem:[%s3144 + $0x9c] sm:$0xf]
      %v3849 = vld [vmem:[%s3144 + $0xa0] sm:$0xf]
      %v3850 = vld [vmem:[%s3144 + $0xa8] sm:$0xf]
      %v3851 = vld [vmem:[%s3144 + $0xac] sm:$0xf]
      %v3852 = vld [vmem:[%s3144 + $0xb4] sm:$0xf]
      %v3853 = vld [vmem:[%s3144 + $0xb8] sm:$0xf]
      %v3854 = vld [vmem:[%s3144 + $0x8] sm:$0x1]
      %v3855 = vld [vmem:[%s3144 + $0x14] sm:$0x1]
      %v3856 = vld [vmem:[%s3144 + $0x20] sm:$0x1]
      %v3857 = vld [vmem:[%s3144 + $0x2c] sm:$0x1]
      %v3858 = vld [vmem:[%s3144 + $0x38] sm:$0x1]
      %v3859 = vld [vmem:[%s3144 + $0x44] sm:$0x1]
      %v3860 = vld [vmem:[%s3144 + $0x50] sm:$0x1]
      %v3861 = vld [vmem:[%s3144 + $0x5c] sm:$0x1]
      %v3862 = vld [vmem:[%s3144 + $0x68] sm:$0x1]
      %v3863 = vld [vmem:[%s3144 + $0x74] sm:$0x1]
      %v3864 = vld [vmem:[%s3144 + $0x80] sm:$0x1]
      %v3865 = vld [vmem:[%s3144 + $0x8c] sm:$0x1]
      %v3866 = vld [vmem:[%s3144 + $0x98] sm:$0x1]
      %v3867 = vld [vmem:[%s3144 + $0xa4] sm:$0x1]
      %v3868 = vld [vmem:[%s3144 + $0xb0] sm:$0x1]
      %v3869 = vld [vmem:[%s3144 + $0xbc] sm:$0x1]
      %v3870 = vld [vmem:[%s3144] sm:$0xe]
      %v3871 = vld [vmem:[%s3144 + $0xc] sm:$0xe]
      %v3872 = vld [vmem:[%s3144 + $0x18] sm:$0xe]
      %v3873 = vld [vmem:[%s3144 + $0x24] sm:$0xe]
      %v3874 = vld [vmem:[%s3144 + $0x30] sm:$0xe]
      %v3875 = vld [vmem:[%s3144 + $0x3c] sm:$0xe]
      %v3876 = vld [vmem:[%s3144 + $0x48] sm:$0xe]
      %v3877 = vld [vmem:[%s3144 + $0x54] sm:$0xe]
      %v3878 = vld [vmem:[%s3144 + $0x60] sm:$0xe]
      %v3879 = vld [vmem:[%s3144 + $0x6c] sm:$0xe]
      %v3880 = vld [vmem:[%s3144 + $0x78] sm:$0xe]
      %v3881 = vld [vmem:[%s3144 + $0x84] sm:$0xe]
      %v3882 = vld [vmem:[%s3144 + $0x90] sm:$0xe]
      %v3883 = vld [vmem:[%s3144 + $0x9c] sm:$0xe]
      %v3884 = vld [vmem:[%s3144 + $0xa8] sm:$0xe]
      %v3885 = vld [vmem:[%s3144 + $0xb4] sm:$0xe]
      %s3886 = scalar_lea.vmem [#allocation3], 24
      %v3887 = vld [vmem:[%s3886] sm:$0xf]
      %v3888 = vld [vmem:[%s3886 + $0x4] sm:$0xf]
      %v3889 = vld [vmem:[%s3886 + $0xc] sm:$0xf]
      %v3890 = vld [vmem:[%s3886 + $0x10] sm:$0xf]
      %v3891 = vld [vmem:[%s3886 + $0x18] sm:$0xf]
      %v3892 = vld [vmem:[%s3886 + $0x1c] sm:$0xf]
      %v3893 = vld [vmem:[%s3886 + $0x24] sm:$0xf]
      %v3894 = vld [vmem:[%s3886 + $0x28] sm:$0xf]
      %v3895 = vld [vmem:[%s3886 + $0x30] sm:$0xf]
      %v3896 = vld [vmem:[%s3886 + $0x34] sm:$0xf]
      %v3897 = vld [vmem:[%s3886 + $0x3c] sm:$0xf]
      %v3898 = vld [vmem:[%s3886 + $0x40] sm:$0xf]
      %v3899 = vld [vmem:[%s3886 + $0x48] sm:$0xf]
      %v3900 = vld [vmem:[%s3886 + $0x4c] sm:$0xf]
      %v3901 = vld [vmem:[%s3886 + $0x54] sm:$0xf]
      %v3902 = vld [vmem:[%s3886 + $0x58] sm:$0xf]
      %v3903 = vld [vmem:[%s3886 + $0x60] sm:$0xf]
      %v3904 = vld [vmem:[%s3886 + $0x64] sm:$0xf]
      %v3905 = vld [vmem:[%s3886 + $0x6c] sm:$0xf]
      %v3906 = vld [vmem:[%s3886 + $0x70] sm:$0xf]
      %v3907 = vld [vmem:[%s3886 + $0x78] sm:$0xf]
      %v3908 = vld [vmem:[%s3886 + $0x7c] sm:$0xf]
      %v3909 = vld [vmem:[%s3886 + $0x84] sm:$0xf]
      %v3910 = vld [vmem:[%s3886 + $0x88] sm:$0xf]
      %v3911 = vld [vmem:[%s3886 + $0x90] sm:$0xf]
      %v3912 = vld [vmem:[%s3886 + $0x94] sm:$0xf]
      %v3913 = vld [vmem:[%s3886 + $0x9c] sm:$0xf]
      %v3914 = vld [vmem:[%s3886 + $0xa0] sm:$0xf]
      %v3915 = vld [vmem:[%s3886 + $0xa8] sm:$0xf]
      %v3916 = vld [vmem:[%s3886 + $0xac] sm:$0xf]
      %v3917 = vld [vmem:[%s3886 + $0xb4] sm:$0xf]
      %v3918 = vld [vmem:[%s3886 + $0xb8] sm:$0xf]
      %v3919 = vld [vmem:[%s3886 + $0x8] sm:$0x1]
      %v3920 = vld [vmem:[%s3886 + $0x14] sm:$0x1]
      %v3921 = vld [vmem:[%s3886 + $0x20] sm:$0x1]
      %v3922 = vld [vmem:[%s3886 + $0x2c] sm:$0x1]
      %v3923 = vld [vmem:[%s3886 + $0x38] sm:$0x1]
      %v3924 = vld [vmem:[%s3886 + $0x44] sm:$0x1]
      %v3925 = vld [vmem:[%s3886 + $0x50] sm:$0x1]
      %v3926 = vld [vmem:[%s3886 + $0x5c] sm:$0x1]
      %v3927 = vld [vmem:[%s3886 + $0x68] sm:$0x1]
      %v3928 = vld [vmem:[%s3886 + $0x74] sm:$0x1]
      %v3929 = vld [vmem:[%s3886 + $0x80] sm:$0x1]
      %v3930 = vld [vmem:[%s3886 + $0x8c] sm:$0x1]
      %v3931 = vld [vmem:[%s3886 + $0x98] sm:$0x1]
      %v3932 = vld [vmem:[%s3886 + $0xa4] sm:$0x1]
      %v3933 = vld [vmem:[%s3886 + $0xb0] sm:$0x1]
      %v3934 = vld [vmem:[%s3886 + $0xbc] sm:$0x1]
      %v3935 = vld [vmem:[%s3886] sm:$0xe]
      %v3936 = vld [vmem:[%s3886 + $0xc] sm:$0xe]
      %v3937 = vld [vmem:[%s3886 + $0x18] sm:$0xe]
      %v3938 = vld [vmem:[%s3886 + $0x24] sm:$0xe]
      %v3939 = vld [vmem:[%s3886 + $0x30] sm:$0xe]
      %v3940 = vld [vmem:[%s3886 + $0x3c] sm:$0xe]
      %v3941 = vld [vmem:[%s3886 + $0x48] sm:$0xe]
      %v3942 = vld [vmem:[%s3886 + $0x54] sm:$0xe]
      %v3943 = vld [vmem:[%s3886 + $0x60] sm:$0xe]
      %v3944 = vld [vmem:[%s3886 + $0x6c] sm:$0xe]
      %v3945 = vld [vmem:[%s3886 + $0x78] sm:$0xe]
      %v3946 = vld [vmem:[%s3886 + $0x84] sm:$0xe]
      %v3947 = vld [vmem:[%s3886 + $0x90] sm:$0xe]
      %v3948 = vld [vmem:[%s3886 + $0x9c] sm:$0xe]
      %v3949 = vld [vmem:[%s3886 + $0xa8] sm:$0xe]
      %v3950 = vld [vmem:[%s3886 + $0xb4] sm:$0xe]
      %v3983 = vunpack.c.l.b16 %v3758
      %v3984 = vunpack.c.l.b16 %v3759
      %v3985 = vunpack.c.l.b16 %v3760
      %v3986 = vunpack.c.l.b16 %v3761
      %v3987 = vunpack.c.l.b16 %v3762
      %v3988 = vunpack.c.l.b16 %v3763
      %v3989 = vunpack.c.l.b16 %v3764
      %v3990 = vunpack.c.l.b16 %v3765
      %v3991 = vunpack.c.l.b16 %v3766
      %v3992 = vunpack.c.l.b16 %v3767
      %v3993 = vunpack.c.l.b16 %v3768
      %v3994 = vunpack.c.l.b16 %v3769
      %v3995 = vunpack.c.l.b16 %v3770
      %v3996 = vunpack.c.l.b16 %v3771
      %v3997 = vunpack.c.l.b16 %v3772
      %v3998 = vunpack.c.l.b16 %v3773
      %v3999 = vunpack.c.l.b16 %v3774
      %v4000 = vunpack.c.l.b16 %v3775
      %v4001 = vunpack.c.l.b16 %v3776
      %v4002 = vunpack.c.l.b16 %v3777
      %v4003 = vunpack.c.l.b16 %v3778
      %v4004 = vunpack.c.l.b16 %v3779
      %v4005 = vunpack.c.l.b16 %v3780
      %v4006 = vunpack.c.l.b16 %v3781
      %v4007 = vunpack.c.l.b16 %v3782
      %v4008 = vunpack.c.l.b16 %v3783
      %v4009 = vunpack.c.l.b16 %v3784
      %v4010 = vunpack.c.l.b16 %v3785
      %v4011 = vunpack.c.l.b16 %v3786
      %v4012 = vunpack.c.l.b16 %v3787
      %v4013 = vunpack.c.l.b16 %v3788
      %v4014 = vunpack.c.l.b16 %v3789
      %v4015 = vpack.c.b16 %v3984, %v3983
      %v4016 = vpack.c.b16 %v3986, %v3985
      %v4017 = vpack.c.b16 %v3988, %v3987
      %v4018 = vpack.c.b16 %v3990, %v3989
      %v4019 = vpack.c.b16 %v3992, %v3991
      %v4020 = vpack.c.b16 %v3994, %v3993
      %v4021 = vpack.c.b16 %v3996, %v3995
      %v4022 = vpack.c.b16 %v3998, %v3997
      %v4023 = vpack.c.b16 %v4000, %v3999
      %v4024 = vpack.c.b16 %v4002, %v4001
      %v4025 = vpack.c.b16 %v4004, %v4003
      %v4026 = vpack.c.b16 %v4006, %v4005
      %v4027 = vpack.c.b16 %v4008, %v4007
      %v4028 = vpack.c.b16 %v4010, %v4009
      %v4029 = vpack.c.b16 %v4012, %v4011
      %v4030 = vpack.c.b16 %v4014, %v4013
      %v4047 = vunpack.c.l.b16 %v3790
      %v4048 = vunpack.c.l.b16 %v3791
      %v4049 = vunpack.c.l.b16 %v3792
      %v4050 = vunpack.c.l.b16 %v3793
      %v4051 = vunpack.c.l.b16 %v3794
      %v4052 = vunpack.c.l.b16 %v3795
      %v4053 = vunpack.c.l.b16 %v3796
      %v4054 = vunpack.c.l.b16 %v3797
      %v4055 = vunpack.c.l.b16 %v3798
      %v4056 = vunpack.c.l.b16 %v3799
      %v4057 = vunpack.c.l.b16 %v3800
      %v4058 = vunpack.c.l.b16 %v3801
      %v4059 = vunpack.c.l.b16 %v3802
      %v4060 = vunpack.c.l.b16 %v3803
      %v4061 = vunpack.c.l.b16 %v3804
      %v4062 = vunpack.c.l.b16 %v3805
      %v4063 = vpack.c.b16 %v4047, %v4047
      %v4064 = vpack.c.b16 %v4048, %v4048
      %v4065 = vpack.c.b16 %v4049, %v4049
      %v4066 = vpack.c.b16 %v4050, %v4050
      %v4067 = vpack.c.b16 %v4051, %v4051
      %v4068 = vpack.c.b16 %v4052, %v4052
      %v4069 = vpack.c.b16 %v4053, %v4053
      %v4070 = vpack.c.b16 %v4054, %v4054
      %v4071 = vpack.c.b16 %v4055, %v4055
      %v4072 = vpack.c.b16 %v4056, %v4056
      %v4073 = vpack.c.b16 %v4057, %v4057
      %v4074 = vpack.c.b16 %v4058, %v4058
      %v4075 = vpack.c.b16 %v4059, %v4059
      %v4076 = vpack.c.b16 %v4060, %v4060
      %v4077 = vpack.c.b16 %v4061, %v4061
      %v4078 = vpack.c.b16 %v4062, %v4062
      %v4080 = vshrl.u32 %v4015, 16
      %v4082 = vshll.u32 %v4015, 16
      %v4084 = vrot.slane %v4082, 1
      %v4085 = vor.u32 %v4080, %v4084
      %v4087 = vshll.u32 %v4063, 16
      %v4089 = vrot.slane %v4087, 1
      %v4090 = vsel %vm1222, %v4085, %v4089
      %v4092 = vshrl.u32 %v4016, 16
      %v4094 = vshll.u32 %v4016, 16
      %v4096 = vrot.slane %v4094, 1
      %v4097 = vor.u32 %v4092, %v4096
      %v4099 = vshll.u32 %v4064, 16
      %v4101 = vrot.slane %v4099, 1
      %v4102 = vsel %vm1222, %v4097, %v4101
      %v4104 = vshrl.u32 %v4017, 16
      %v4106 = vshll.u32 %v4017, 16
      %v4108 = vrot.slane %v4106, 1
      %v4109 = vor.u32 %v4104, %v4108
      %v4111 = vshll.u32 %v4065, 16
      %v4113 = vrot.slane %v4111, 1
      %v4114 = vsel %vm1222, %v4109, %v4113
      %v4116 = vshrl.u32 %v4018, 16
      %v4118 = vshll.u32 %v4018, 16
      %v4120 = vrot.slane %v4118, 1
      %v4121 = vor.u32 %v4116, %v4120
      %v4123 = vshll.u32 %v4066, 16
      %v4125 = vrot.slane %v4123, 1
      %v4126 = vsel %vm1222, %v4121, %v4125
      %v4128 = vshrl.u32 %v4019, 16
      %v4130 = vshll.u32 %v4019, 16
      %v4132 = vrot.slane %v4130, 1
      %v4133 = vor.u32 %v4128, %v4132
      %v4135 = vshll.u32 %v4067, 16
      %v4137 = vrot.slane %v4135, 1
      %v4138 = vsel %vm1222, %v4133, %v4137
      %v4140 = vshrl.u32 %v4020, 16
      %v4142 = vshll.u32 %v4020, 16
      %v4144 = vrot.slane %v4142, 1
      %v4145 = vor.u32 %v4140, %v4144
      %v4147 = vshll.u32 %v4068, 16
      %v4149 = vrot.slane %v4147, 1
      %v4150 = vsel %vm1222, %v4145, %v4149
      %v4152 = vshrl.u32 %v4021, 16
      %v4154 = vshll.u32 %v4021, 16
      %v4156 = vrot.slane %v4154, 1
      %v4157 = vor.u32 %v4152, %v4156
      %v4159 = vshll.u32 %v4069, 16
      %v4161 = vrot.slane %v4159, 1
      %v4162 = vsel %vm1222, %v4157, %v4161
      %v4164 = vshrl.u32 %v4022, 16
      %v4166 = vshll.u32 %v4022, 16
      %v4168 = vrot.slane %v4166, 1
      %v4169 = vor.u32 %v4164, %v4168
      %v4171 = vshll.u32 %v4070, 16
      %v4173 = vrot.slane %v4171, 1
      %v4174 = vsel %vm1222, %v4169, %v4173
      %v4176 = vshrl.u32 %v4023, 16
      %v4178 = vshll.u32 %v4023, 16
      %v4180 = vrot.slane %v4178, 1
      %v4181 = vor.u32 %v4176, %v4180
      %v4183 = vshll.u32 %v4071, 16
      %v4185 = vrot.slane %v4183, 1
      %v4186 = vsel %vm1222, %v4181, %v4185
      %v4188 = vshrl.u32 %v4024, 16
      %v4190 = vshll.u32 %v4024, 16
      %v4192 = vrot.slane %v4190, 1
      %v4193 = vor.u32 %v4188, %v4192
      %v4195 = vshll.u32 %v4072, 16
      %v4197 = vrot.slane %v4195, 1
      %v4198 = vsel %vm1222, %v4193, %v4197
      %v4200 = vshrl.u32 %v4025, 16
      %v4202 = vshll.u32 %v4025, 16
      %v4204 = vrot.slane %v4202, 1
      %v4205 = vor.u32 %v4200, %v4204
      %v4207 = vshll.u32 %v4073, 16
      %v4209 = vrot.slane %v4207, 1
      %v4210 = vsel %vm1222, %v4205, %v4209
      %v4212 = vshrl.u32 %v4026, 16
      %v4214 = vshll.u32 %v4026, 16
      %v4216 = vrot.slane %v4214, 1
      %v4217 = vor.u32 %v4212, %v4216
      %v4219 = vshll.u32 %v4074, 16
      %v4221 = vrot.slane %v4219, 1
      %v4222 = vsel %vm1222, %v4217, %v4221
      %v4224 = vshrl.u32 %v4027, 16
      %v4226 = vshll.u32 %v4027, 16
      %v4228 = vrot.slane %v4226, 1
      %v4229 = vor.u32 %v4224, %v4228
      %v4231 = vshll.u32 %v4075, 16
      %v4233 = vrot.slane %v4231, 1
      %v4234 = vsel %vm1222, %v4229, %v4233
      %v4236 = vshrl.u32 %v4028, 16
      %v4238 = vshll.u32 %v4028, 16
      %v4240 = vrot.slane %v4238, 1
      %v4241 = vor.u32 %v4236, %v4240
      %v4243 = vshll.u32 %v4076, 16
      %v4245 = vrot.slane %v4243, 1
      %v4246 = vsel %vm1222, %v4241, %v4245
      %v4248 = vshrl.u32 %v4029, 16
      %v4250 = vshll.u32 %v4029, 16
      %v4252 = vrot.slane %v4250, 1
      %v4253 = vor.u32 %v4248, %v4252
      %v4255 = vshll.u32 %v4077, 16
      %v4257 = vrot.slane %v4255, 1
      %v4258 = vsel %vm1222, %v4253, %v4257
      %v4260 = vshrl.u32 %v4030, 16
      %v4262 = vshll.u32 %v4030, 16
      %v4264 = vrot.slane %v4262, 1
      %v4265 = vor.u32 %v4260, %v4264
      %v4267 = vshll.u32 %v4078, 16
      %v4269 = vrot.slane %v4267, 1
      %v4270 = vsel %vm1222, %v4265, %v4269
      %4271 = vrot.lane.b32.xlu0 %v4090, 32
      %v4272 = vpop.permute.xlu0 %4271
      %4273 = vrot.lane.b32.xlu0 %v4102, 32
      %v4274 = vpop.permute.xlu0 %4273
      %4275 = vrot.lane.b32.xlu0 %v4114, 32
      %v4276 = vpop.permute.xlu0 %4275
      %4277 = vrot.lane.b32.xlu0 %v4126, 32
      %v4278 = vpop.permute.xlu0 %4277
      %4279 = vrot.lane.b32.xlu0 %v4138, 32
      %v4280 = vpop.permute.xlu0 %4279
      %4281 = vrot.lane.b32.xlu0 %v4150, 32
      %v4282 = vpop.permute.xlu0 %4281
      %4283 = vrot.lane.b32.xlu0 %v4162, 32
      %v4284 = vpop.permute.xlu0 %4283
      %4285 = vrot.lane.b32.xlu0 %v4174, 32
      %v4286 = vpop.permute.xlu0 %4285
      %4287 = vrot.lane.b32.xlu0 %v4186, 32
      %v4288 = vpop.permute.xlu0 %4287
      %4289 = vrot.lane.b32.xlu0 %v4198, 32
      %v4290 = vpop.permute.xlu0 %4289
      %4291 = vrot.lane.b32.xlu0 %v4210, 32
      %v4292 = vpop.permute.xlu0 %4291
      %4293 = vrot.lane.b32.xlu0 %v4222, 32
      %v4294 = vpop.permute.xlu0 %4293
      %4295 = vrot.lane.b32.xlu0 %v4234, 32
      %v4296 = vpop.permute.xlu0 %4295
      %4297 = vrot.lane.b32.xlu0 %v4246, 32
      %v4298 = vpop.permute.xlu0 %4297
      %4299 = vrot.lane.b32.xlu0 %v4258, 32
      %v4300 = vpop.permute.xlu0 %4299
      %4301 = vrot.lane.b32.xlu0 %v4270, 32
      %v4302 = vpop.permute.xlu0 %4301
      %v4319 = vunpack.c.l.b16 %v3806
      %v4320 = vunpack.c.l.b16 %v3807
      %v4321 = vunpack.c.l.b16 %v3808
      %v4322 = vunpack.c.l.b16 %v3809
      %v4323 = vunpack.c.l.b16 %v3810
      %v4324 = vunpack.c.l.b16 %v3811
      %v4325 = vunpack.c.l.b16 %v3812
      %v4326 = vunpack.c.l.b16 %v3813
      %v4327 = vunpack.c.l.b16 %v3814
      %v4328 = vunpack.c.l.b16 %v3815
      %v4329 = vunpack.c.l.b16 %v3816
      %v4330 = vunpack.c.l.b16 %v3817
      %v4331 = vunpack.c.l.b16 %v3818
      %v4332 = vunpack.c.l.b16 %v3819
      %v4333 = vunpack.c.l.b16 %v3820
      %v4334 = vunpack.c.l.b16 %v3821
      %v4335 = vpack.c.b16 %v3984, %v4319
      %v4336 = vpack.c.b16 %v3986, %v4320
      %v4337 = vpack.c.b16 %v3988, %v4321
      %v4338 = vpack.c.b16 %v3990, %v4322
      %v4339 = vpack.c.b16 %v3992, %v4323
      %v4340 = vpack.c.b16 %v3994, %v4324
      %v4341 = vpack.c.b16 %v3996, %v4325
      %v4342 = vpack.c.b16 %v3998, %v4326
      %v4343 = vpack.c.b16 %v4000, %v4327
      %v4344 = vpack.c.b16 %v4002, %v4328
      %v4345 = vpack.c.b16 %v4004, %v4329
      %v4346 = vpack.c.b16 %v4006, %v4330
      %v4347 = vpack.c.b16 %v4008, %v4331
      %v4348 = vpack.c.b16 %v4010, %v4332
      %v4349 = vpack.c.b16 %v4012, %v4333
      %v4350 = vpack.c.b16 %v4014, %v4334
      %v4351 = vrot.slane %v4335, 1
      %v4352 = vrot.slane %v4063, 1
      %v4353 = vsel %vm1495, %v4351, %v4352
      %v4354 = vrot.slane %v4336, 1
      %v4355 = vrot.slane %v4064, 1
      %v4356 = vsel %vm1495, %v4354, %v4355
      %v4357 = vrot.slane %v4337, 1
      %v4358 = vrot.slane %v4065, 1
      %v4359 = vsel %vm1495, %v4357, %v4358
      %v4360 = vrot.slane %v4338, 1
      %v4361 = vrot.slane %v4066, 1
      %v4362 = vsel %vm1495, %v4360, %v4361
      %v4363 = vrot.slane %v4339, 1
      %v4364 = vrot.slane %v4067, 1
      %v4365 = vsel %vm1495, %v4363, %v4364
      %v4366 = vrot.slane %v4340, 1
      %v4367 = vrot.slane %v4068, 1
      %v4368 = vsel %vm1495, %v4366, %v4367
      %v4369 = vrot.slane %v4341, 1
      %v4370 = vrot.slane %v4069, 1
      %v4371 = vsel %vm1495, %v4369, %v4370
      %v4372 = vrot.slane %v4342, 1
      %v4373 = vrot.slane %v4070, 1
      %v4374 = vsel %vm1495, %v4372, %v4373
      %v4375 = vrot.slane %v4343, 1
      %v4376 = vrot.slane %v4071, 1
      %v4377 = vsel %vm1495, %v4375, %v4376
      %v4378 = vrot.slane %v4344, 1
      %v4379 = vrot.slane %v4072, 1
      %v4380 = vsel %vm1495, %v4378, %v4379
      %v4381 = vrot.slane %v4345, 1
      %v4382 = vrot.slane %v4073, 1
      %v4383 = vsel %vm1495, %v4381, %v4382
      %v4384 = vrot.slane %v4346, 1
      %v4385 = vrot.slane %v4074, 1
      %v4386 = vsel %vm1495, %v4384, %v4385
      %v4387 = vrot.slane %v4347, 1
      %v4388 = vrot.slane %v4075, 1
      %v4389 = vsel %vm1495, %v4387, %v4388
      %v4390 = vrot.slane %v4348, 1
      %v4391 = vrot.slane %v4076, 1
      %v4392 = vsel %vm1495, %v4390, %v4391
      %v4393 = vrot.slane %v4349, 1
      %v4394 = vrot.slane %v4077, 1
      %v4395 = vsel %vm1495, %v4393, %v4394
      %v4396 = vrot.slane %v4350, 1
      %v4397 = vrot.slane %v4078, 1
      %v4398 = vsel %vm1495, %v4396, %v4397
      %4399 = vrot.lane.b32.xlu0 %v4353, 64
      %v4400 = vpop.permute.xlu0 %4399
      %4401 = vrot.lane.b32.xlu0 %v4356, 64
      %v4402 = vpop.permute.xlu0 %4401
      %4403 = vrot.lane.b32.xlu0 %v4359, 64
      %v4404 = vpop.permute.xlu0 %4403
      %4405 = vrot.lane.b32.xlu0 %v4362, 64
      %v4406 = vpop.permute.xlu0 %4405
      %4407 = vrot.lane.b32.xlu0 %v4365, 64
      %v4408 = vpop.permute.xlu0 %4407
      %4409 = vrot.lane.b32.xlu0 %v4368, 64
      %v4410 = vpop.permute.xlu0 %4409
      %4411 = vrot.lane.b32.xlu0 %v4371, 64
      %v4412 = vpop.permute.xlu0 %4411
      %4413 = vrot.lane.b32.xlu0 %v4374, 64
      %v4414 = vpop.permute.xlu0 %4413
      %4415 = vrot.lane.b32.xlu0 %v4377, 64
      %v4416 = vpop.permute.xlu0 %4415
      %4417 = vrot.lane.b32.xlu0 %v4380, 64
      %v4418 = vpop.permute.xlu0 %4417
      %4419 = vrot.lane.b32.xlu0 %v4383, 64
      %v4420 = vpop.permute.xlu0 %4419
      %4421 = vrot.lane.b32.xlu0 %v4386, 64
      %v4422 = vpop.permute.xlu0 %4421
      %4423 = vrot.lane.b32.xlu0 %v4389, 64
      %v4424 = vpop.permute.xlu0 %4423
      %4425 = vrot.lane.b32.xlu0 %v4392, 64
      %v4426 = vpop.permute.xlu0 %4425
      %4427 = vrot.lane.b32.xlu0 %v4395, 64
      %v4428 = vpop.permute.xlu0 %4427
      %4429 = vrot.lane.b32.xlu0 %v4398, 64
      %v4430 = vpop.permute.xlu0 %4429
      %v4463 = vunpack.c.l.b16 %v3822
      %v4464 = vunpack.c.l.b16 %v3823
      %v4465 = vunpack.c.l.b16 %v3824
      %v4466 = vunpack.c.l.b16 %v3825
      %v4467 = vunpack.c.l.b16 %v3826
      %v4468 = vunpack.c.l.b16 %v3827
      %v4469 = vunpack.c.l.b16 %v3828
      %v4470 = vunpack.c.l.b16 %v3829
      %v4471 = vunpack.c.l.b16 %v3830
      %v4472 = vunpack.c.l.b16 %v3831
      %v4473 = vunpack.c.l.b16 %v3832
      %v4474 = vunpack.c.l.b16 %v3833
      %v4475 = vunpack.c.l.b16 %v3834
      %v4476 = vunpack.c.l.b16 %v3835
      %v4477 = vunpack.c.l.b16 %v3836
      %v4478 = vunpack.c.l.b16 %v3837
      %v4479 = vunpack.c.l.b16 %v3838
      %v4480 = vunpack.c.l.b16 %v3839
      %v4481 = vunpack.c.l.b16 %v3840
      %v4482 = vunpack.c.l.b16 %v3841
      %v4483 = vunpack.c.l.b16 %v3842
      %v4484 = vunpack.c.l.b16 %v3843
      %v4485 = vunpack.c.l.b16 %v3844
      %v4486 = vunpack.c.l.b16 %v3845
      %v4487 = vunpack.c.l.b16 %v3846
      %v4488 = vunpack.c.l.b16 %v3847
      %v4489 = vunpack.c.l.b16 %v3848
      %v4490 = vunpack.c.l.b16 %v3849
      %v4491 = vunpack.c.l.b16 %v3850
      %v4492 = vunpack.c.l.b16 %v3851
      %v4493 = vunpack.c.l.b16 %v3852
      %v4494 = vunpack.c.l.b16 %v3853
      %v4495 = vpack.c.b16 %v4464, %v4463
      %v4496 = vpack.c.b16 %v4466, %v4465
      %v4497 = vpack.c.b16 %v4468, %v4467
      %v4498 = vpack.c.b16 %v4470, %v4469
      %v4499 = vpack.c.b16 %v4472, %v4471
      %v4500 = vpack.c.b16 %v4474, %v4473
      %v4501 = vpack.c.b16 %v4476, %v4475
      %v4502 = vpack.c.b16 %v4478, %v4477
      %v4503 = vpack.c.b16 %v4480, %v4479
      %v4504 = vpack.c.b16 %v4482, %v4481
      %v4505 = vpack.c.b16 %v4484, %v4483
      %v4506 = vpack.c.b16 %v4486, %v4485
      %v4507 = vpack.c.b16 %v4488, %v4487
      %v4508 = vpack.c.b16 %v4490, %v4489
      %v4509 = vpack.c.b16 %v4492, %v4491
      %v4510 = vpack.c.b16 %v4494, %v4493
      %4511 = vrot.lane.b32.xlu0 %v4495, 96
      %v4512 = vpop.permute.xlu0 %4511
      %4513 = vrot.lane.b32.xlu0 %v4496, 96
      %v4514 = vpop.permute.xlu0 %4513
      %4515 = vrot.lane.b32.xlu0 %v4497, 96
      %v4516 = vpop.permute.xlu0 %4515
      %4517 = vrot.lane.b32.xlu0 %v4498, 96
      %v4518 = vpop.permute.xlu0 %4517
      %4519 = vrot.lane.b32.xlu0 %v4499, 96
      %v4520 = vpop.permute.xlu0 %4519
      %4521 = vrot.lane.b32.xlu0 %v4500, 96
      %v4522 = vpop.permute.xlu0 %4521
      %4523 = vrot.lane.b32.xlu0 %v4501, 96
      %v4524 = vpop.permute.xlu0 %4523
      %4525 = vrot.lane.b32.xlu0 %v4502, 96
      %v4526 = vpop.permute.xlu0 %4525
      %4527 = vrot.lane.b32.xlu0 %v4503, 96
      %v4528 = vpop.permute.xlu0 %4527
      %4529 = vrot.lane.b32.xlu0 %v4504, 96
      %v4530 = vpop.permute.xlu0 %4529
      %4531 = vrot.lane.b32.xlu0 %v4505, 96
      %v4532 = vpop.permute.xlu0 %4531
      %4533 = vrot.lane.b32.xlu0 %v4506, 96
      %v4534 = vpop.permute.xlu0 %4533
      %4535 = vrot.lane.b32.xlu0 %v4507, 96
      %v4536 = vpop.permute.xlu0 %4535
      %4537 = vrot.lane.b32.xlu0 %v4508, 96
      %v4538 = vpop.permute.xlu0 %4537
      %4539 = vrot.lane.b32.xlu0 %v4509, 96
      %v4540 = vpop.permute.xlu0 %4539
      %4541 = vrot.lane.b32.xlu0 %v4510, 96
      %v4542 = vpop.permute.xlu0 %4541
      %v4559 = vunpack.c.l.b16 %v3854
      %v4560 = vunpack.c.l.b16 %v3855
      %v4561 = vunpack.c.l.b16 %v3856
      %v4562 = vunpack.c.l.b16 %v3857
      %v4563 = vunpack.c.l.b16 %v3858
      %v4564 = vunpack.c.l.b16 %v3859
      %v4565 = vunpack.c.l.b16 %v3860
      %v4566 = vunpack.c.l.b16 %v3861
      %v4567 = vunpack.c.l.b16 %v3862
      %v4568 = vunpack.c.l.b16 %v3863
      %v4569 = vunpack.c.l.b16 %v3864
      %v4570 = vunpack.c.l.b16 %v3865
      %v4571 = vunpack.c.l.b16 %v3866
      %v4572 = vunpack.c.l.b16 %v3867
      %v4573 = vunpack.c.l.b16 %v3868
      %v4574 = vunpack.c.l.b16 %v3869
      %v4575 = vpack.c.b16 %v4559, %v4559
      %v4576 = vpack.c.b16 %v4560, %v4560
      %v4577 = vpack.c.b16 %v4561, %v4561
      %v4578 = vpack.c.b16 %v4562, %v4562
      %v4579 = vpack.c.b16 %v4563, %v4563
      %v4580 = vpack.c.b16 %v4564, %v4564
      %v4581 = vpack.c.b16 %v4565, %v4565
      %v4582 = vpack.c.b16 %v4566, %v4566
      %v4583 = vpack.c.b16 %v4567, %v4567
      %v4584 = vpack.c.b16 %v4568, %v4568
      %v4585 = vpack.c.b16 %v4569, %v4569
      %v4586 = vpack.c.b16 %v4570, %v4570
      %v4587 = vpack.c.b16 %v4571, %v4571
      %v4588 = vpack.c.b16 %v4572, %v4572
      %v4589 = vpack.c.b16 %v4573, %v4573
      %v4590 = vpack.c.b16 %v4574, %v4574
      %v4592 = vshrl.u32 %v4495, 16
      %v4594 = vshll.u32 %v4495, 16
      %v4596 = vrot.slane %v4594, 1
      %v4597 = vor.u32 %v4592, %v4596
      %v4599 = vshll.u32 %v4575, 16
      %v4601 = vrot.slane %v4599, 1
      %v4602 = vsel %vm1222, %v4597, %v4601
      %v4604 = vshrl.u32 %v4496, 16
      %v4606 = vshll.u32 %v4496, 16
      %v4608 = vrot.slane %v4606, 1
      %v4609 = vor.u32 %v4604, %v4608
      %v4611 = vshll.u32 %v4576, 16
      %v4613 = vrot.slane %v4611, 1
      %v4614 = vsel %vm1222, %v4609, %v4613
      %v4616 = vshrl.u32 %v4497, 16
      %v4618 = vshll.u32 %v4497, 16
      %v4620 = vrot.slane %v4618, 1
      %v4621 = vor.u32 %v4616, %v4620
      %v4623 = vshll.u32 %v4577, 16
      %v4625 = vrot.slane %v4623, 1
      %v4626 = vsel %vm1222, %v4621, %v4625
      %v4628 = vshrl.u32 %v4498, 16
      %v4630 = vshll.u32 %v4498, 16
      %v4632 = vrot.slane %v4630, 1
      %v4633 = vor.u32 %v4628, %v4632
      %v4635 = vshll.u32 %v4578, 16
      %v4637 = vrot.slane %v4635, 1
      %v4638 = vsel %vm1222, %v4633, %v4637
      %v4640 = vshrl.u32 %v4499, 16
      %v4642 = vshll.u32 %v4499, 16
      %v4644 = vrot.slane %v4642, 1
      %v4645 = vor.u32 %v4640, %v4644
      %v4647 = vshll.u32 %v4579, 16
      %v4649 = vrot.slane %v4647, 1
      %v4650 = vsel %vm1222, %v4645, %v4649
      %v4652 = vshrl.u32 %v4500, 16
      %v4654 = vshll.u32 %v4500, 16
      %v4656 = vrot.slane %v4654, 1
      %v4657 = vor.u32 %v4652, %v4656
      %v4659 = vshll.u32 %v4580, 16
      %v4661 = vrot.slane %v4659, 1
      %v4662 = vsel %vm1222, %v4657, %v4661
      %v4664 = vshrl.u32 %v4501, 16
      %v4666 = vshll.u32 %v4501, 16
      %v4668 = vrot.slane %v4666, 1
      %v4669 = vor.u32 %v4664, %v4668
      %v4671 = vshll.u32 %v4581, 16
      %v4673 = vrot.slane %v4671, 1
      %v4674 = vsel %vm1222, %v4669, %v4673
      %v4676 = vshrl.u32 %v4502, 16
      %v4678 = vshll.u32 %v4502, 16
      %v4680 = vrot.slane %v4678, 1
      %v4681 = vor.u32 %v4676, %v4680
      %v4683 = vshll.u32 %v4582, 16
      %v4685 = vrot.slane %v4683, 1
      %v4686 = vsel %vm1222, %v4681, %v4685
      %v4688 = vshrl.u32 %v4503, 16
      %v4690 = vshll.u32 %v4503, 16
      %v4692 = vrot.slane %v4690, 1
      %v4693 = vor.u32 %v4688, %v4692
      %v4695 = vshll.u32 %v4583, 16
      %v4697 = vrot.slane %v4695, 1
      %v4698 = vsel %vm1222, %v4693, %v4697
      %v4700 = vshrl.u32 %v4504, 16
      %v4702 = vshll.u32 %v4504, 16
      %v4704 = vrot.slane %v4702, 1
      %v4705 = vor.u32 %v4700, %v4704
      %v4707 = vshll.u32 %v4584, 16
      %v4709 = vrot.slane %v4707, 1
      %v4710 = vsel %vm1222, %v4705, %v4709
      %v4712 = vshrl.u32 %v4505, 16
      %v4714 = vshll.u32 %v4505, 16
      %v4716 = vrot.slane %v4714, 1
      %v4717 = vor.u32 %v4712, %v4716
      %v4719 = vshll.u32 %v4585, 16
      %v4721 = vrot.slane %v4719, 1
      %v4722 = vsel %vm1222, %v4717, %v4721
      %v4724 = vshrl.u32 %v4506, 16
      %v4726 = vshll.u32 %v4506, 16
      %v4728 = vrot.slane %v4726, 1
      %v4729 = vor.u32 %v4724, %v4728
      %v4731 = vshll.u32 %v4586, 16
      %v4733 = vrot.slane %v4731, 1
      %v4734 = vsel %vm1222, %v4729, %v4733
      %v4736 = vshrl.u32 %v4507, 16
      %v4738 = vshll.u32 %v4507, 16
      %v4740 = vrot.slane %v4738, 1
      %v4741 = vor.u32 %v4736, %v4740
      %v4743 = vshll.u32 %v4587, 16
      %v4745 = vrot.slane %v4743, 1
      %v4746 = vsel %vm1222, %v4741, %v4745
      %v4748 = vshrl.u32 %v4508, 16
      %v4750 = vshll.u32 %v4508, 16
      %v4752 = vrot.slane %v4750, 1
      %v4753 = vor.u32 %v4748, %v4752
      %v4755 = vshll.u32 %v4588, 16
      %v4757 = vrot.slane %v4755, 1
      %v4758 = vsel %vm1222, %v4753, %v4757
      %v4760 = vshrl.u32 %v4509, 16
      %v4762 = vshll.u32 %v4509, 16
      %v4764 = vrot.slane %v4762, 1
      %v4765 = vor.u32 %v4760, %v4764
      %v4767 = vshll.u32 %v4589, 16
      %v4769 = vrot.slane %v4767, 1
      %v4770 = vsel %vm1222, %v4765, %v4769
      %v4772 = vshrl.u32 %v4510, 16
      %v4774 = vshll.u32 %v4510, 16
      %v4776 = vrot.slane %v4774, 1
      %v4777 = vor.u32 %v4772, %v4776
      %v4779 = vshll.u32 %v4590, 16
      %v4781 = vrot.slane %v4779, 1
      %v4782 = vsel %vm1222, %v4777, %v4781
      %v4799 = vunpack.c.l.b16 %v3870
      %v4800 = vunpack.c.l.b16 %v3871
      %v4801 = vunpack.c.l.b16 %v3872
      %v4802 = vunpack.c.l.b16 %v3873
      %v4803 = vunpack.c.l.b16 %v3874
      %v4804 = vunpack.c.l.b16 %v3875
      %v4805 = vunpack.c.l.b16 %v3876
      %v4806 = vunpack.c.l.b16 %v3877
      %v4807 = vunpack.c.l.b16 %v3878
      %v4808 = vunpack.c.l.b16 %v3879
      %v4809 = vunpack.c.l.b16 %v3880
      %v4810 = vunpack.c.l.b16 %v3881
      %v4811 = vunpack.c.l.b16 %v3882
      %v4812 = vunpack.c.l.b16 %v3883
      %v4813 = vunpack.c.l.b16 %v3884
      %v4814 = vunpack.c.l.b16 %v3885
      %v4815 = vpack.c.b16 %v4464, %v4799
      %v4816 = vpack.c.b16 %v4466, %v4800
      %v4817 = vpack.c.b16 %v4468, %v4801
      %v4818 = vpack.c.b16 %v4470, %v4802
      %v4819 = vpack.c.b16 %v4472, %v4803
      %v4820 = vpack.c.b16 %v4474, %v4804
      %v4821 = vpack.c.b16 %v4476, %v4805
      %v4822 = vpack.c.b16 %v4478, %v4806
      %v4823 = vpack.c.b16 %v4480, %v4807
      %v4824 = vpack.c.b16 %v4482, %v4808
      %v4825 = vpack.c.b16 %v4484, %v4809
      %v4826 = vpack.c.b16 %v4486, %v4810
      %v4827 = vpack.c.b16 %v4488, %v4811
      %v4828 = vpack.c.b16 %v4490, %v4812
      %v4829 = vpack.c.b16 %v4492, %v4813
      %v4830 = vpack.c.b16 %v4494, %v4814
      %v4831 = vrot.slane %v4815, 1
      %v4832 = vrot.slane %v4575, 1
      %v4833 = vsel %vm1495, %v4831, %v4832
      %v4834 = vrot.slane %v4816, 1
      %v4835 = vrot.slane %v4576, 1
      %v4836 = vsel %vm1495, %v4834, %v4835
      %v4837 = vrot.slane %v4817, 1
      %v4838 = vrot.slane %v4577, 1
      %v4839 = vsel %vm1495, %v4837, %v4838
      %v4840 = vrot.slane %v4818, 1
      %v4841 = vrot.slane %v4578, 1
      %v4842 = vsel %vm1495, %v4840, %v4841
      %v4843 = vrot.slane %v4819, 1
      %v4844 = vrot.slane %v4579, 1
      %v4845 = vsel %vm1495, %v4843, %v4844
      %v4846 = vrot.slane %v4820, 1
      %v4847 = vrot.slane %v4580, 1
      %v4848 = vsel %vm1495, %v4846, %v4847
      %v4849 = vrot.slane %v4821, 1
      %v4850 = vrot.slane %v4581, 1
      %v4851 = vsel %vm1495, %v4849, %v4850
      %v4852 = vrot.slane %v4822, 1
      %v4853 = vrot.slane %v4582, 1
      %v4854 = vsel %vm1495, %v4852, %v4853
      %v4855 = vrot.slane %v4823, 1
      %v4856 = vrot.slane %v4583, 1
      %v4857 = vsel %vm1495, %v4855, %v4856
      %v4858 = vrot.slane %v4824, 1
      %v4859 = vrot.slane %v4584, 1
      %v4860 = vsel %vm1495, %v4858, %v4859
      %v4861 = vrot.slane %v4825, 1
      %v4862 = vrot.slane %v4585, 1
      %v4863 = vsel %vm1495, %v4861, %v4862
      %v4864 = vrot.slane %v4826, 1
      %v4865 = vrot.slane %v4586, 1
      %v4866 = vsel %vm1495, %v4864, %v4865
      %v4867 = vrot.slane %v4827, 1
      %v4868 = vrot.slane %v4587, 1
      %v4869 = vsel %vm1495, %v4867, %v4868
      %v4870 = vrot.slane %v4828, 1
      %v4871 = vrot.slane %v4588, 1
      %v4872 = vsel %vm1495, %v4870, %v4871
      %v4873 = vrot.slane %v4829, 1
      %v4874 = vrot.slane %v4589, 1
      %v4875 = vsel %vm1495, %v4873, %v4874
      %v4876 = vrot.slane %v4830, 1
      %v4877 = vrot.slane %v4590, 1
      %v4878 = vsel %vm1495, %v4876, %v4877
      %4879 = vrot.lane.b32.xlu0 %v4833, 32
      %v4880 = vpop.permute.xlu0 %4879
      %4881 = vrot.lane.b32.xlu0 %v4836, 32
      %v4882 = vpop.permute.xlu0 %4881
      %4883 = vrot.lane.b32.xlu0 %v4839, 32
      %v4884 = vpop.permute.xlu0 %4883
      %4885 = vrot.lane.b32.xlu0 %v4842, 32
      %v4886 = vpop.permute.xlu0 %4885
      %4887 = vrot.lane.b32.xlu0 %v4845, 32
      %v4888 = vpop.permute.xlu0 %4887
      %4889 = vrot.lane.b32.xlu0 %v4848, 32
      %v4890 = vpop.permute.xlu0 %4889
      %4891 = vrot.lane.b32.xlu0 %v4851, 32
      %v4892 = vpop.permute.xlu0 %4891
      %4893 = vrot.lane.b32.xlu0 %v4854, 32
      %v4894 = vpop.permute.xlu0 %4893
      %4895 = vrot.lane.b32.xlu0 %v4857, 32
      %v4896 = vpop.permute.xlu0 %4895
      %4897 = vrot.lane.b32.xlu0 %v4860, 32
      %v4898 = vpop.permute.xlu0 %4897
      %4899 = vrot.lane.b32.xlu0 %v4863, 32
      %v4900 = vpop.permute.xlu0 %4899
      %4901 = vrot.lane.b32.xlu0 %v4866, 32
      %v4902 = vpop.permute.xlu0 %4901
      %4903 = vrot.lane.b32.xlu0 %v4869, 32
      %v4904 = vpop.permute.xlu0 %4903
      %4905 = vrot.lane.b32.xlu0 %v4872, 32
      %v4906 = vpop.permute.xlu0 %4905
      %4907 = vrot.lane.b32.xlu0 %v4875, 32
      %v4908 = vpop.permute.xlu0 %4907
      %4909 = vrot.lane.b32.xlu0 %v4878, 32
      %v4910 = vpop.permute.xlu0 %4909
      %v4943 = vunpack.c.l.b16 %v3887
      %v4944 = vunpack.c.l.b16 %v3888
      %v4945 = vunpack.c.l.b16 %v3889
      %v4946 = vunpack.c.l.b16 %v3890
      %v4947 = vunpack.c.l.b16 %v3891
      %v4948 = vunpack.c.l.b16 %v3892
      %v4949 = vunpack.c.l.b16 %v3893
      %v4950 = vunpack.c.l.b16 %v3894
      %v4951 = vunpack.c.l.b16 %v3895
      %v4952 = vunpack.c.l.b16 %v3896
      %v4953 = vunpack.c.l.b16 %v3897
      %v4954 = vunpack.c.l.b16 %v3898
      %v4955 = vunpack.c.l.b16 %v3899
      %v4956 = vunpack.c.l.b16 %v3900
      %v4957 = vunpack.c.l.b16 %v3901
      %v4958 = vunpack.c.l.b16 %v3902
      %v4959 = vunpack.c.l.b16 %v3903
      %v4960 = vunpack.c.l.b16 %v3904
      %v4961 = vunpack.c.l.b16 %v3905
      %v4962 = vunpack.c.l.b16 %v3906
      %v4963 = vunpack.c.l.b16 %v3907
      %v4964 = vunpack.c.l.b16 %v3908
      %v4965 = vunpack.c.l.b16 %v3909
      %v4966 = vunpack.c.l.b16 %v3910
      %v4967 = vunpack.c.l.b16 %v3911
      %v4968 = vunpack.c.l.b16 %v3912
      %v4969 = vunpack.c.l.b16 %v3913
      %v4970 = vunpack.c.l.b16 %v3914
      %v4971 = vunpack.c.l.b16 %v3915
      %v4972 = vunpack.c.l.b16 %v3916
      %v4973 = vunpack.c.l.b16 %v3917
      %v4974 = vunpack.c.l.b16 %v3918
      %v4975 = vpack.c.b16 %v4944, %v4943
      %v4976 = vpack.c.b16 %v4946, %v4945
      %v4977 = vpack.c.b16 %v4948, %v4947
      %v4978 = vpack.c.b16 %v4950, %v4949
      %v4979 = vpack.c.b16 %v4952, %v4951
      %v4980 = vpack.c.b16 %v4954, %v4953
      %v4981 = vpack.c.b16 %v4956, %v4955
      %v4982 = vpack.c.b16 %v4958, %v4957
      %v4983 = vpack.c.b16 %v4960, %v4959
      %v4984 = vpack.c.b16 %v4962, %v4961
      %v4985 = vpack.c.b16 %v4964, %v4963
      %v4986 = vpack.c.b16 %v4966, %v4965
      %v4987 = vpack.c.b16 %v4968, %v4967
      %v4988 = vpack.c.b16 %v4970, %v4969
      %v4989 = vpack.c.b16 %v4972, %v4971
      %v4990 = vpack.c.b16 %v4974, %v4973
      %4991 = vrot.lane.b32.xlu0 %v4975, 64
      %v4992 = vpop.permute.xlu0 %4991
      %4993 = vrot.lane.b32.xlu0 %v4976, 64
      %v4994 = vpop.permute.xlu0 %4993
      %4995 = vrot.lane.b32.xlu0 %v4977, 64
      %v4996 = vpop.permute.xlu0 %4995
      %4997 = vrot.lane.b32.xlu0 %v4978, 64
      %v4998 = vpop.permute.xlu0 %4997
      %4999 = vrot.lane.b32.xlu0 %v4979, 64
      %v5000 = vpop.permute.xlu0 %4999
      %5001 = vrot.lane.b32.xlu0 %v4980, 64
      %v5002 = vpop.permute.xlu0 %5001
      %5003 = vrot.lane.b32.xlu0 %v4981, 64
      %v5004 = vpop.permute.xlu0 %5003
      %5005 = vrot.lane.b32.xlu0 %v4982, 64
      %v5006 = vpop.permute.xlu0 %5005
      %5007 = vrot.lane.b32.xlu0 %v4983, 64
      %v5008 = vpop.permute.xlu0 %5007
      %5009 = vrot.lane.b32.xlu0 %v4984, 64
      %v5010 = vpop.permute.xlu0 %5009
      %5011 = vrot.lane.b32.xlu0 %v4985, 64
      %v5012 = vpop.permute.xlu0 %5011
      %5013 = vrot.lane.b32.xlu0 %v4986, 64
      %v5014 = vpop.permute.xlu0 %5013
      %5015 = vrot.lane.b32.xlu0 %v4987, 64
      %v5016 = vpop.permute.xlu0 %5015
      %5017 = vrot.lane.b32.xlu0 %v4988, 64
      %v5018 = vpop.permute.xlu0 %5017
      %5019 = vrot.lane.b32.xlu0 %v4989, 64
      %v5020 = vpop.permute.xlu0 %5019
      %5021 = vrot.lane.b32.xlu0 %v4990, 64
      %v5022 = vpop.permute.xlu0 %5021
      %v5039 = vunpack.c.l.b16 %v3919
      %v5040 = vunpack.c.l.b16 %v3920
      %v5041 = vunpack.c.l.b16 %v3921
      %v5042 = vunpack.c.l.b16 %v3922
      %v5043 = vunpack.c.l.b16 %v3923
      %v5044 = vunpack.c.l.b16 %v3924
      %v5045 = vunpack.c.l.b16 %v3925
      %v5046 = vunpack.c.l.b16 %v3926
      %v5047 = vunpack.c.l.b16 %v3927
      %v5048 = vunpack.c.l.b16 %v3928
      %v5049 = vunpack.c.l.b16 %v3929
      %v5050 = vunpack.c.l.b16 %v3930
      %v5051 = vunpack.c.l.b16 %v3931
      %v5052 = vunpack.c.l.b16 %v3932
      %v5053 = vunpack.c.l.b16 %v3933
      %v5054 = vunpack.c.l.b16 %v3934
      %v5055 = vpack.c.b16 %v5039, %v5039
      %v5056 = vpack.c.b16 %v5040, %v5040
      %v5057 = vpack.c.b16 %v5041, %v5041
      %v5058 = vpack.c.b16 %v5042, %v5042
      %v5059 = vpack.c.b16 %v5043, %v5043
      %v5060 = vpack.c.b16 %v5044, %v5044
      %v5061 = vpack.c.b16 %v5045, %v5045
      %v5062 = vpack.c.b16 %v5046, %v5046
      %v5063 = vpack.c.b16 %v5047, %v5047
      %v5064 = vpack.c.b16 %v5048, %v5048
      %v5065 = vpack.c.b16 %v5049, %v5049
      %v5066 = vpack.c.b16 %v5050, %v5050
      %v5067 = vpack.c.b16 %v5051, %v5051
      %v5068 = vpack.c.b16 %v5052, %v5052
      %v5069 = vpack.c.b16 %v5053, %v5053
      %v5070 = vpack.c.b16 %v5054, %v5054
      %v5072 = vshrl.u32 %v4975, 16
      %v5074 = vshll.u32 %v4975, 16
      %v5076 = vrot.slane %v5074, 1
      %v5077 = vor.u32 %v5072, %v5076
      %v5079 = vshll.u32 %v5055, 16
      %v5081 = vrot.slane %v5079, 1
      %v5082 = vsel %vm1222, %v5077, %v5081
      %v5084 = vshrl.u32 %v4976, 16
      %v5086 = vshll.u32 %v4976, 16
      %v5088 = vrot.slane %v5086, 1
      %v5089 = vor.u32 %v5084, %v5088
      %v5091 = vshll.u32 %v5056, 16
      %v5093 = vrot.slane %v5091, 1
      %v5094 = vsel %vm1222, %v5089, %v5093
      %v5096 = vshrl.u32 %v4977, 16
      %v5098 = vshll.u32 %v4977, 16
      %v5100 = vrot.slane %v5098, 1
      %v5101 = vor.u32 %v5096, %v5100
      %v5103 = vshll.u32 %v5057, 16
      %v5105 = vrot.slane %v5103, 1
      %v5106 = vsel %vm1222, %v5101, %v5105
      %v5108 = vshrl.u32 %v4978, 16
      %v5110 = vshll.u32 %v4978, 16
      %v5112 = vrot.slane %v5110, 1
      %v5113 = vor.u32 %v5108, %v5112
      %v5115 = vshll.u32 %v5058, 16
      %v5117 = vrot.slane %v5115, 1
      %v5118 = vsel %vm1222, %v5113, %v5117
      %v5120 = vshrl.u32 %v4979, 16
      %v5122 = vshll.u32 %v4979, 16
      %v5124 = vrot.slane %v5122, 1
      %v5125 = vor.u32 %v5120, %v5124
      %v5127 = vshll.u32 %v5059, 16
      %v5129 = vrot.slane %v5127, 1
      %v5130 = vsel %vm1222, %v5125, %v5129
      %v5132 = vshrl.u32 %v4980, 16
      %v5134 = vshll.u32 %v4980, 16
      %v5136 = vrot.slane %v5134, 1
      %v5137 = vor.u32 %v5132, %v5136
      %v5139 = vshll.u32 %v5060, 16
      %v5141 = vrot.slane %v5139, 1
      %v5142 = vsel %vm1222, %v5137, %v5141
      %v5144 = vshrl.u32 %v4981, 16
      %v5146 = vshll.u32 %v4981, 16
      %v5148 = vrot.slane %v5146, 1
      %v5149 = vor.u32 %v5144, %v5148
      %v5151 = vshll.u32 %v5061, 16
      %v5153 = vrot.slane %v5151, 1
      %v5154 = vsel %vm1222, %v5149, %v5153
      %v5156 = vshrl.u32 %v4982, 16
      %v5158 = vshll.u32 %v4982, 16
      %v5160 = vrot.slane %v5158, 1
      %v5161 = vor.u32 %v5156, %v5160
      %v5163 = vshll.u32 %v5062, 16
      %v5165 = vrot.slane %v5163, 1
      %v5166 = vsel %vm1222, %v5161, %v5165
      %v5168 = vshrl.u32 %v4983, 16
      %v5170 = vshll.u32 %v4983, 16
      %v5172 = vrot.slane %v5170, 1
      %v5173 = vor.u32 %v5168, %v5172
      %v5175 = vshll.u32 %v5063, 16
      %v5177 = vrot.slane %v5175, 1
      %v5178 = vsel %vm1222, %v5173, %v5177
      %v5180 = vshrl.u32 %v4984, 16
      %v5182 = vshll.u32 %v4984, 16
      %v5184 = vrot.slane %v5182, 1
      %v5185 = vor.u32 %v5180, %v5184
      %v5187 = vshll.u32 %v5064, 16
      %v5189 = vrot.slane %v5187, 1
      %v5190 = vsel %vm1222, %v5185, %v5189
      %v5192 = vshrl.u32 %v4985, 16
      %v5194 = vshll.u32 %v4985, 16
      %v5196 = vrot.slane %v5194, 1
      %v5197 = vor.u32 %v5192, %v5196
      %v5199 = vshll.u32 %v5065, 16
      %v5201 = vrot.slane %v5199, 1
      %v5202 = vsel %vm1222, %v5197, %v5201
      %v5204 = vshrl.u32 %v4986, 16
      %v5206 = vshll.u32 %v4986, 16
      %v5208 = vrot.slane %v5206, 1
      %v5209 = vor.u32 %v5204, %v5208
      %v5211 = vshll.u32 %v5066, 16
      %v5213 = vrot.slane %v5211, 1
      %v5214 = vsel %vm1222, %v5209, %v5213
      %v5216 = vshrl.u32 %v4987, 16
      %v5218 = vshll.u32 %v4987, 16
      %v5220 = vrot.slane %v5218, 1
      %v5221 = vor.u32 %v5216, %v5220
      %v5223 = vshll.u32 %v5067, 16
      %v5225 = vrot.slane %v5223, 1
      %v5226 = vsel %vm1222, %v5221, %v5225
      %v5228 = vshrl.u32 %v4988, 16
      %v5230 = vshll.u32 %v4988, 16
      %v5232 = vrot.slane %v5230, 1
      %v5233 = vor.u32 %v5228, %v5232
      %v5235 = vshll.u32 %v5068, 16
      %v5237 = vrot.slane %v5235, 1
      %v5238 = vsel %vm1222, %v5233, %v5237
      %v5240 = vshrl.u32 %v4989, 16
      %v5242 = vshll.u32 %v4989, 16
      %v5244 = vrot.slane %v5242, 1
      %v5245 = vor.u32 %v5240, %v5244
      %v5247 = vshll.u32 %v5069, 16
      %v5249 = vrot.slane %v5247, 1
      %v5250 = vsel %vm1222, %v5245, %v5249
      %v5252 = vshrl.u32 %v4990, 16
      %v5254 = vshll.u32 %v4990, 16
      %v5256 = vrot.slane %v5254, 1
      %v5257 = vor.u32 %v5252, %v5256
      %v5259 = vshll.u32 %v5070, 16
      %v5261 = vrot.slane %v5259, 1
      %v5262 = vsel %vm1222, %v5257, %v5261
      %5263 = vrot.lane.b32.xlu0 %v5082, 96
      %v5264 = vpop.permute.xlu0 %5263
      %5265 = vrot.lane.b32.xlu0 %v5094, 96
      %v5266 = vpop.permute.xlu0 %5265
      %5267 = vrot.lane.b32.xlu0 %v5106, 96
      %v5268 = vpop.permute.xlu0 %5267
      %5269 = vrot.lane.b32.xlu0 %v5118, 96
      %v5270 = vpop.permute.xlu0 %5269
      %5271 = vrot.lane.b32.xlu0 %v5130, 96
      %v5272 = vpop.permute.xlu0 %5271
      %5273 = vrot.lane.b32.xlu0 %v5142, 96
      %v5274 = vpop.permute.xlu0 %5273
      %5275 = vrot.lane.b32.xlu0 %v5154, 96
      %v5276 = vpop.permute.xlu0 %5275
      %5277 = vrot.lane.b32.xlu0 %v5166, 96
      %v5278 = vpop.permute.xlu0 %5277
      %5279 = vrot.lane.b32.xlu0 %v5178, 96
      %v5280 = vpop.permute.xlu0 %5279
      %5281 = vrot.lane.b32.xlu0 %v5190, 96
      %v5282 = vpop.permute.xlu0 %5281
      %5283 = vrot.lane.b32.xlu0 %v5202, 96
      %v5284 = vpop.permute.xlu0 %5283
      %5285 = vrot.lane.b32.xlu0 %v5214, 96
      %v5286 = vpop.permute.xlu0 %5285
      %5287 = vrot.lane.b32.xlu0 %v5226, 96
      %v5288 = vpop.permute.xlu0 %5287
      %5289 = vrot.lane.b32.xlu0 %v5238, 96
      %v5290 = vpop.permute.xlu0 %5289
      %5291 = vrot.lane.b32.xlu0 %v5250, 96
      %v5292 = vpop.permute.xlu0 %5291
      %5293 = vrot.lane.b32.xlu0 %v5262, 96
      %v5294 = vpop.permute.xlu0 %5293
      %v5311 = vunpack.c.l.b16 %v3935
      %v5312 = vunpack.c.l.b16 %v3936
      %v5313 = vunpack.c.l.b16 %v3937
      %v5314 = vunpack.c.l.b16 %v3938
      %v5315 = vunpack.c.l.b16 %v3939
      %v5316 = vunpack.c.l.b16 %v3940
      %v5317 = vunpack.c.l.b16 %v3941
      %v5318 = vunpack.c.l.b16 %v3942
      %v5319 = vunpack.c.l.b16 %v3943
      %v5320 = vunpack.c.l.b16 %v3944
      %v5321 = vunpack.c.l.b16 %v3945
      %v5322 = vunpack.c.l.b16 %v3946
      %v5323 = vunpack.c.l.b16 %v3947
      %v5324 = vunpack.c.l.b16 %v3948
      %v5325 = vunpack.c.l.b16 %v3949
      %v5326 = vunpack.c.l.b16 %v3950
      %v5327 = vpack.c.b16 %v4944, %v5311
      %v5328 = vpack.c.b16 %v4946, %v5312
      %v5329 = vpack.c.b16 %v4948, %v5313
      %v5330 = vpack.c.b16 %v4950, %v5314
      %v5331 = vpack.c.b16 %v4952, %v5315
      %v5332 = vpack.c.b16 %v4954, %v5316
      %v5333 = vpack.c.b16 %v4956, %v5317
      %v5334 = vpack.c.b16 %v4958, %v5318
      %v5335 = vpack.c.b16 %v4960, %v5319
      %v5336 = vpack.c.b16 %v4962, %v5320
      %v5337 = vpack.c.b16 %v4964, %v5321
      %v5338 = vpack.c.b16 %v4966, %v5322
      %v5339 = vpack.c.b16 %v4968, %v5323
      %v5340 = vpack.c.b16 %v4970, %v5324
      %v5341 = vpack.c.b16 %v4972, %v5325
      %v5342 = vpack.c.b16 %v4974, %v5326
      %v5343 = vrot.slane %v5327, 1
      %v5344 = vrot.slane %v5055, 1
      %v5345 = vsel %vm1495, %v5343, %v5344
      %v5346 = vrot.slane %v5328, 1
      %v5347 = vrot.slane %v5056, 1
      %v5348 = vsel %vm1495, %v5346, %v5347
      %v5349 = vrot.slane %v5329, 1
      %v5350 = vrot.slane %v5057, 1
      %v5351 = vsel %vm1495, %v5349, %v5350
      %v5352 = vrot.slane %v5330, 1
      %v5353 = vrot.slane %v5058, 1
      %v5354 = vsel %vm1495, %v5352, %v5353
      %v5355 = vrot.slane %v5331, 1
      %v5356 = vrot.slane %v5059, 1
      %v5357 = vsel %vm1495, %v5355, %v5356
      %v5358 = vrot.slane %v5332, 1
      %v5359 = vrot.slane %v5060, 1
      %v5360 = vsel %vm1495, %v5358, %v5359
      %v5361 = vrot.slane %v5333, 1
      %v5362 = vrot.slane %v5061, 1
      %v5363 = vsel %vm1495, %v5361, %v5362
      %v5364 = vrot.slane %v5334, 1
      %v5365 = vrot.slane %v5062, 1
      %v5366 = vsel %vm1495, %v5364, %v5365
      %v5367 = vrot.slane %v5335, 1
      %v5368 = vrot.slane %v5063, 1
      %v5369 = vsel %vm1495, %v5367, %v5368
      %v5370 = vrot.slane %v5336, 1
      %v5371 = vrot.slane %v5064, 1
      %v5372 = vsel %vm1495, %v5370, %v5371
      %v5373 = vrot.slane %v5337, 1
      %v5374 = vrot.slane %v5065, 1
      %v5375 = vsel %vm1495, %v5373, %v5374
      %v5376 = vrot.slane %v5338, 1
      %v5377 = vrot.slane %v5066, 1
      %v5378 = vsel %vm1495, %v5376, %v5377
      %v5379 = vrot.slane %v5339, 1
      %v5380 = vrot.slane %v5067, 1
      %v5381 = vsel %vm1495, %v5379, %v5380
      %v5382 = vrot.slane %v5340, 1
      %v5383 = vrot.slane %v5068, 1
      %v5384 = vsel %vm1495, %v5382, %v5383
      %v5385 = vrot.slane %v5341, 1
      %v5386 = vrot.slane %v5069, 1
      %v5387 = vsel %vm1495, %v5385, %v5386
      %v5388 = vrot.slane %v5342, 1
      %v5389 = vrot.slane %v5070, 1
      %v5390 = vsel %vm1495, %v5388, %v5389
      %vm5391 = vcmask 261120
      %v5393 = vsel %vm5391, %v4015, %v4272
      %v5395 = vsel %vm5391, %v4016, %v4274
      %v5397 = vsel %vm5391, %v4017, %v4276
      %v5399 = vsel %vm5391, %v4018, %v4278
      %v5401 = vsel %vm5391, %v4019, %v4280
      %v5403 = vsel %vm5391, %v4020, %v4282
      %v5405 = vsel %vm5391, %v4021, %v4284
      %v5407 = vsel %vm5391, %v4022, %v4286
      %v5409 = vsel %vm5391, %v4023, %v4288
      %v5411 = vsel %vm5391, %v4024, %v4290
      %v5413 = vsel %vm5391, %v4025, %v4292
      %v5415 = vsel %vm5391, %v4026, %v4294
      %v5417 = vsel %vm5391, %v4027, %v4296
      %v5419 = vsel %vm5391, %v4028, %v4298
      %v5421 = vsel %vm5391, %v4029, %v4300
      %v5423 = vsel %vm5391, %v4030, %v4302
      %vm5424 = vcmask 523264
      %v5426 = vsel %vm5424, %v5393, %v4400
      %v5428 = vsel %vm5424, %v5395, %v4402
      %v5430 = vsel %vm5424, %v5397, %v4404
      %v5432 = vsel %vm5424, %v5399, %v4406
      %v5434 = vsel %vm5424, %v5401, %v4408
      %v5436 = vsel %vm5424, %v5403, %v4410
      %v5438 = vsel %vm5424, %v5405, %v4412
      %v5440 = vsel %vm5424, %v5407, %v4414
      %v5442 = vsel %vm5424, %v5409, %v4416
      %v5444 = vsel %vm5424, %v5411, %v4418
      %v5446 = vsel %vm5424, %v5413, %v4420
      %v5448 = vsel %vm5424, %v5415, %v4422
      %v5450 = vsel %vm5424, %v5417, %v4424
      %v5452 = vsel %vm5424, %v5419, %v4426
      %v5454 = vsel %vm5424, %v5421, %v4428
      %v5456 = vsel %vm5424, %v5423, %v4430
      %vm5457 = vcmask 785408
      %v5459 = vsel %vm5457, %v5426, %v4512
      %v5462 = vsel %vm5457, %v5428, %v4514
      %v5465 = vsel %vm5457, %v5430, %v4516
      %v5468 = vsel %vm5457, %v5432, %v4518
      %v5471 = vsel %vm5457, %v5434, %v4520
      %v5474 = vsel %vm5457, %v5436, %v4522
      %v5477 = vsel %vm5457, %v5438, %v4524
      %v5480 = vsel %vm5457, %v5440, %v4526
      %v5483 = vsel %vm5457, %v5442, %v4528
      %v5486 = vsel %vm5457, %v5444, %v4530
      %v5489 = vsel %vm5457, %v5446, %v4532
      %v5492 = vsel %vm5457, %v5448, %v4534
      %v5495 = vsel %vm5457, %v5450, %v4536
      %v5498 = vsel %vm5457, %v5452, %v4538
      %v5501 = vsel %vm5457, %v5454, %v4540
      %v5504 = vsel %vm5457, %v5456, %v4542
      %v5508 = vsel %vm5391, %v4602, %v4880
      %v5511 = vsel %vm5391, %v4614, %v4882
      %v5514 = vsel %vm5391, %v4626, %v4884
      %v5517 = vsel %vm5391, %v4638, %v4886
      %v5520 = vsel %vm5391, %v4650, %v4888
      %v5523 = vsel %vm5391, %v4662, %v4890
      %v5526 = vsel %vm5391, %v4674, %v4892
      %v5529 = vsel %vm5391, %v4686, %v4894
      %v5532 = vsel %vm5391, %v4698, %v4896
      %v5535 = vsel %vm5391, %v4710, %v4898
      %v5538 = vsel %vm5391, %v4722, %v4900
      %v5541 = vsel %vm5391, %v4734, %v4902
      %v5544 = vsel %vm5391, %v4746, %v4904
      %v5547 = vsel %vm5391, %v4758, %v4906
      %v5550 = vsel %vm5391, %v4770, %v4908
      %v5553 = vsel %vm5391, %v4782, %v4910
      %v5555 = vsel %vm5424, %v5508, %v4992
      %v5557 = vsel %vm5424, %v5511, %v4994
      %v5559 = vsel %vm5424, %v5514, %v4996
      %v5561 = vsel %vm5424, %v5517, %v4998
      %v5563 = vsel %vm5424, %v5520, %v5000
      %v5565 = vsel %vm5424, %v5523, %v5002
      %v5567 = vsel %vm5424, %v5526, %v5004
      %v5569 = vsel %vm5424, %v5529, %v5006
      %v5571 = vsel %vm5424, %v5532, %v5008
      %v5573 = vsel %vm5424, %v5535, %v5010
      %v5575 = vsel %vm5424, %v5538, %v5012
      %v5577 = vsel %vm5424, %v5541, %v5014
      %v5579 = vsel %vm5424, %v5544, %v5016
      %v5581 = vsel %vm5424, %v5547, %v5018
      %v5583 = vsel %vm5424, %v5550, %v5020
      %v5585 = vsel %vm5424, %v5553, %v5022
      %v5587 = vsel %vm5457, %v5555, %v5264
      %v5590 = vsel %vm5457, %v5557, %v5266
      %v5593 = vsel %vm5457, %v5559, %v5268
      %v5596 = vsel %vm5457, %v5561, %v5270
      %v5599 = vsel %vm5457, %v5563, %v5272
      %v5602 = vsel %vm5457, %v5565, %v5274
      %v5605 = vsel %vm5457, %v5567, %v5276
      %v5608 = vsel %vm5457, %v5569, %v5278
      %v5611 = vsel %vm5457, %v5571, %v5280
      %v5614 = vsel %vm5457, %v5573, %v5282
      %v5617 = vsel %vm5457, %v5575, %v5284
      %v5620 = vsel %vm5457, %v5577, %v5286
      %v5623 = vsel %vm5457, %v5579, %v5288
      %v5626 = vsel %vm5457, %v5581, %v5290
      %v5629 = vsel %vm5457, %v5583, %v5292
      %v5632 = vsel %vm5457, %v5585, %v5294
      %v5634 = vld [vmem:[%s3] sm:$0xf]
      %v5635 = vld [vmem:[%s3 + $0x4] sm:$0xf]
      %v5636 = vld [vmem:[%s3 + $0x8] sm:$0xf]
      %v5637 = vld [vmem:[%s3 + $0xc] sm:$0xf]
      %v5638 = vld [vmem:[%s3 + $0x10] sm:$0xf]
      %v5639 = vld [vmem:[%s3 + $0x14] sm:$0xf]
      %v5640 = vld [vmem:[%s3 + $0x18] sm:$0xf]
      %v5641 = vld [vmem:[%s3 + $0x1c] sm:$0xf]
      %v5642 = vld [vmem:[%s3 + $0x20] sm:$0xf]
      %v5643 = vld [vmem:[%s3 + $0x24] sm:$0xf]
      %v5644 = vld [vmem:[%s3 + $0x28] sm:$0xf]
      %v5645 = vld [vmem:[%s3 + $0x2c] sm:$0xf]
      %v5646 = vld [vmem:[%s3 + $0x30] sm:$0xf]
      %v5647 = vld [vmem:[%s3 + $0x34] sm:$0xf]
      %v5648 = vld [vmem:[%s3 + $0x38] sm:$0xf]
      %v5649 = vld [vmem:[%s3 + $0x3c] sm:$0xf]
      %v5650 = vld [vmem:[%s3 + $0x40] sm:$0xf]
      %v5651 = vld [vmem:[%s3 + $0x44] sm:$0xf]
      %v5652 = vld [vmem:[%s3 + $0x48] sm:$0xf]
      %v5653 = vld [vmem:[%s3 + $0x4c] sm:$0xf]
      %v5654 = vld [vmem:[%s3 + $0x50] sm:$0xf]
      %v5655 = vld [vmem:[%s3 + $0x54] sm:$0xf]
      %v5656 = vld [vmem:[%s3 + $0x58] sm:$0xf]
      %v5657 = vld [vmem:[%s3 + $0x5c] sm:$0xf]
      %v5658 = vld [vmem:[%s3 + $0x60] sm:$0xf]
      %v5659 = vld [vmem:[%s3 + $0x64] sm:$0xf]
      %v5660 = vld [vmem:[%s3 + $0x68] sm:$0xf]
      %v5661 = vld [vmem:[%s3 + $0x6c] sm:$0xf]
      %v5662 = vld [vmem:[%s3 + $0x70] sm:$0xf]
      %v5663 = vld [vmem:[%s3 + $0x74] sm:$0xf]
      %v5664 = vld [vmem:[%s3 + $0x78] sm:$0xf]
      %v5665 = vld [vmem:[%s3 + $0x7c] sm:$0xf]
      %v5666 = vld [vmem:[%s3 + $0x80] sm:$0xf]
      %v5667 = vld [vmem:[%s3 + $0x84] sm:$0xf]
      %v5668 = vld [vmem:[%s3 + $0x88] sm:$0xf]
      %v5669 = vld [vmem:[%s3 + $0x8c] sm:$0xf]
      %v5670 = vld [vmem:[%s4] sm:$0x1]
      %v5672 = vlaneseq
      %v5673 = vshrl.u32 %v5672, 7
      %v5674 = vsub.s32 0, %v5673
      %v5675 = vrot.slane %v5670, %v5674
      %v5713 = vunpack.c.l.b16 %v5634
      %v5714 = vunpack.c.l.b16 %v5635
      %v5715 = vunpack.c.l.b16 %v5636
      %v5716 = vunpack.c.l.b16 %v5637
      %v5717 = vunpack.c.l.b16 %v5638
      %v5718 = vunpack.c.l.b16 %v5639
      %v5719 = vunpack.c.l.b16 %v5640
      %v5720 = vunpack.c.l.b16 %v5641
      %v5721 = vunpack.c.l.b16 %v5642
      %v5722 = vunpack.c.l.b16 %v5643
      %v5723 = vunpack.c.l.b16 %v5644
      %v5724 = vunpack.c.l.b16 %v5645
      %v5725 = vunpack.c.l.b16 %v5646
      %v5726 = vunpack.c.l.b16 %v5647
      %v5727 = vunpack.c.l.b16 %v5648
      %v5728 = vunpack.c.l.b16 %v5649
      %v5729 = vunpack.c.l.b16 %v5650
      %v5730 = vunpack.c.l.b16 %v5651
      %v5731 = vunpack.c.l.b16 %v5652
      %v5732 = vunpack.c.l.b16 %v5653
      %v5733 = vunpack.c.l.b16 %v5654
      %v5734 = vunpack.c.l.b16 %v5655
      %v5735 = vunpack.c.l.b16 %v5656
      %v5736 = vunpack.c.l.b16 %v5657
      %v5737 = vunpack.c.l.b16 %v5658
      %v5738 = vunpack.c.l.b16 %v5659
      %v5739 = vunpack.c.l.b16 %v5660
      %v5740 = vunpack.c.l.b16 %v5661
      %v5741 = vunpack.c.l.b16 %v5662
      %v5742 = vunpack.c.l.b16 %v5663
      %v5743 = vunpack.c.l.b16 %v5664
      %v5744 = vunpack.c.l.b16 %v5665
      %v5745 = vunpack.c.l.b16 %v5666
      %v5746 = vunpack.c.l.b16 %v5667
      %v5747 = vunpack.c.l.b16 %v5668
      %v5748 = vunpack.c.l.b16 %v5669
      %v5749 = vpack.c.b16 %v5714, %v5713
      %v5750 = vpack.c.b16 %v5716, %v5715
      %v5751 = vpack.c.b16 %v5718, %v5717
      %v5752 = vpack.c.b16 %v5720, %v5719
      %v5753 = vpack.c.b16 %v5722, %v5721
      %v5754 = vpack.c.b16 %v5724, %v5723
      %v5755 = vpack.c.b16 %v5726, %v5725
      %v5756 = vpack.c.b16 %v5728, %v5727
      %v5757 = vpack.c.b16 %v5730, %v5729
      %v5758 = vpack.c.b16 %v5732, %v5731
      %v5759 = vpack.c.b16 %v5734, %v5733
      %v5760 = vpack.c.b16 %v5736, %v5735
      %v5761 = vpack.c.b16 %v5738, %v5737
      %v5762 = vpack.c.b16 %v5740, %v5739
      %v5763 = vpack.c.b16 %v5742, %v5741
      %v5764 = vpack.c.b16 %v5744, %v5743
      %v5765 = vpack.c.b16 %v5746, %v5745
      %v5766 = vpack.c.b16 %v5748, %v5747
      %v5786 = vsel %vm5391, %v5345, 0
      %v5789 = vsel %vm5391, %v5348, 0
      %v5792 = vsel %vm5391, %v5351, 0
      %v5795 = vsel %vm5391, %v5354, 0
      %v5798 = vsel %vm5391, %v5357, 0
      %v5801 = vsel %vm5391, %v5360, 0
      %v5804 = vsel %vm5391, %v5363, 0
      %v5807 = vsel %vm5391, %v5366, 0
      %v5810 = vsel %vm5391, %v5369, 0
      %v5813 = vsel %vm5391, %v5372, 0
      %v5816 = vsel %vm5391, %v5375, 0
      %v5819 = vsel %vm5391, %v5378, 0
      %v5822 = vsel %vm5391, %v5381, 0
      %v5825 = vsel %vm5391, %v5384, 0
      %v5828 = vsel %vm5391, %v5387, 0
      %v5831 = vsel %vm5391, %v5390, 0
      %5833 = vmatprep.subr.bf16.mxu0 0
      %5834 = vmatpush1.bf16.msra.mxu0 %v5749
      %5835 = vmatprep.subr.bf16.mxu0 0
      %5836 = vmatpush1.bf16.msra.mxu0 %v5750
      %5837 = vmatprep.subr.bf16.mxu0 0
      %5838 = vmatpush1.bf16.msra.mxu0 %v5751
      %5839 = vmatprep.subr.bf16.mxu0 0
      %5840 = vmatpush1.bf16.msra.mxu0 %v5752
      %5841 = vmatprep.subr.bf16.mxu0 0
      %5842 = vmatpush1.bf16.msra.mxu0 %v5753
      %5843 = vmatprep.subr.bf16.mxu0 0
      %5844 = vmatpush1.bf16.msra.mxu0 %v5754
      %5845 = vmatprep.subr.bf16.mxu0 0
      %5846 = vmatpush1.bf16.msra.mxu0 %v5755
      %5847 = vmatprep.subr.bf16.mxu0 0
      %5848 = vmatpush1.bf16.msra.mxu0 %v5756
      %5849 = vmatprep.subr.bf16.mxu0 0
      %5850 = vmatpush1.bf16.msra.mxu0 %v5757
      %5851 = vmatprep.subr.bf16.mxu0 0
      %5852 = vmatpush1.bf16.msra.mxu0 %v5758
      %5853 = vmatprep.subr.bf16.mxu0 0
      %5854 = vmatpush1.bf16.msra.mxu0 %v5759
      %5855 = vmatprep.subr.bf16.mxu0 0
      %5856 = vmatpush1.bf16.msra.mxu0 %v5760
      %5857 = vmatprep.subr.bf16.mxu0 0
      %5858 = vmatpush1.bf16.msra.mxu0 %v5761
      %5859 = vmatprep.subr.bf16.mxu0 0
      %5860 = vmatpush1.bf16.msra.mxu0 %v5762
      %5861 = vmatprep.subr.bf16.mxu0 0
      %5862 = vmatpush1.bf16.msra.mxu0 %v5763
      %5863 = vmatprep.subr.bf16.mxu0 0
      %5864 = vmatpush1.bf16.msra.mxu0 %v5764
      %5865 = vmatprep.mubr.bf16.mxu0 %v5587
      %5866 = vmatmul.mubr.bf16.gmra.mrb[0].mxu0 %v5459
      %v5867 = vpop.f32.mrb[0].mxu0
      %v5868 = vadd.f32 %v5675, %v5867
      %v5869 = vpop.f32.mrb[0].mxu0
      %v5870 = vpop.f32.mrb[0].mxu0
      %v5871 = vadd.f32 %v5675, %v5870
      %v5872 = vpop.f32.mrb[0].mxu0
      %5873 = vmatprep.mubr.bf16.mxu0 %v5590
      %5874 = vmatmul.mubr.bf16.gmra.mrb[0].mxu0 %v5462
      %v5875 = vpop.f32.mrb[0].mxu0
      %v5876 = vadd.f32 %v5675, %v5875
      %v5877 = vpop.f32.mrb[0].mxu0
      %v5878 = vpop.f32.mrb[0].mxu0
      %v5879 = vadd.f32 %v5675, %v5878
      %v5880 = vpop.f32.mrb[0].mxu0
      %5881 = vmatprep.mubr.bf16.mxu0 %v5593
      %5882 = vmatmul.mubr.bf16.gmra.mrb[0].mxu0 %v5465
      %v5883 = vpop.f32.mrb[0].mxu0
      %v5884 = vadd.f32 %v5675, %v5883
      %v5885 = vpop.f32.mrb[0].mxu0
      %v5886 = vpop.f32.mrb[0].mxu0
      %v5887 = vadd.f32 %v5675, %v5886
      %v5888 = vpop.f32.mrb[0].mxu0
      %5889 = vmatprep.mubr.bf16.mxu0 %v5596
      %5890 = vmatmul.mubr.bf16.gmra.mrb[0].mxu0 %v5468
      %v5891 = vpop.f32.mrb[0].mxu0
      %v5892 = vadd.f32 %v5675, %v5891
      %v5893 = vpop.f32.mrb[0].mxu0
      %v5894 = vpop.f32.mrb[0].mxu0
      %v5895 = vadd.f32 %v5675, %v5894
      %v5896 = vpop.f32.mrb[0].mxu0
      %5897 = vmatprep.mubr.bf16.mxu0 %v5599
      %5898 = vmatmul.mubr.bf16.gmra.mrb[0].mxu0 %v5471
      %v5899 = vpop.f32.mrb[0].mxu0
      %v5900 = vadd.f32 %v5675, %v5899
      %v5901 = vpop.f32.mrb[0].mxu0
      %v5902 = vpop.f32.mrb[0].mxu0
      %v5903 = vadd.f32 %v5675, %v5902
      %v5904 = vpop.f32.mrb[0].mxu0
      %5905 = vmatprep.mubr.bf16.mxu0 %v5602
      %5906 = vmatmul.mubr.bf16.gmra.mrb[0].mxu0 %v5474
      %v5907 = vpop.f32.mrb[0].mxu0
      %v5908 = vadd.f32 %v5675, %v5907
      %v5909 = vpop.f32.mrb[0].mxu0
      %v5910 = vpop.f32.mrb[0].mxu0
      %v5911 = vadd.f32 %v5675, %v5910
      %v5912 = vpop.f32.mrb[0].mxu0
      %5913 = vmatprep.mubr.bf16.mxu0 %v5605
      %5914 = vmatmul.mubr.bf16.gmra.mrb[0].mxu0 %v5477
      %v5915 = vpop.f32.mrb[0].mxu0
      %v5916 = vadd.f32 %v5675, %v5915
      %v5917 = vpop.f32.mrb[0].mxu0
      %v5918 = vpop.f32.mrb[0].mxu0
      %v5919 = vadd.f32 %v5675, %v5918
      %v5920 = vpop.f32.mrb[0].mxu0
      %5921 = vmatprep.mubr.bf16.mxu0 %v5608
      %5922 = vmatmul.mubr.bf16.gmra.mrb[0].mxu0 %v5480
      %v5923 = vpop.f32.mrb[0].mxu0
      %v5924 = vadd.f32 %v5675, %v5923
      %v5925 = vpop.f32.mrb[0].mxu0
      %v5926 = vpop.f32.mrb[0].mxu0
      %v5927 = vadd.f32 %v5675, %v5926
      %v5928 = vpop.f32.mrb[0].mxu0
      %5929 = vmatprep.mubr.bf16.mxu0 %v5611
      %5930 = vmatmul.mubr.bf16.gmra.mrb[0].mxu0 %v5483
      %v5931 = vpop.f32.mrb[0].mxu0
      %v5932 = vadd.f32 %v5675, %v5931
      %v5933 = vpop.f32.mrb[0].mxu0
      %v5934 = vpop.f32.mrb[0].mxu0
      %v5935 = vadd.f32 %v5675, %v5934
      %v5936 = vpop.f32.mrb[0].mxu0
      %5937 = vmatprep.mubr.bf16.mxu0 %v5614
      %5938 = vmatmul.mubr.bf16.gmra.mrb[0].mxu0 %v5486
      %v5939 = vpop.f32.mrb[0].mxu0
      %v5940 = vadd.f32 %v5675, %v5939
      %v5941 = vpop.f32.mrb[0].mxu0
      %v5942 = vpop.f32.mrb[0].mxu0
      %v5943 = vadd.f32 %v5675, %v5942
      %v5944 = vpop.f32.mrb[0].mxu0
      %5945 = vmatprep.mubr.bf16.mxu0 %v5617
      %5946 = vmatmul.mubr.bf16.gmra.mrb[0].mxu0 %v5489
      %v5947 = vpop.f32.mrb[0].mxu0
      %v5948 = vadd.f32 %v5675, %v5947
      %v5949 = vpop.f32.mrb[0].mxu0
      %v5950 = vpop.f32.mrb[0].mxu0
      %v5951 = vadd.f32 %v5675, %v5950
      %v5952 = vpop.f32.mrb[0].mxu0
      %5953 = vmatprep.mubr.bf16.mxu0 %v5620
      %5954 = vmatmul.mubr.bf16.gmra.mrb[0].mxu0 %v5492
      %v5955 = vpop.f32.mrb[0].mxu0
      %v5956 = vadd.f32 %v5675, %v5955
      %v5957 = vpop.f32.mrb[0].mxu0
      %v5958 = vpop.f32.mrb[0].mxu0
      %v5959 = vadd.f32 %v5675, %v5958
      %v5960 = vpop.f32.mrb[0].mxu0
      %5961 = vmatprep.mubr.bf16.mxu0 %v5623
      %5962 = vmatmul.mubr.bf16.gmra.mrb[0].mxu0 %v5495
      %v5963 = vpop.f32.mrb[0].mxu0
      %v5964 = vadd.f32 %v5675, %v5963
      %v5965 = vpop.f32.mrb[0].mxu0
      %v5966 = vpop.f32.mrb[0].mxu0
      %v5967 = vadd.f32 %v5675, %v5966
      %v5968 = vpop.f32.mrb[0].mxu0
      %5969 = vmatprep.mubr.bf16.mxu0 %v5626
      %5970 = vmatmul.mubr.bf16.gmra.mrb[0].mxu0 %v5498
      %v5971 = vpop.f32.mrb[0].mxu0
      %v5972 = vadd.f32 %v5675, %v5971
      %v5973 = vpop.f32.mrb[0].mxu0
      %v5974 = vpop.f32.mrb[0].mxu0
      %v5975 = vadd.f32 %v5675, %v5974
      %v5976 = vpop.f32.mrb[0].mxu0
      %5977 = vmatprep.mubr.bf16.mxu0 %v5629
      %5978 = vmatmul.mubr.bf16.gmra.mrb[0].mxu0 %v5501
      %v5979 = vpop.f32.mrb[0].mxu0
      %v5980 = vadd.f32 %v5675, %v5979
      %v5981 = vpop.f32.mrb[0].mxu0
      %v5982 = vpop.f32.mrb[0].mxu0
      %v5983 = vadd.f32 %v5675, %v5982
      %v5984 = vpop.f32.mrb[0].mxu0
      %5985 = vmatprep.mubr.bf16.mxu0 %v5632
      %5986 = vmatmul.mubr.bf16.gmra.mrb[0].mxu0 %v5504
      %v5987 = vpop.f32.mrb[0].mxu0
      %v5988 = vadd.f32 %v5675, %v5987
      %v5989 = vpop.f32.mrb[0].mxu0
      %v5990 = vpop.f32.mrb[0].mxu0
      %v5991 = vadd.f32 %v5675, %v5990
      %v5992 = vpop.f32.mrb[0].mxu0
      %5993 = vdwg.mxu0
      %5994 = vmatprep.subr.bf16.mxu0 0
      %5995 = vmatpush1.bf16.msra.mxu0 %v5765
      %5996 = vmatprep.subr.bf16.mxu0 0
      %5997 = vmatpush1.bf16.msra.mxu0 %v5766
      %5998 = vmatprep.subr.bf16.mxu0 0
      %5999 = vmatpush1.bf16.msra.mxu0 0
      %6000 = vmatprep.subr.bf16.mxu0 0
      %6001 = vmatpush1.bf16.msra.mxu0 0
      %6002 = vmatprep.subr.bf16.mxu0 0
      %6003 = vmatpush1.bf16.msra.mxu0 0
      %6004 = vmatprep.subr.bf16.mxu0 0
      %6005 = vmatpush1.bf16.msra.mxu0 0
      %6006 = vmatprep.subr.bf16.mxu0 0
      %6007 = vmatpush1.bf16.msra.mxu0 0
      %6008 = vmatprep.subr.bf16.mxu0 0
      %6009 = vmatpush1.bf16.msra.mxu0 0
      %6010 = vmatprep.subr.bf16.mxu0 0
      %6011 = vmatpush1.bf16.msra.mxu0 0
      %6012 = vmatprep.subr.bf16.mxu0 0
      %6013 = vmatpush1.bf16.msra.mxu0 0
      %6014 = vmatprep.subr.bf16.mxu0 0
      %6015 = vmatpush1.bf16.msra.mxu0 0
      %6016 = vmatprep.subr.bf16.mxu0 0
      %6017 = vmatpush1.bf16.msra.mxu0 0
      %6018 = vmatprep.subr.bf16.mxu0 0
      %6019 = vmatpush1.bf16.msra.mxu0 0
      %6020 = vmatprep.subr.bf16.mxu0 0
      %6021 = vmatpush1.bf16.msra.mxu0 0
      %6022 = vmatprep.subr.bf16.mxu0 0
      %6023 = vmatpush1.bf16.msra.mxu0 0
      %6024 = vmatprep.subr.bf16.mxu0 0
      %6025 = vmatpush1.bf16.msra.mxu0 0
      %6026 = vmatprep.mubr.bf16.mxu0 0
      %6027 = vmatmul.mubr.bf16.gmra.mrb[0].mxu0 %v5786
      %v6028 = vpop.f32.mrb[0].mxu0
      %v6029 = vadd.f32 %v5868, %v6028
      %v6030 = vpop.f32.mrb[0].mxu0
      %v6031 = vpop.f32.mrb[0].mxu0
      %v6032 = vadd.f32 %v5871, %v6031
      %v6033 = vpop.f32.mrb[0].mxu0
      %6034 = vmatprep.mubr.bf16.mxu0 0
      %6035 = vmatmul.mubr.bf16.gmra.mrb[0].mxu0 %v5789
      %v6036 = vpop.f32.mrb[0].mxu0
      %v6037 = vadd.f32 %v5876, %v6036
      %v6038 = vpop.f32.mrb[0].mxu0
      %v6039 = vpop.f32.mrb[0].mxu0
      %v6040 = vadd.f32 %v5879, %v6039
      %v6041 = vpop.f32.mrb[0].mxu0
      %6042 = vmatprep.mubr.bf16.mxu0 0
      %6043 = vmatmul.mubr.bf16.gmra.mrb[0].mxu0 %v5792
      %v6044 = vpop.f32.mrb[0].mxu0
      %v6045 = vadd.f32 %v5884, %v6044
      %v6046 = vpop.f32.mrb[0].mxu0
      %v6047 = vpop.f32.mrb[0].mxu0
      %v6048 = vadd.f32 %v5887, %v6047
      %v6049 = vpop.f32.mrb[0].mxu0
      %6050 = vmatprep.mubr.bf16.mxu0 0
      %6051 = vmatmul.mubr.bf16.gmra.mrb[0].mxu0 %v5795
      %v6052 = vpop.f32.mrb[0].mxu0
      %v6053 = vadd.f32 %v5892, %v6052
      %v6054 = vpop.f32.mrb[0].mxu0
      %v6055 = vpop.f32.mrb[0].mxu0
      %v6056 = vadd.f32 %v5895, %v6055
      %v6057 = vpop.f32.mrb[0].mxu0
      %6058 = vmatprep.mubr.bf16.mxu0 0
      %6059 = vmatmul.mubr.bf16.gmra.mrb[0].mxu0 %v5798
      %v6060 = vpop.f32.mrb[0].mxu0
      %v6061 = vadd.f32 %v5900, %v6060
      %v6062 = vpop.f32.mrb[0].mxu0
      %v6063 = vpop.f32.mrb[0].mxu0
      %v6064 = vadd.f32 %v5903, %v6063
      %v6065 = vpop.f32.mrb[0].mxu0
      %6066 = vmatprep.mubr.bf16.mxu0 0
      %6067 = vmatmul.mubr.bf16.gmra.mrb[0].mxu0 %v5801
      %v6068 = vpop.f32.mrb[0].mxu0
      %v6069 = vadd.f32 %v5908, %v6068
      %v6070 = vpop.f32.mrb[0].mxu0
      %v6071 = vpop.f32.mrb[0].mxu0
      %v6072 = vadd.f32 %v5911, %v6071
      %v6073 = vpop.f32.mrb[0].mxu0
      %6074 = vmatprep.mubr.bf16.mxu0 0
      %6075 = vmatmul.mubr.bf16.gmra.mrb[0].mxu0 %v5804
      %v6076 = vpop.f32.mrb[0].mxu0
      %v6077 = vadd.f32 %v5916, %v6076
      %v6078 = vpop.f32.mrb[0].mxu0
      %v6079 = vpop.f32.mrb[0].mxu0
      %v6080 = vadd.f32 %v5919, %v6079
      %v6081 = vpop.f32.mrb[0].mxu0
      %6082 = vmatprep.mubr.bf16.mxu0 0
      %6083 = vmatmul.mubr.bf16.gmra.mrb[0].mxu0 %v5807
      %v6084 = vpop.f32.mrb[0].mxu0
      %v6085 = vadd.f32 %v5924, %v6084
      %v6086 = vpop.f32.mrb[0].mxu0
      %v6087 = vpop.f32.mrb[0].mxu0
      %v6088 = vadd.f32 %v5927, %v6087
      %v6089 = vpop.f32.mrb[0].mxu0
      %6090 = vmatprep.mubr.bf16.mxu0 0
      %6091 = vmatmul.mubr.bf16.gmra.mrb[0].mxu0 %v5810
      %v6092 = vpop.f32.mrb[0].mxu0
      %v6093 = vadd.f32 %v5932, %v6092
      %v6094 = vpop.f32.mrb[0].mxu0
      %v6095 = vpop.f32.mrb[0].mxu0
      %v6096 = vadd.f32 %v5935, %v6095
      %v6097 = vpop.f32.mrb[0].mxu0
      %6098 = vmatprep.mubr.bf16.mxu0 0
      %6099 = vmatmul.mubr.bf16.gmra.mrb[0].mxu0 %v5813
      %v6100 = vpop.f32.mrb[0].mxu0
      %v6101 = vadd.f32 %v5940, %v6100
      %v6102 = vpop.f32.mrb[0].mxu0
      %v6103 = vpop.f32.mrb[0].mxu0
      %v6104 = vadd.f32 %v5943, %v6103
      %v6105 = vpop.f32.mrb[0].mxu0
      %6106 = vmatprep.mubr.bf16.mxu0 0
      %6107 = vmatmul.mubr.bf16.gmra.mrb[0].mxu0 %v5816
      %v6108 = vpop.f32.mrb[0].mxu0
      %v6109 = vadd.f32 %v5948, %v6108
      %v6110 = vpop.f32.mrb[0].mxu0
      %v6111 = vpop.f32.mrb[0].mxu0
      %v6112 = vadd.f32 %v5951, %v6111
      %v6113 = vpop.f32.mrb[0].mxu0
      %6114 = vmatprep.mubr.bf16.mxu0 0
      %6115 = vmatmul.mubr.bf16.gmra.mrb[0].mxu0 %v5819
      %v6116 = vpop.f32.mrb[0].mxu0
      %v6117 = vadd.f32 %v5956, %v6116
      %v6118 = vpop.f32.mrb[0].mxu0
      %v6119 = vpop.f32.mrb[0].mxu0
      %v6120 = vadd.f32 %v5959, %v6119
      %v6121 = vpop.f32.mrb[0].mxu0
      %6122 = vmatprep.mubr.bf16.mxu0 0
      %6123 = vmatmul.mubr.bf16.gmra.mrb[0].mxu0 %v5822
      %v6124 = vpop.f32.mrb[0].mxu0
      %v6125 = vadd.f32 %v5964, %v6124
      %v6126 = vpop.f32.mrb[0].mxu0
      %v6127 = vpop.f32.mrb[0].mxu0
      %v6128 = vadd.f32 %v5967, %v6127
      %v6129 = vpop.f32.mrb[0].mxu0
      %6130 = vmatprep.mubr.bf16.mxu0 0
      %6131 = vmatmul.mubr.bf16.gmra.mrb[0].mxu0 %v5825
      %v6132 = vpop.f32.mrb[0].mxu0
      %v6133 = vadd.f32 %v5972, %v6132
      %v6134 = vpop.f32.mrb[0].mxu0
      %v6135 = vpop.f32.mrb[0].mxu0
      %v6136 = vadd.f32 %v5975, %v6135
      %v6137 = vpop.f32.mrb[0].mxu0
      %6138 = vmatprep.mubr.bf16.mxu0 0
      %6139 = vmatmul.mubr.bf16.gmra.mrb[0].mxu0 %v5828
      %v6140 = vpop.f32.mrb[0].mxu0
      %v6141 = vadd.f32 %v5980, %v6140
      %v6142 = vpop.f32.mrb[0].mxu0
      %v6143 = vpop.f32.mrb[0].mxu0
      %v6144 = vadd.f32 %v5983, %v6143
      %v6145 = vpop.f32.mrb[0].mxu0
      %6146 = vmatprep.mubr.bf16.mxu0 0
      %6147 = vmatmul.mubr.bf16.gmra.mrb[0].mxu0 %v5831
      %v6148 = vpop.f32.mrb[0].mxu0
      %v6149 = vadd.f32 %v5988, %v6148
      %v6150 = vpop.f32.mrb[0].mxu0
      %v6151 = vpop.f32.mrb[0].mxu0
      %v6152 = vadd.f32 %v5991, %v6151
      %v6153 = vpop.f32.mrb[0].mxu0
      %6154 = vdwg.mxu0
      %v6155 = vmax.f32 %v6029, 0.0
      %v6156 = vmax.f32 %v6032, 0.0
      %v6157 = vmax.f32 %v6037, 0.0
      %v6158 = vmax.f32 %v6040, 0.0
      %v6159 = vmax.f32 %v6045, 0.0
      %v6160 = vmax.f32 %v6048, 0.0
      %v6161 = vmax.f32 %v6053, 0.0
      %v6162 = vmax.f32 %v6056, 0.0
      %v6163 = vmax.f32 %v6061, 0.0
      %v6164 = vmax.f32 %v6064, 0.0
      %v6165 = vmax.f32 %v6069, 0.0
      %v6166 = vmax.f32 %v6072, 0.0
      %v6167 = vmax.f32 %v6077, 0.0
      %v6168 = vmax.f32 %v6080, 0.0
      %v6169 = vmax.f32 %v6085, 0.0
      %v6170 = vmax.f32 %v6088, 0.0
      %v6171 = vmax.f32 %v6093, 0.0
      %v6172 = vmax.f32 %v6096, 0.0
      %v6173 = vmax.f32 %v6101, 0.0
      %v6174 = vmax.f32 %v6104, 0.0
      %v6175 = vmax.f32 %v6109, 0.0
      %v6176 = vmax.f32 %v6112, 0.0
      %v6177 = vmax.f32 %v6117, 0.0
      %v6178 = vmax.f32 %v6120, 0.0
      %v6179 = vmax.f32 %v6125, 0.0
      %v6180 = vmax.f32 %v6128, 0.0
      %v6181 = vmax.f32 %v6133, 0.0
      %v6182 = vmax.f32 %v6136, 0.0
      %v6183 = vmax.f32 %v6141, 0.0
      %v6184 = vmax.f32 %v6144, 0.0
      %v6185 = vmax.f32 %v6149, 0.0
      %v6186 = vmax.f32 %v6152, 0.0
      %6187 = vxpose.xlu0.b32.start [1/16] %v6155, 128
      %6188 = vxpose.xlu0.b32.cont [2/16] %v6156, 128
      %6189 = vxpose.xlu0.b32.cont [3/16] %v6157, 128
      %6190 = vxpose.xlu0.b32.cont [4/16] %v6158, 128
      %6191 = vxpose.xlu0.b32.cont [5/16] %v6159, 128
      %6192 = vxpose.xlu0.b32.cont [6/16] %v6160, 128
      %6193 = vxpose.xlu0.b32.cont [7/16] %v6161, 128
      %6194 = vxpose.xlu0.b32.cont [8/16] %v6162, 128
      %6195 = vxpose.xlu0.b32.cont [9/16] %v6163, 128
      %6196 = vxpose.xlu0.b32.cont [10/16] %v6164, 128
      %6197 = vxpose.xlu0.b32.cont [11/16] %v6165, 128
      %6198 = vxpose.xlu0.b32.cont [12/16] %v6166, 128
      %6199 = vxpose.xlu0.b32.cont [13/16] %v6167, 128
      %6200 = vxpose.xlu0.b32.cont [14/16] %v6168, 128
      %6201 = vxpose.xlu0.b32.cont [15/16] %v6169, 128
      %6202 = vxpose.xlu0.b32.end [16/16] %v6170, 128
      %v6203 = vpop.trf.xlu0
      %v6204 = vpop.trf.xlu0
      %v6205 = vpop.trf.xlu0
      %v6206 = vpop.trf.xlu0
      %v6207 = vpop.trf.xlu0
      %v6208 = vpop.trf.xlu0
      %v6209 = vpop.trf.xlu0
      %v6210 = vpop.trf.xlu0
      %v6211 = vpop.trf.xlu0
      %v6212 = vpop.trf.xlu0
      %v6213 = vpop.trf.xlu0
      %v6214 = vpop.trf.xlu0
      %v6215 = vpop.trf.xlu0
      %v6216 = vpop.trf.xlu0
      %v6217 = vpop.trf.xlu0
      %v6218 = vpop.trf.xlu0
      %6219 = vxpose.xlu0.b32.start [1/16] %v6171, 128
      %6220 = vxpose.xlu0.b32.cont [2/16] %v6172, 128
      %6221 = vxpose.xlu0.b32.cont [3/16] %v6173, 128
      %6222 = vxpose.xlu0.b32.cont [4/16] %v6174, 128
      %6223 = vxpose.xlu0.b32.cont [5/16] %v6175, 128
      %6224 = vxpose.xlu0.b32.cont [6/16] %v6176, 128
      %6225 = vxpose.xlu0.b32.cont [7/16] %v6177, 128
      %6226 = vxpose.xlu0.b32.cont [8/16] %v6178, 128
      %6227 = vxpose.xlu0.b32.cont [9/16] %v6179, 128
      %6228 = vxpose.xlu0.b32.cont [10/16] %v6180, 128
      %6229 = vxpose.xlu0.b32.cont [11/16] %v6181, 128
      %6230 = vxpose.xlu0.b32.cont [12/16] %v6182, 128
      %6231 = vxpose.xlu0.b32.cont [13/16] %v6183, 128
      %6232 = vxpose.xlu0.b32.cont [14/16] %v6184, 128
      %6233 = vxpose.xlu0.b32.cont [15/16] %v6185, 128
      %6234 = vxpose.xlu0.b32.end [16/16] %v6186, 128
      %v6235 = vpop.trf.xlu0
      %v6236 = vpop.trf.xlu0
      %v6237 = vpop.trf.xlu0
      %v6238 = vpop.trf.xlu0
      %v6239 = vpop.trf.xlu0
      %v6240 = vpop.trf.xlu0
      %v6241 = vpop.trf.xlu0
      %v6242 = vpop.trf.xlu0
      %v6243 = vpop.trf.xlu0
      %v6244 = vpop.trf.xlu0
      %v6245 = vpop.trf.xlu0
      %v6246 = vpop.trf.xlu0
      %v6247 = vpop.trf.xlu0
      %v6248 = vpop.trf.xlu0
      %v6249 = vpop.trf.xlu0
      %v6250 = vpop.trf.xlu0
      %6251 = vst [vmem:[%s224] sm:$0xff] %v6203
      %6252 = vst [vmem:[%s224 + $0x8] sm:$0xff] %v6235
      %6253 = vst [vmem:[%s224 + $0x10] sm:$0xff] %v6204
      %6254 = vst [vmem:[%s224 + $0x18] sm:$0xff] %v6236
      %6255 = vst [vmem:[%s224 + $0x20] sm:$0xff] %v6205
      %6256 = vst [vmem:[%s224 + $0x28] sm:$0xff] %v6237
      %6257 = vst [vmem:[%s224 + $0x30] sm:$0xff] %v6206
      %6258 = vst [vmem:[%s224 + $0x38] sm:$0xff] %v6238
      %6259 = vst [vmem:[%s224 + $0x40] sm:$0xff] %v6207
      %6260 = vst [vmem:[%s224 + $0x48] sm:$0xff] %v6239
      %6261 = vst [vmem:[%s224 + $0x50] sm:$0xff] %v6208
      %6262 = vst [vmem:[%s224 + $0x58] sm:$0xff] %v6240
      %6263 = vst [vmem:[%s224 + $0x60] sm:$0xff] %v6209
      %6264 = vst [vmem:[%s224 + $0x68] sm:$0xff] %v6241
      %6265 = vst [vmem:[%s224 + $0x70] sm:$0xff] %v6210
      %6266 = vst [vmem:[%s224 + $0x78] sm:$0xff] %v6242
      %p6267 = scmp.lt.s32.totalorder %s16, 1
      %s6268 = scalar_select %p6267, %s16, 1
      %s6269 = smul.addr %s6268, 16
      %s6270 = smul.addr %s6269, 8
      %s6271 = scalar_lea.vmem %s5, %s6270
      // Predicated region
      $region41: #{encoder1_forward_impl.1} parent=39 // pred_check
        %p6272 = pneg %p144
      $region42: #{encoder1_forward_impl.1} parent=39 // pred_check_branch
        %6274 = sbr.rel (%p6272) target = $region44
      $region43: #{encoder1_forward_impl.1} parent=39 // pred_region
        _
      $region44: #{encoder1_forward_impl.1} parent=39 // pred_fallthru
        _
    $region40: #{encoder1_forward_impl.1} parent=5 // pred_fallthru
      _
    %p6275 = scmp.le.s32.totalorder 2, %s11
    // Predicated region
    $region45: #{encoder1_forward_impl.1} parent=5 // pred_check
      %p6276 = pneg %p6275
    $region46: #{encoder1_forward_impl.1} parent=5 // pred_check_branch
      %6278 = sbr.rel (%p6276) target = $region48
    $region47: #{encoder1_forward_impl.1} parent=5 // pred_region
      %s6279 = ssub.s32 %s11, 2
      // Predicated region
      $region49: #{encoder1_forward_impl.1} parent=47 // pred_check
        %p6280 = pneg %p150
      $region50: #{encoder1_forward_impl.1} parent=47 // pred_check_branch
        %6282 = sbr.rel (%p6280) target = $region52
      $region51: #{encoder1_forward_impl.1} parent=47 // pred_region
        %p6283 = scmp.lt.s32.totalorder %s17, 1
        %s6284 = scalar_select %p6283, %s17, 1
        %s6285 = smul.addr %s6284, 16
        %s6286 = smul.addr %s6285, 8
        %s6287 = scalar_lea.vmem %s5, %s6286
      $region52: #{encoder1_forward_impl.1} parent=47 // pred_fallthru
        _
    $region48: #{encoder1_forward_impl.1} parent=5 // pred_fallthru
      _
  $region6: #{encoder1_forward_impl.1} parent=0 // loop_footer
    %s15 = sadd.s32 1, %s11
  $region7: #{encoder1_forward_impl.1} parent=0 // loop_footer_branch
    %10 = sbr.rel target = $region3
  $region8: #{encoder1_forward_impl.1} parent=0 // loop_exit
    _

</llo_original>
